<compile_context>
chip_gen: v7x
topology: tpu7x:2x2x1
jax: 0.10.0
libtpu: 0.0.40
codegen_flags: <defaults>
</compile_context>

<pallas_src>
import functools

import jax
import jax.numpy as jnp
import numpy as np
from jax.experimental import pallas as pl
from jax.experimental.pallas import tpu as pltpu


def _soe_kernel(x_ref, ln_g_ref, ln_b_ref, scale_ref, w1_ref, b1_ref,
                wtap_ref, dwb_ref, b2b2_ref, w3_ref, b3_ref, fw_ref, fb_ref,
                o_ref, acc_ref, *, H, W):
    C = x_ref.shape[1]
    HW = x_ref.shape[2]
    C2 = w3_ref.shape[0]
    TC = 2 * C2                               # fused branch1+branch2 channels

    x_chw = x_ref[0]                          # (C, HW) f32, lane-dense load
    x = jnp.transpose(x_chw)                  # (HW, C) — XLU slot (has slack)

    # --- LayerNorm, channels_first semantics (biased variance, eps=1e-6);
    #     channels live on the lane axis here, statistics stay in f32.
    u = jnp.mean(x, axis=-1, keepdims=True)
    xc = x - u
    var = jnp.mean(xc * xc, axis=-1, keepdims=True)
    xn = xc * jax.lax.rsqrt(var + 1e-6)
    xn = xn * ln_g_ref[...] + ln_b_ref[...]                     # (HW, C)

    # --- Fused 1x1 convs feeding BOTH branches: one (HW,C)@(C,2*C2) f32
    #     matmul (f32 accumulate) instead of two N=C2 matmuls.
    ta = jnp.dot(xn, w1_ref[...], preferred_element_type=jnp.float32)
    ta = (ta + b1_ref[...]).reshape(H, W, TC)

    # --- Shared 3x3 (pad=1) tap loop: first C2 channels are branch1's
    #     depthwise conv, last C2 channels are branch2's C2->1 conv products.
    #     Static-slice shifted accumulation into the VMEM scratch accumulator:
    #     each neighbour tap touches only its valid sub-window, so there are
    #     no rolls, no wraparound fixups and no iota/where edge masks.
    wt = wtap_ref[...]                                          # (9, 2*C2)
    acc_ref[...] = ta * wt[4:5, :]                              # centre tap
    for dh in (-1, 0, 1):
        for dw in (-1, 0, 1):
            if dh == 0 and dw == 0:
                continue
            oh0, oh1 = max(0, -dh), H - max(0, dh)
            ow0, ow1 = max(0, -dw), W - max(0, dw)
            ih0, ih1 = oh0 + dh, oh1 + dh
            iw0, iw1 = ow0 + dw, ow1 + dw
            k = (dh + 1) * 3 + (dw + 1)
            acc_ref[oh0:oh1, ow0:ow1, :] = (
                acc_ref[oh0:oh1, ow0:ow1, :]
                + ta[ih0:ih1, iw0:iw1, :] * wt[k:k + 1, :])
    # TODO(synk): optional lane-packing of two spatial positions per vreg (or
    # bf16 taps on v6e/v7x) would double VPU throughput in this loop.

    acc = acc_ref[...].reshape(HW, TC)

    # --- branch2 tail: ONE cross-lane reduce over its C2 channels, bias,
    #     sigmoid.
    att = jnp.sum(acc[:, C2:], axis=-1, keepdims=True)          # (HW, 1)
    att = jax.nn.sigmoid(att + b2b2_ref[...])

    # --- branch1 tail: bias + exact (erf) GELU + 1x1 conv (f32 matmul).
    # TODO(synk): jax.nn.gelu(approximate=True) would ride the idle EUP slot,
    # but changes numerics vs PyTorch's exact nn.GELU(), so we keep erf.
    d = acc[:, :C2] + dwb_ref[...]
    d = 0.5 * d * (1.0 + jax.lax.erf(d * np.float32(1.0 / np.sqrt(2.0))))
    g = jnp.dot(d, w3_ref[...], preferred_element_type=jnp.float32) + b3_ref[...]

    # --- fuse: attention gate, 1x1 fusion conv, per-channel scale, residual.
    out = jnp.dot(g * att, fw_ref[...],
                  preferred_element_type=jnp.float32) + fb_ref[...]   # (HW, C)
    # Store back in (C, HW) layout: lane-dense stores, no external transpose.
    o_ref[0] = jnp.transpose(out) * scale_ref[...] + x_chw


def small_object_enhancer(x_nchw, params):
    """SmallObjectEnhancer forward. Input/output are NCHW float32."""
    B, C, H, W = x_nchw.shape
    C2 = C // 2
    HW = H * W

    # NCHW -> (B, C, H*W): contiguous reshape, no data movement.
    x = x_nchw.reshape(B, C, HW).astype(jnp.float32)

    # --- weight prep (glue): PyTorch conv layouts -> matmul / tap layouts.
    ln_g = params['ln_g'].reshape(1, C).astype(jnp.float32)
    ln_b = params['ln_b'].reshape(1, C).astype(jnp.float32)
    scale = params['scale'].reshape(C, 1).astype(jnp.float32)
    b1w1 = params['b1w1'][:, :, 0, 0]                            # (C2, C)
    b2w1 = params['b2w1'][:, :, 0, 0]                            # (C2, C)
    w1 = jnp.concatenate([b1w1, b2w1], axis=0).T.astype(jnp.float32)   # (C, 2*C2)
    b1 = jnp.concatenate([params['b1b1'], params['b2b1']]
                         ).reshape(1, 2 * C2).astype(jnp.float32)
    dww = jnp.transpose(params['dww'][:, 0, :, :], (1, 2, 0))    # (3, 3, C2)
    aww = jnp.transpose(params['b2w2'][0], (1, 2, 0))            # (3, 3, C2)
    wtap = jnp.concatenate([dww, aww], axis=-1)                  # (3, 3, 2*C2)
    wtap = wtap.reshape(9, 2 * C2).astype(jnp.float32)           # row k = kh*3+kw
    dwb = params['dwb'].reshape(1, C2).astype(jnp.float32)
    b2b2 = params['b2b2'].reshape(1, 1).astype(jnp.float32)
    w3 = jnp.transpose(params['b1w3'][:, :, 0, 0]).astype(jnp.float32)  # (C2, C2)
    b3 = params['b1b3'].reshape(1, C2).astype(jnp.float32)
    fw = jnp.transpose(params['fw'][:, :, 0, 0]).astype(jnp.float32)    # (C2, C)
    fb = params['fb'].reshape(1, C).astype(jnp.float32)

    weights = [ln_g, ln_b, scale, w1, b1, wtap, dwb, b2b2, w3, b3, fw, fb]

    def full_spec(a):
        return pl.BlockSpec(a.shape, lambda b, r=a.ndim: (0,) * r)

    # One batch element per grid step ("parallel"): cheap on single-TC
    # v5e/v6e, keeps both v7x TensorCores busy when B >= 2.
    # TODO(synk): for production feature maps (large H*W) add an H-band grid
    # axis with a 1-row halo so tiles stay within v7x's 64 MiB VMEM, and use
    # it as the parallel axis when B == 1.
    out = pl.pallas_call(
        functools.partial(_soe_kernel, H=H, W=W),
        out_shape=jax.ShapeDtypeStruct((B, C, HW), jnp.float32),
        grid=(B,),
        in_specs=[pl.BlockSpec((1, C, HW), lambda b: (b, 0, 0))]
                 + [full_spec(w) for w in weights],
        out_specs=pl.BlockSpec((1, C, HW), lambda b: (b, 0, 0)),
        scratch_shapes=[pltpu.VMEM((H, W, 2 * C2), jnp.float32)],
        compiler_params=pltpu.CompilerParams(
            dimension_semantics=("parallel",),
            vmem_limit_bytes=32 * 1024 * 1024),
    )(x, *weights)

    return out.reshape(B, C, H, W)                               # still NCHW


def init_params(key, C):
    """Deterministic synthetic parameters with the shapes from __init__."""
    C2 = C // 2
    ks = jax.random.split(key, 12)

    def w(k, shape, s=0.05):
        return jax.random.normal(k, shape, jnp.float32) * s

    return dict(
        ln_g=jnp.ones((C,), jnp.float32),
        ln_b=jnp.zeros((C,), jnp.float32),
        # PyTorch inits `scale` to zeros; use nonzero values here so the
        # enhancement path actually contributes in this synthetic test.
        scale=w(ks[0], (1, C, 1, 1), 0.1),
        b1w1=w(ks[1], (C2, C, 1, 1)), b1b1=w(ks[2], (C2,)),
        dww=w(ks[3], (C2, 1, 3, 3)), dwb=w(ks[4], (C2,)),
        b1w3=w(ks[5], (C2, C2, 1, 1)), b1b3=w(ks[6], (C2,)),
        b2w1=w(ks[7], (C2, C, 1, 1)), b2b1=w(ks[8], (C2,)),   # Conv2d(C -> C2)
        b2w2=w(ks[9], (1, C2, 3, 3)), b2b2=w(ks[10], (1,)),
        fw=w(ks[11], (C, C2, 1, 1)), fb=jnp.zeros((C,), jnp.float32),
    )


def reference(x, p):
    """Pure-JAX (XLA, f32) reference mirroring the PyTorch forward, NCHW."""
    C = x.shape[1]
    C2 = C // 2
    eps = 1e-6
    u = jnp.mean(x, axis=1, keepdims=True)
    s = jnp.mean((x - u) ** 2, axis=1, keepdims=True)
    xn = (x - u) / jnp.sqrt(s + eps)
    xn = p['ln_g'][None, :, None, None] * xn + p['ln_b'][None, :, None, None]

    def conv(inp, w, b, groups=1, pad=0):
        y = jax.lax.conv_general_dilated(
            inp, w, (1, 1), [(pad, pad), (pad, pad)],
            dimension_numbers=('NCHW', 'OIHW', 'NCHW'),
            feature_group_count=groups)
        return y + b[None, :, None, None]

    t = conv(xn, p['b1w1'], p['b1b1'])
    t = conv(t, p['dww'], p['dwb'], groups=C2, pad=1)
    t = 0.5 * t * (1.0 + jax.lax.erf(t * np.float32(1.0 / np.sqrt(2.0))))
    t = conv(t, p['b1w3'], p['b1b3'])
    a = conv(xn, p['b2w1'], p['b2b1'])
    a = conv(a, p['b2w2'], p['b2b2'], pad=1)
    a = jax.nn.sigmoid(a)
    out = conv(t * a, p['fw'], p['fb'])
    return out * p['scale'] + x


if __name__ == "__main__":
    key = jax.random.PRNGKey(0)
    kx, kp = jax.random.split(key)
    B, C, H, W = 2, 64, 16, 16          # n_feats = 64
    x = jax.random.normal(kx, (B, C, H, W), jnp.float32)
    params = init_params(kp, C)

    out = jax.block_until_ready(small_object_enhancer(x, params))
    ref = reference(x, params)
    err = float(jnp.max(jnp.abs(out - ref)))
    assert out.shape == (B, C, H, W), out.shape
    assert err < 2e-3, f"max abs error vs reference: {err}"
    print("KERNEL_OK")
</pallas_src>

<mosaic_0001>
module attributes {stable_mosaic.version = 11 : i64} {
  func.func @_soe_kernel(%arg0: i32, %arg1: memref<1x64x256xf32, #tpu.memory_space<vmem>>, %arg2: memref<1x64xf32, #tpu.memory_space<vmem>>, %arg3: memref<1x64xf32, #tpu.memory_space<vmem>>, %arg4: memref<64x1xf32, #tpu.memory_space<vmem>>, %arg5: memref<64x64xf32, #tpu.memory_space<vmem>>, %arg6: memref<1x64xf32, #tpu.memory_space<vmem>>, %arg7: memref<9x64xf32, #tpu.memory_space<vmem>>, %arg8: memref<1x32xf32, #tpu.memory_space<vmem>>, %arg9: memref<1x1xf32, #tpu.memory_space<vmem>>, %arg10: memref<32x32xf32, #tpu.memory_space<vmem>>, %arg11: memref<1x32xf32, #tpu.memory_space<vmem>>, %arg12: memref<32x64xf32, #tpu.memory_space<vmem>>, %arg13: memref<1x64xf32, #tpu.memory_space<vmem>>, %arg14: memref<1x64x256xf32, #tpu.memory_space<vmem>>, %arg15: memref<16x16x64xf32, #tpu.memory_space<vmem>>) attributes {dimension_semantics = [#tpu.dimension_semantics<parallel>], iteration_bounds = array<i64: 2>, scalar_prefetch = 0 : i64, scratch_operands = 1 : i64, tpu.core_type = #tpu.core_type<tc>, window_params = [{transform_indices = @transform_0, window_bounds = array<i64: 1, 64, 256>}, {pipeline_mode = #tpu.pipeline_mode<synchronous>, transform_indices = @transform_1, window_bounds = array<i64: 1, 64>}, {pipeline_mode = #tpu.pipeline_mode<synchronous>, transform_indices = @transform_2, window_bounds = array<i64: 1, 64>}, {pipeline_mode = #tpu.pipeline_mode<synchronous>, transform_indices = @transform_3, window_bounds = array<i64: 64, 1>}, {pipeline_mode = #tpu.pipeline_mode<synchronous>, transform_indices = @transform_4, window_bounds = array<i64: 64, 64>}, {pipeline_mode = #tpu.pipeline_mode<synchronous>, transform_indices = @transform_5, window_bounds = array<i64: 1, 64>}, {pipeline_mode = #tpu.pipeline_mode<synchronous>, transform_indices = @transform_6, window_bounds = array<i64: 9, 64>}, {pipeline_mode = #tpu.pipeline_mode<synchronous>, transform_indices = @transform_7, window_bounds = array<i64: 1, 32>}, {pipeline_mode = #tpu.pipeline_mode<synchronous>, transform_indices = @transform_8, window_bounds = array<i64: 1, 1>}, {pipeline_mode = #tpu.pipeline_mode<synchronous>, transform_indices = @transform_9, window_bounds = array<i64: 32, 32>}, {pipeline_mode = #tpu.pipeline_mode<synchronous>, transform_indices = @transform_10, window_bounds = array<i64: 1, 32>}, {pipeline_mode = #tpu.pipeline_mode<synchronous>, transform_indices = @transform_11, window_bounds = array<i64: 32, 64>}, {pipeline_mode = #tpu.pipeline_mode<synchronous>, transform_indices = @transform_12, window_bounds = array<i64: 1, 64>}, {transform_indices = @transform_13, window_bounds = array<i64: 1, 64, 256>}]} {
    %c0 = arith.constant 0 : index
    %c0_0 = arith.constant 0 : index
    %c0_1 = arith.constant 0 : index
    %0 = vector.load %arg1[%c0, %c0_0, %c0_1] : memref<1x64x256xf32, #tpu.memory_space<vmem>>, vector<1x64x256xf32>
    %1 = vector.shape_cast %0 : vector<1x64x256xf32> to vector<64x256xf32>
    %2 = tpu.transpose %1, [1, 0] : vector<64x256xf32> -> vector<256x64xf32>
    %cst = arith.constant dense<0.000000e+00> : vector<256xf32>
    %3 = vector.multi_reduction <add>, %2, %cst [1] : vector<256x64xf32> to vector<256xf32>
    %4 = vector.shape_cast %3 : vector<256xf32> to vector<256x1xf32>
    %cst_2 = arith.constant 6.400000e+01 : f32
    %5 = vector.broadcast %cst_2 : f32 to vector<256x1xf32>
    %6 = arith.divf %4, %5 : vector<256x1xf32>
    %7 = vector.broadcast %6 : vector<256x1xf32> to vector<256x64xf32>
    %8 = arith.subf %2, %7 : vector<256x64xf32>
    %9 = arith.mulf %8, %8 : vector<256x64xf32>
    %cst_3 = arith.constant dense<0.000000e+00> : vector<256xf32>
    %10 = vector.multi_reduction <add>, %9, %cst_3 [1] : vector<256x64xf32> to vector<256xf32>
    %11 = vector.shape_cast %10 : vector<256xf32> to vector<256x1xf32>
    %cst_4 = arith.constant 6.400000e+01 : f32
    %12 = vector.broadcast %cst_4 : f32 to vector<256x1xf32>
    %13 = arith.divf %11, %12 : vector<256x1xf32>
    %cst_5 = arith.constant 9.99999997E-7 : f32
    %14 = vector.broadcast %cst_5 : f32 to vector<256x1xf32>
    %15 = arith.addf %13, %14 : vector<256x1xf32>
    %16 = math.rsqrt %15 : vector<256x1xf32>
    %17 = vector.broadcast %16 : vector<256x1xf32> to vector<256x64xf32>
    %18 = arith.mulf %8, %17 : vector<256x64xf32>
    %c0_6 = arith.constant 0 : index
    %c0_7 = arith.constant 0 : index
    %19 = vector.load %arg2[%c0_6, %c0_7] : memref<1x64xf32, #tpu.memory_space<vmem>>, vector<1x64xf32>
    %20 = vector.broadcast %19 : vector<1x64xf32> to vector<256x64xf32>
    %21 = arith.mulf %18, %20 : vector<256x64xf32>
    %c0_8 = arith.constant 0 : index
    %c0_9 = arith.constant 0 : index
    %22 = vector.load %arg3[%c0_8, %c0_9] : memref<1x64xf32, #tpu.memory_space<vmem>>, vector<1x64xf32>
    %23 = vector.broadcast %22 : vector<1x64xf32> to vector<256x64xf32>
    %24 = arith.addf %21, %23 : vector<256x64xf32>
    %c0_10 = arith.constant 0 : index
    %c0_11 = arith.constant 0 : index
    %25 = vector.load %arg5[%c0_10, %c0_11] : memref<64x64xf32, #tpu.memory_space<vmem>>, vector<64x64xf32>
    %cst_12 = arith.constant dense<0.000000e+00> : vector<256x64xf32>
    %26 = tpu.matmul %24, %25, %cst_12 {dimension_numbers = #tpu.dot_dimension_numbers<[1], [0], [0], [1], [0, 0, 1, 1], [], []>} : vector<256x64xf32>, vector<64x64xf32>, vector<256x64xf32> -> vector<256x64xf32>
    %c0_13 = arith.constant 0 : index
    %c0_14 = arith.constant 0 : index
    %27 = vector.load %arg6[%c0_13, %c0_14] : memref<1x64xf32, #tpu.memory_space<vmem>>, vector<1x64xf32>
    %28 = vector.broadcast %27 : vector<1x64xf32> to vector<256x64xf32>
    %29 = arith.addf %26, %28 : vector<256x64xf32>
    %30 = vector.shape_cast %29 : vector<256x64xf32> to vector<16x16x64xf32>
    %c0_15 = arith.constant 0 : index
    %c0_16 = arith.constant 0 : index
    %31 = vector.load %arg7[%c0_15, %c0_16] : memref<9x64xf32, #tpu.memory_space<vmem>>, vector<9x64xf32>
    %32 = vector.extract_strided_slice %31 {offsets = [4, 0], sizes = [1, 64], strides = [1, 1]} : vector<9x64xf32> to vector<1x64xf32>
    %33 = vector.shape_cast %32 : vector<1x64xf32> to vector<1x1x64xf32>
    %34 = vector.broadcast %33 : vector<1x1x64xf32> to vector<16x16x64xf32>
    %35 = arith.mulf %30, %34 : vector<16x16x64xf32>
    %c0_17 = arith.constant 0 : index
    %c0_18 = arith.constant 0 : index
    %c0_19 = arith.constant 0 : index
    %36 = vector.load %arg15[%c0_17, %c0_18, %c0_19] : memref<16x16x64xf32, #tpu.memory_space<vmem>>, vector<16x16x64xf32>
    tpu.vector_store %arg15[%c0_17, %c0_18, %c0_19], %35 {strides = array<i32>} : memref<16x16x64xf32, #tpu.memory_space<vmem>>, vector<16x16x64xf32>,
    %c1 = arith.constant 1 : index
    %c1_20 = arith.constant 1 : index
    %c0_21 = arith.constant 0 : index
    %37 = vector.load %arg15[%c1, %c1_20, %c0_21] : memref<16x16x64xf32, #tpu.memory_space<vmem>>, vector<15x15x64xf32>
    %38 = vector.extract_strided_slice %30 {offsets = [0, 0, 0], sizes = [15, 15, 64], strides = [1, 1, 1]} : vector<16x16x64xf32> to vector<15x15x64xf32>
    %39 = vector.extract_strided_slice %31 {offsets = [0, 0], sizes = [1, 64], strides = [1, 1]} : vector<9x64xf32> to vector<1x64xf32>
    %40 = vector.shape_cast %39 : vector<1x64xf32> to vector<1x1x64xf32>
    %41 = vector.broadcast %40 : vector<1x1x64xf32> to vector<15x15x64xf32>
    %42 = arith.mulf %38, %41 : vector<15x15x64xf32>
    %43 = arith.addf %37, %42 : vector<15x15x64xf32>
    %c1_22 = arith.constant 1 : index
    %c1_23 = arith.constant 1 : index
    %c0_24 = arith.constant 0 : index
    %44 = vector.load %arg15[%c1_22, %c1_23, %c0_24] : memref<16x16x64xf32, #tpu.memory_space<vmem>>, vector<15x15x64xf32>
    tpu.vector_store %arg15[%c1_22, %c1_23, %c0_24], %43 {strides = array<i32>} : memref<16x16x64xf32, #tpu.memory_space<vmem>>, vector<15x15x64xf32>,
    %c1_25 = arith.constant 1 : index
    %c0_26 = arith.constant 0 : index
    %c0_27 = arith.constant 0 : index
    %45 = vector.load %arg15[%c1_25, %c0_26, %c0_27] : memref<16x16x64xf32, #tpu.memory_space<vmem>>, vector<15x16x64xf32>
    %46 = vector.extract_strided_slice %30 {offsets = [0, 0, 0], sizes = [15, 16, 64], strides = [1, 1, 1]} : vector<16x16x64xf32> to vector<15x16x64xf32>
    %47 = vector.extract_strided_slice %31 {offsets = [1, 0], sizes = [1, 64], strides = [1, 1]} : vector<9x64xf32> to vector<1x64xf32>
    %48 = vector.shape_cast %47 : vector<1x64xf32> to vector<1x1x64xf32>
    %49 = vector.broadcast %48 : vector<1x1x64xf32> to vector<15x16x64xf32>
    %50 = arith.mulf %46, %49 : vector<15x16x64xf32>
    %51 = arith.addf %45, %50 : vector<15x16x64xf32>
    %c1_28 = arith.constant 1 : index
    %c0_29 = arith.constant 0 : index
    %c0_30 = arith.constant 0 : index
    %52 = vector.load %arg15[%c1_28, %c0_29, %c0_30] : memref<16x16x64xf32, #tpu.memory_space<vmem>>, vector<15x16x64xf32>
    tpu.vector_store %arg15[%c1_28, %c0_29, %c0_30], %51 {strides = array<i32>} : memref<16x16x64xf32, #tpu.memory_space<vmem>>, vector<15x16x64xf32>,
    %c1_31 = arith.constant 1 : index
    %c0_32 = arith.constant 0 : index
    %c0_33 = arith.constant 0 : index
    %53 = vector.load %arg15[%c1_31, %c0_32, %c0_33] : memref<16x16x64xf32, #tpu.memory_space<vmem>>, vector<15x15x64xf32>
    %54 = vector.extract_strided_slice %30 {offsets = [0, 1, 0], sizes = [15, 15, 64], strides = [1, 1, 1]} : vector<16x16x64xf32> to vector<15x15x64xf32>
    %55 = vector.extract_strided_slice %31 {offsets = [2, 0], sizes = [1, 64], strides = [1, 1]} : vector<9x64xf32> to vector<1x64xf32>
    %56 = vector.shape_cast %55 : vector<1x64xf32> to vector<1x1x64xf32>
    %57 = vector.broadcast %56 : vector<1x1x64xf32> to vector<15x15x64xf32>
    %58 = arith.mulf %54, %57 : vector<15x15x64xf32>
    %59 = arith.addf %53, %58 : vector<15x15x64xf32>
    %c1_34 = arith.constant 1 : index
    %c0_35 = arith.constant 0 : index
    %c0_36 = arith.constant 0 : index
    %60 = vector.load %arg15[%c1_34, %c0_35, %c0_36] : memref<16x16x64xf32, #tpu.memory_space<vmem>>, vector<15x15x64xf32>
    tpu.vector_store %arg15[%c1_34, %c0_35, %c0_36], %59 {strides = array<i32>} : memref<16x16x64xf32, #tpu.memory_space<vmem>>, vector<15x15x64xf32>,
    %c0_37 = arith.constant 0 : index
    %c1_38 = arith.constant 1 : index
    %c0_39 = arith.constant 0 : index
    %61 = vector.load %arg15[%c0_37, %c1_38, %c0_39] : memref<16x16x64xf32, #tpu.memory_space<vmem>>, vector<16x15x64xf32>
    %62 = vector.extract_strided_slice %30 {offsets = [0, 0, 0], sizes = [16, 15, 64], strides = [1, 1, 1]} : vector<16x16x64xf32> to vector<16x15x64xf32>
    %63 = vector.extract_strided_slice %31 {offsets = [3, 0], sizes = [1, 64], strides = [1, 1]} : vector<9x64xf32> to vector<1x64xf32>
    %64 = vector.shape_cast %63 : vector<1x64xf32> to vector<1x1x64xf32>
    %65 = vector.broadcast %64 : vector<1x1x64xf32> to vector<16x15x64xf32>
    %66 = arith.mulf %62, %65 : vector<16x15x64xf32>
    %67 = arith.addf %61, %66 : vector<16x15x64xf32>
    %c0_40 = arith.constant 0 : index
    %c1_41 = arith.constant 1 : index
    %c0_42 = arith.constant 0 : index
    %68 = vector.load %arg15[%c0_40, %c1_41, %c0_42] : memref<16x16x64xf32, #tpu.memory_space<vmem>>, vector<16x15x64xf32>
    tpu.vector_store %arg15[%c0_40, %c1_41, %c0_42], %67 {strides = array<i32>} : memref<16x16x64xf32, #tpu.memory_space<vmem>>, vector<16x15x64xf32>,
    %c0_43 = arith.constant 0 : index
    %c0_44 = arith.constant 0 : index
    %c0_45 = arith.constant 0 : index
    %69 = vector.load %arg15[%c0_43, %c0_44, %c0_45] : memref<16x16x64xf32, #tpu.memory_space<vmem>>, vector<16x15x64xf32>
    %70 = vector.extract_strided_slice %30 {offsets = [0, 1, 0], sizes = [16, 15, 64], strides = [1, 1, 1]} : vector<16x16x64xf32> to vector<16x15x64xf32>
    %71 = vector.extract_strided_slice %31 {offsets = [5, 0], sizes = [1, 64], strides = [1, 1]} : vector<9x64xf32> to vector<1x64xf32>
    %72 = vector.shape_cast %71 : vector<1x64xf32> to vector<1x1x64xf32>
    %73 = vector.broadcast %72 : vector<1x1x64xf32> to vector<16x15x64xf32>
    %74 = arith.mulf %70, %73 : vector<16x15x64xf32>
    %75 = arith.addf %69, %74 : vector<16x15x64xf32>
    %c0_46 = arith.constant 0 : index
    %c0_47 = arith.constant 0 : index
    %c0_48 = arith.constant 0 : index
    %76 = vector.load %arg15[%c0_46, %c0_47, %c0_48] : memref<16x16x64xf32, #tpu.memory_space<vmem>>, vector<16x15x64xf32>
    tpu.vector_store %arg15[%c0_46, %c0_47, %c0_48], %75 {strides = array<i32>} : memref<16x16x64xf32, #tpu.memory_space<vmem>>, vector<16x15x64xf32>,
    %c0_49 = arith.constant 0 : index
    %c1_50 = arith.constant 1 : index
    %c0_51 = arith.constant 0 : index
    %77 = vector.load %arg15[%c0_49, %c1_50, %c0_51] : memref<16x16x64xf32, #tpu.memory_space<vmem>>, vector<15x15x64xf32>
    %78 = vector.extract_strided_slice %30 {offsets = [1, 0, 0], sizes = [15, 15, 64], strides = [1, 1, 1]} : vector<16x16x64xf32> to vector<15x15x64xf32>
    %79 = vector.extract_strided_slice %31 {offsets = [6, 0], sizes = [1, 64], strides = [1, 1]} : vector<9x64xf32> to vector<1x64xf32>
    %80 = vector.shape_cast %79 : vector<1x64xf32> to vector<1x1x64xf32>
    %81 = vector.broadcast %80 : vector<1x1x64xf32> to vector<15x15x64xf32>
    %82 = arith.mulf %78, %81 : vector<15x15x64xf32>
    %83 = arith.addf %77, %82 : vector<15x15x64xf32>
    %c0_52 = arith.constant 0 : index
    %c1_53 = arith.constant 1 : index
    %c0_54 = arith.constant 0 : index
    %84 = vector.load %arg15[%c0_52, %c1_53, %c0_54] : memref<16x16x64xf32, #tpu.memory_space<vmem>>, vector<15x15x64xf32>
    tpu.vector_store %arg15[%c0_52, %c1_53, %c0_54], %83 {strides = array<i32>} : memref<16x16x64xf32, #tpu.memory_space<vmem>>, vector<15x15x64xf32>,
    %c0_55 = arith.constant 0 : index
    %c0_56 = arith.constant 0 : index
    %c0_57 = arith.constant 0 : index
    %85 = vector.load %arg15[%c0_55, %c0_56, %c0_57] : memref<16x16x64xf32, #tpu.memory_space<vmem>>, vector<15x16x64xf32>
    %86 = vector.extract_strided_slice %30 {offsets = [1, 0, 0], sizes = [15, 16, 64], strides = [1, 1, 1]} : vector<16x16x64xf32> to vector<15x16x64xf32>
    %87 = vector.extract_strided_slice %31 {offsets = [7, 0], sizes = [1, 64], strides = [1, 1]} : vector<9x64xf32> to vector<1x64xf32>
    %88 = vector.shape_cast %87 : vector<1x64xf32> to vector<1x1x64xf32>
    %89 = vector.broadcast %88 : vector<1x1x64xf32> to vector<15x16x64xf32>
    %90 = arith.mulf %86, %89 : vector<15x16x64xf32>
    %91 = arith.addf %85, %90 : vector<15x16x64xf32>
    %c0_58 = arith.constant 0 : index
    %c0_59 = arith.constant 0 : index
    %c0_60 = arith.constant 0 : index
    %92 = vector.load %arg15[%c0_58, %c0_59, %c0_60] : memref<16x16x64xf32, #tpu.memory_space<vmem>>, vector<15x16x64xf32>
    tpu.vector_store %arg15[%c0_58, %c0_59, %c0_60], %91 {strides = array<i32>} : memref<16x16x64xf32, #tpu.memory_space<vmem>>, vector<15x16x64xf32>,
    %c0_61 = arith.constant 0 : index
    %c0_62 = arith.constant 0 : index
    %c0_63 = arith.constant 0 : index
    %93 = vector.load %arg15[%c0_61, %c0_62, %c0_63] : memref<16x16x64xf32, #tpu.memory_space<vmem>>, vector<15x15x64xf32>
    %94 = vector.extract_strided_slice %30 {offsets = [1, 1, 0], sizes = [15, 15, 64], strides = [1, 1, 1]} : vector<16x16x64xf32> to vector<15x15x64xf32>
    %95 = vector.extract_strided_slice %31 {offsets = [8, 0], sizes = [1, 64], strides = [1, 1]} : vector<9x64xf32> to vector<1x64xf32>
    %96 = vector.shape_cast %95 : vector<1x64xf32> to vector<1x1x64xf32>
    %97 = vector.broadcast %96 : vector<1x1x64xf32> to vector<15x15x64xf32>
    %98 = arith.mulf %94, %97 : vector<15x15x64xf32>
    %99 = arith.addf %93, %98 : vector<15x15x64xf32>
    %c0_64 = arith.constant 0 : index
    %c0_65 = arith.constant 0 : index
    %c0_66 = arith.constant 0 : index
    %100 = vector.load %arg15[%c0_64, %c0_65, %c0_66] : memref<16x16x64xf32, #tpu.memory_space<vmem>>, vector<15x15x64xf32>
    tpu.vector_store %arg15[%c0_64, %c0_65, %c0_66], %99 {strides = array<i32>} : memref<16x16x64xf32, #tpu.memory_space<vmem>>, vector<15x15x64xf32>,
    %c0_67 = arith.constant 0 : index
    %c0_68 = arith.constant 0 : index
    %c0_69 = arith.constant 0 : index
    %101 = vector.load %arg15[%c0_67, %c0_68, %c0_69] : memref<16x16x64xf32, #tpu.memory_space<vmem>>, vector<16x16x64xf32>
    %102 = vector.shape_cast %101 : vector<16x16x64xf32> to vector<256x64xf32>
    %103 = vector.extract_strided_slice %102 {offsets = [0, 32], sizes = [256, 32], strides = [1, 1]} : vector<256x64xf32> to vector<256x32xf32>
    %cst_70 = arith.constant dense<0.000000e+00> : vector<256xf32>
    %104 = vector.multi_reduction <add>, %103, %cst_70 [1] : vector<256x32xf32> to vector<256xf32>
    %105 = vector.shape_cast %104 : vector<256xf32> to vector<256x1xf32>
    %c0_71 = arith.constant 0 : index
    %c0_72 = arith.constant 0 : index
    %106 = vector.load %arg9[%c0_71, %c0_72] : memref<1x1xf32, #tpu.memory_space<vmem>>, vector<1x1xf32>
    %107 = vector.broadcast %106 : vector<1x1xf32> to vector<256x1xf32>
    %108 = arith.addf %105, %107 : vector<256x1xf32>
    %109 = arith.negf %108 : vector<256x1xf32>
    %110 = math.exp %109 : vector<256x1xf32>
    %cst_73 = arith.constant 1.000000e+00 : f32
    %111 = vector.broadcast %cst_73 : f32 to vector<256x1xf32>
    %112 = arith.addf %111, %110 : vector<256x1xf32>
    %113 = arith.divf %111, %112 : vector<256x1xf32>
    %114 = vector.extract_strided_slice %102 {offsets = [0, 0], sizes = [256, 32], strides = [1, 1]} : vector<256x64xf32> to vector<256x32xf32>
    %c0_74 = arith.constant 0 : index
    %c0_75 = arith.constant 0 : index
    %115 = vector.load %arg8[%c0_74, %c0_75] : memref<1x32xf32, #tpu.memory_space<vmem>>, vector<1x32xf32>
    %116 = vector.broadcast %115 : vector<1x32xf32> to vector<256x32xf32>
    %117 = arith.addf %114, %116 : vector<256x32xf32>
    %cst_76 = arith.constant 5.000000e-01 : f32
    %118 = vector.broadcast %cst_76 : f32 to vector<256x32xf32>
    %119 = arith.mulf %118, %117 : vector<256x32xf32>
    %cst_77 = arith.constant 0.707106769 : f32
    %120 = vector.broadcast %cst_77 : f32 to vector<256x32xf32>
    %121 = arith.mulf %117, %120 : vector<256x32xf32>
    %122 = math.erf %121 : vector<256x32xf32>
    %cst_78 = arith.constant 1.000000e+00 : f32
    %123 = vector.broadcast %cst_78 : f32 to vector<256x32xf32>
    %124 = arith.addf %123, %122 : vector<256x32xf32>
    %125 = arith.mulf %119, %124 : vector<256x32xf32>
    %c0_79 = arith.constant 0 : index
    %c0_80 = arith.constant 0 : index
    %126 = vector.load %arg10[%c0_79, %c0_80] : memref<32x32xf32, #tpu.memory_space<vmem>>, vector<32x32xf32>
    %cst_81 = arith.constant dense<0.000000e+00> : vector<256x32xf32>
    %127 = tpu.matmul %125, %126, %cst_81 {dimension_numbers = #tpu.dot_dimension_numbers<[1], [0], [0], [1], [0, 0, 1, 1], [], []>} : vector<256x32xf32>, vector<32x32xf32>, vector<256x32xf32> -> vector<256x32xf32>
    %c0_82 = arith.constant 0 : index
    %c0_83 = arith.constant 0 : index
    %128 = vector.load %arg11[%c0_82, %c0_83] : memref<1x32xf32, #tpu.memory_space<vmem>>, vector<1x32xf32>
    %129 = vector.broadcast %128 : vector<1x32xf32> to vector<256x32xf32>
    %130 = arith.addf %127, %129 : vector<256x32xf32>
    %131 = vector.broadcast %113 : vector<256x1xf32> to vector<256x32xf32>
    %132 = arith.mulf %130, %131 : vector<256x32xf32>
    %c0_84 = arith.constant 0 : index
    %c0_85 = arith.constant 0 : index
    %133 = vector.load %arg12[%c0_84, %c0_85] : memref<32x64xf32, #tpu.memory_space<vmem>>, vector<32x64xf32>
    %cst_86 = arith.constant dense<0.000000e+00> : vector<256x64xf32>
    %134 = tpu.matmul %132, %133, %cst_86 {dimension_numbers = #tpu.dot_dimension_numbers<[1], [0], [0], [1], [0, 0, 1, 1], [], []>} : vector<256x32xf32>, vector<32x64xf32>, vector<256x64xf32> -> vector<256x64xf32>
    %c0_87 = arith.constant 0 : index
    %c0_88 = arith.constant 0 : index
    %135 = vector.load %arg13[%c0_87, %c0_88] : memref<1x64xf32, #tpu.memory_space<vmem>>, vector<1x64xf32>
    %136 = vector.broadcast %135 : vector<1x64xf32> to vector<256x64xf32>
    %137 = arith.addf %134, %136 : vector<256x64xf32>
    %138 = tpu.transpose %137, [1, 0] : vector<256x64xf32> -> vector<64x256xf32>
    %c0_89 = arith.constant 0 : index
    %c0_90 = arith.constant 0 : index
    %139 = vector.load %arg4[%c0_89, %c0_90] : memref<64x1xf32, #tpu.memory_space<vmem>>, vector<64x1xf32>
    %140 = vector.broadcast %139 : vector<64x1xf32> to vector<64x256xf32>
    %141 = arith.mulf %138, %140 : vector<64x256xf32>
    %142 = arith.addf %141, %1 : vector<64x256xf32>
    %c0_91 = arith.constant 0 : index
    %c0_92 = arith.constant 0 : index
    %c0_93 = arith.constant 0 : index
    %143 = vector.load %arg14[%c0_91, %c0_92, %c0_93] : memref<1x64x256xf32, #tpu.memory_space<vmem>>, vector<1x64x256xf32>
    %144 = vector.shape_cast %143 : vector<1x64x256xf32> to vector<64x256xf32>
    %145 = vector.shape_cast %142 : vector<64x256xf32> to vector<1x64x256xf32>
    tpu.vector_store %arg14[%c0_91, %c0_92, %c0_93], %145 {strides = array<i32>} : memref<1x64x256xf32, #tpu.memory_space<vmem>>, vector<1x64x256xf32>,
    return
  }
  func.func @transform_0(%arg0: i32) -> (i32, i32, i32) {
    %c0_i32 = arith.constant 0 : i32
    %c0_i32_0 = arith.constant 0 : i32
    %c0_i32_1 = arith.constant 0 : i32
    return %arg0, %c0_i32, %c0_i32_0 : i32, i32, i32
  }
  func.func @transform_1(%arg0: i32) -> (i32, i32) {
    %c0_i32 = arith.constant 0 : i32
    %c0_i32_0 = arith.constant 0 : i32
    %c0_i32_1 = arith.constant 0 : i32
    return %c0_i32, %c0_i32_0 : i32, i32
  }
  func.func @transform_2(%arg0: i32) -> (i32, i32) {
    %c0_i32 = arith.constant 0 : i32
    %c0_i32_0 = arith.constant 0 : i32
    %c0_i32_1 = arith.constant 0 : i32
    return %c0_i32, %c0_i32_0 : i32, i32
  }
  func.func @transform_3(%arg0: i32) -> (i32, i32) {
    %c0_i32 = arith.constant 0 : i32
    %c0_i32_0 = arith.constant 0 : i32
    %c0_i32_1 = arith.constant 0 : i32
    return %c0_i32, %c0_i32_0 : i32, i32
  }
  func.func @transform_4(%arg0: i32) -> (i32, i32) {
    %c0_i32 = arith.constant 0 : i32
    %c0_i32_0 = arith.constant 0 : i32
    %c0_i32_1 = arith.constant 0 : i32
    return %c0_i32, %c0_i32_0 : i32, i32
  }
  func.func @transform_5(%arg0: i32) -> (i32, i32) {
    %c0_i32 = arith.constant 0 : i32
    %c0_i32_0 = arith.constant 0 : i32
    %c0_i32_1 = arith.constant 0 : i32
    return %c0_i32, %c0_i32_0 : i32, i32
  }
  func.func @transform_6(%arg0: i32) -> (i32, i32) {
    %c0_i32 = arith.constant 0 : i32
    %c0_i32_0 = arith.constant 0 : i32
    %c0_i32_1 = arith.constant 0 : i32
    return %c0_i32, %c0_i32_0 : i32, i32
  }
  func.func @transform_7(%arg0: i32) -> (i32, i32) {
    %c0_i32 = arith.constant 0 : i32
    %c0_i32_0 = arith.constant 0 : i32
    %c0_i32_1 = arith.constant 0 : i32
    return %c0_i32, %c0_i32_0 : i32, i32
  }
  func.func @transform_8(%arg0: i32) -> (i32, i32) {
    %c0_i32 = arith.constant 0 : i32
    %c0_i32_0 = arith.constant 0 : i32
    %c0_i32_1 = arith.constant 0 : i32
    return %c0_i32, %c0_i32_0 : i32, i32
  }
  func.func @transform_9(%arg0: i32) -> (i32, i32) {
    %c0_i32 = arith.constant 0 : i32
    %c0_i32_0 = arith.constant 0 : i32
    %c0_i32_1 = arith.constant 0 : i32
    return %c0_i32, %c0_i32_0 : i32, i32
  }
  func.func @transform_10(%arg0: i32) -> (i32, i32) {
    %c0_i32 = arith.constant 0 : i32
    %c0_i32_0 = arith.constant 0 : i32
    %c0_i32_1 = arith.constant 0 : i32
    return %c0_i32, %c0_i32_0 : i32, i32
  }
  func.func @transform_11(%arg0: i32) -> (i32, i32) {
    %c0_i32 = arith.constant 0 : i32
    %c0_i32_0 = arith.constant 0 : i32
    %c0_i32_1 = arith.constant 0 : i32
    return %c0_i32, %c0_i32_0 : i32, i32
  }
  func.func @transform_12(%arg0: i32) -> (i32, i32) {
    %c0_i32 = arith.constant 0 : i32
    %c0_i32_0 = arith.constant 0 : i32
    %c0_i32_1 = arith.constant 0 : i32
    return %c0_i32, %c0_i32_0 : i32, i32
  }
  func.func @transform_13(%arg0: i32) -> (i32, i32, i32) {
    %c0_i32 = arith.constant 0 : i32
    %c0_i32_0 = arith.constant 0 : i32
    %c0_i32_1 = arith.constant 0 : i32
    return %arg0, %c0_i32, %c0_i32_0 : i32, i32, i32
  }
}

</mosaic_0001>

<llo_original>
// kernel: tpu_custom_call.1
$region0: #{tpu_custom_call.1}
  #allocation0 [shape = 'u32[]', space=smem, size = 0x4, offset = 0x4, fixed_abs, tag = 'smem constant byte address 0x4 - core index']
  #allocation1 [shape = 'u32[144,128]{1,0:T(1,128)}', space=vmem, size = 0x12000, scoped, tag = 'internal scratch']
  #allocation2 [shape = 'f32[16,16,64]{2,1,0:T(8,128)}', space=vmem, size = 0x20000, scoped, tag = 'scratch operand']
  #allocation3 [shape = 'f32[1,1]{1,0:T(1,128)S(1)}', space=vmem, size = 0x200, scoped, tag = 'scoped memory for tpu_custom_call.1']
  %s0 = inlined_call_operand.hbm [shape: f32[2,64,256], index: 0, kind: input, shape index: {}]
  %s1 = inlined_call_operand.vmem [shape: f32[1,64], index: 1, kind: input, shape index: {}]
  %s2 = inlined_call_operand.vmem [shape: f32[1,64], index: 2, kind: input, shape index: {}]
  %s3 = inlined_call_operand.vmem [shape: f32[64,1], index: 3, kind: input, shape index: {}]
  %s4 = inlined_call_operand.vmem [shape: f32[64,64], index: 4, kind: input, shape index: {}]
  %s5 = inlined_call_operand.vmem [shape: f32[1,64], index: 5, kind: input, shape index: {}]
  %s6 = inlined_call_operand.hbm [shape: f32[9,64], index: 6, kind: input, shape index: {}]
  %s7 = inlined_call_operand.hbm [shape: f32[1,32], index: 7, kind: input, shape index: {}]
  %s8 = inlined_call_operand.<no memory space> [shape: f32[1,1], index: 8, kind: input, shape index: {}]
  %s9 = inlined_call_operand.vmem [shape: f32[32,32], index: 9, kind: input, shape index: {}]
  %s10 = inlined_call_operand.vmem [shape: f32[1,32], index: 10, kind: input, shape index: {}]
  %s11 = inlined_call_operand.hbm [shape: f32[32,64], index: 11, kind: input, shape index: {}]
  %s12 = inlined_call_operand.vmem [shape: f32[1,64], index: 12, kind: input, shape index: {}]
  %s13 = inlined_call_operand.hbm [shape: f32[2,64,256], index: 13, kind: output, shape index: {}]
  %s14 = sld [smem:[#allocation0]]
  $region101: #{tpu_custom_call.1} parent=0
    _
  %s16 = ssub.s32 1, %s14
  %s17 = scalar_select 0, %s16, %s14
  %v18 = vstv %s8
  %19 = vst [vmem:[#allocation3] sm:$0x1] %v18
  $region1: #{tpu_custom_call.1} parent=0
    #allocation4 [shape = 'u8[131072]{0}', space=vmem, size = 0x20000, scoped, tag = 'input window, operand 0']
    #allocation5 [shape = 's32[2]{0}', space=sflag, size = 0x8, scoped, tag = 'scoped memory for tpu_custom_call.1']
    #allocation6 [shape = 's32[2]{0}', space=sflag, size = 0x8, scoped, tag = 'scoped memory for tpu_custom_call.1']
    #allocation7 [shape = 'u8[8192]{0}', space=vmem, size = 0x2000, scoped, tag = 'input window, operand 6, single buffered']
    #allocation8 [shape = 's32[1]{0}', space=sflag, size = 0x4, scoped, tag = 'scoped memory for tpu_custom_call.1']
    #allocation9 [shape = 'u8[512]{0}', space=vmem, size = 0x400, scoped, tag = 'input window, operand 7, single buffered']
    #allocation10 [shape = 'u8[16384]{0}', space=vmem, size = 0x4000, scoped, tag = 'input window, operand 11, single buffered']
    #allocation11 [shape = 's32[1]{0}', space=sflag, size = 0x4, scoped, tag = 'scoped memory for tpu_custom_call.1']
    #allocation12 [shape = 'u8[131072]{0}', space=vmem, size = 0x20000, scoped, tag = 'output window, operand 0']
    %20 = vsyncpa [#allocation5], 0
    %s21 = scalar_lea.sflag [#allocation5], 1
    %22 = vsyncpa %s21, 0
    %23 = vsyncpa [#allocation8], 0
    %24 = vsyncpa [#allocation11], 0
    %25 = vsyncpa [#allocation6], 0
    %s26 = scalar_lea.sflag [#allocation6], 1
    %27 = vsyncpa %s26, 0
    loop: start=0, step=1, limit=4
    $region2: #{tpu_custom_call.1} parent=1 // loop_pre_header
      _
    $region3: #{tpu_custom_call.1} parent=1 // loop_header
      %s29 = sphi 0, %s33
      %p30 = scmp.ge.s32.totalorder %s29, 4
      %s39 = sphi 0, %s41
      %s42 = sphi 0, %s39
      %s43 = sphi 0, %s42
      %s59 = sphi 0, %s43
      %s63 = sphi 0, %s63
      %s65 = sphi 0, %s63
      %s66 = sphi 0, %s65
      %s80 = sphi 0, %s66
      %s84 = sphi 0, %s84
      %s86 = sphi 0, %s84
      %s87 = sphi 0, %s86
      %s101 = sphi 0, %s87
      %s105 = sphi 0, %s105
      %s107 = sphi 0, %s105
      %s108 = sphi 0, %s107
      %s122 = sphi 0, %s108
      %s126 = sphi 0, %s126
      %s128 = sphi 0, %s126
      %s129 = sphi 0, %s128
      %s143 = sphi 0, %s129
      %s147 = sphi 0, %s147
      %s149 = sphi 0, %s147
      %s150 = sphi 0, %s149
      %s164 = sphi 0, %s150
      %s168 = sphi 0, %s168
      %s170 = sphi 0, %s168
      %s171 = sphi 0, %s170
      %s185 = sphi 0, %s171
      %s189 = sphi 0, %s189
      %s191 = sphi 0, %s189
      %s192 = sphi 0, %s191
      %s206 = sphi 0, %s192
      %s210 = sphi 0, %s210
      %s212 = sphi 0, %s210
      %s213 = sphi 0, %s212
      %s227 = sphi 0, %s213
      %s231 = sphi 0, %s231
      %s233 = sphi 0, %s231
      %s234 = sphi 0, %s233
      %s248 = sphi 0, %s234
      %s252 = sphi 0, %s252
      %s254 = sphi 0, %s252
      %s255 = sphi 0, %s254
      %s269 = sphi 0, %s255
      %s273 = sphi 0, %s273
      %s275 = sphi 0, %s273
      %s276 = sphi 0, %s275
      %s290 = sphi 0, %s276
      %s294 = sphi 0, %s294
      %s296 = sphi 0, %s294
      %s297 = sphi 0, %s296
      %s311 = sphi 0, %s297
      %s317 = sphi 0, %s319
      %s320 = sphi 0, %s317
      %s321 = sphi 0, %s320
      %s337 = sphi 0, %s321
    $region4: #{tpu_custom_call.1} parent=1 // loop_header_branch
      %32 = sbr.rel (%p30) target = $region8
    $region5: #{tpu_custom_call.1} parent=1 // loop_body
      %s34 = ssub.s32 %s29, 1
      %s35 = ssub.s32 %s29, 2
      %s36 = sadd.s32 %s29, 1
      %s37 = ssub.s32 %s29, %s36
      %p38 = scmp.eq.s32.totalorder %s37, 0
      %s40 = sadd.s32 %s39, 1
      %s41 = scalar_select %p38, %s39, %s40
      %p44 = pneg %p38
      %p45 = scmp.eq.s32.totalorder %s29, 1
      %p46 = por %p44, %p45
      %p47 = scmp.ne.s32.totalorder %s39, %s42
      %p48 = scmp.eq.s32.totalorder %s29, 0
      %p49 = por %p47, %p48
      %p50 = scmp.ne.s32.totalorder %s39, %s42
      %p51 = scmp.eq.s32.totalorder %s34, 1
      %p52 = por %p50, %p51
      %p53 = scmp.ne.s32.totalorder %s42, %s43
      %p54 = scmp.eq.s32.totalorder %s34, 0
      %p55 = por %p53, %p54
      %p56 = scmp.ne.s32.totalorder %s42, %s43
      %p57 = scmp.eq.s32.totalorder %s35, 1
      %p58 = por %p56, %p57
      %p60 = scmp.ne.s32.totalorder %s43, %s59
      %p61 = scmp.eq.s32.totalorder %s35, 0
      %p62 = por %p60, %p61
      %s64 = sadd.s32 %s63, 1
      %p67 = scmp.eq.s32.totalorder %s29, 1
      %p68 = scmp.ne.s32.totalorder %s63, %s65
      %p69 = scmp.eq.s32.totalorder %s29, 0
      %p70 = por %p68, %p69
      %p71 = scmp.ne.s32.totalorder %s63, %s65
      %p72 = scmp.eq.s32.totalorder %s34, 1
      %p73 = por %p71, %p72
      %p74 = scmp.ne.s32.totalorder %s65, %s66
      %p75 = scmp.eq.s32.totalorder %s34, 0
      %p76 = por %p74, %p75
      %p77 = scmp.ne.s32.totalorder %s65, %s66
      %p78 = scmp.eq.s32.totalorder %s35, 1
      %p79 = por %p77, %p78
      %p81 = scmp.ne.s32.totalorder %s66, %s80
      %p82 = scmp.eq.s32.totalorder %s35, 0
      %p83 = por %p81, %p82
      %s85 = sadd.s32 %s84, 1
      %p88 = scmp.eq.s32.totalorder %s29, 1
      %p89 = scmp.ne.s32.totalorder %s84, %s86
      %p90 = scmp.eq.s32.totalorder %s29, 0
      %p91 = por %p89, %p90
      %p92 = scmp.ne.s32.totalorder %s84, %s86
      %p93 = scmp.eq.s32.totalorder %s34, 1
      %p94 = por %p92, %p93
      %p95 = scmp.ne.s32.totalorder %s86, %s87
      %p96 = scmp.eq.s32.totalorder %s34, 0
      %p97 = por %p95, %p96
      %p98 = scmp.ne.s32.totalorder %s86, %s87
      %p99 = scmp.eq.s32.totalorder %s35, 1
      %p100 = por %p98, %p99
      %p102 = scmp.ne.s32.totalorder %s87, %s101
      %p103 = scmp.eq.s32.totalorder %s35, 0
      %p104 = por %p102, %p103
      %s106 = sadd.s32 %s105, 1
      %p109 = scmp.eq.s32.totalorder %s29, 1
      %p110 = scmp.ne.s32.totalorder %s105, %s107
      %p111 = scmp.eq.s32.totalorder %s29, 0
      %p112 = por %p110, %p111
      %p113 = scmp.ne.s32.totalorder %s105, %s107
      %p114 = scmp.eq.s32.totalorder %s34, 1
      %p115 = por %p113, %p114
      %p116 = scmp.ne.s32.totalorder %s107, %s108
      %p117 = scmp.eq.s32.totalorder %s34, 0
      %p118 = por %p116, %p117
      %p119 = scmp.ne.s32.totalorder %s107, %s108
      %p120 = scmp.eq.s32.totalorder %s35, 1
      %p121 = por %p119, %p120
      %p123 = scmp.ne.s32.totalorder %s108, %s122
      %p124 = scmp.eq.s32.totalorder %s35, 0
      %p125 = por %p123, %p124
      %s127 = sadd.s32 %s126, 1
      %p130 = scmp.eq.s32.totalorder %s29, 1
      %p131 = scmp.ne.s32.totalorder %s126, %s128
      %p132 = scmp.eq.s32.totalorder %s29, 0
      %p133 = por %p131, %p132
      %p134 = scmp.ne.s32.totalorder %s126, %s128
      %p135 = scmp.eq.s32.totalorder %s34, 1
      %p136 = por %p134, %p135
      %p137 = scmp.ne.s32.totalorder %s128, %s129
      %p138 = scmp.eq.s32.totalorder %s34, 0
      %p139 = por %p137, %p138
      %p140 = scmp.ne.s32.totalorder %s128, %s129
      %p141 = scmp.eq.s32.totalorder %s35, 1
      %p142 = por %p140, %p141
      %p144 = scmp.ne.s32.totalorder %s129, %s143
      %p145 = scmp.eq.s32.totalorder %s35, 0
      %p146 = por %p144, %p145
      %s148 = sadd.s32 %s147, 1
      %p151 = scmp.eq.s32.totalorder %s29, 1
      %p152 = scmp.ne.s32.totalorder %s147, %s149
      %p153 = scmp.eq.s32.totalorder %s29, 0
      %p154 = por %p152, %p153
      %p155 = scmp.ne.s32.totalorder %s147, %s149
      %p156 = scmp.eq.s32.totalorder %s34, 1
      %p157 = por %p155, %p156
      %p158 = scmp.ne.s32.totalorder %s149, %s150
      %p159 = scmp.eq.s32.totalorder %s34, 0
      %p160 = por %p158, %p159
      %p161 = scmp.ne.s32.totalorder %s149, %s150
      %p162 = scmp.eq.s32.totalorder %s35, 1
      %p163 = por %p161, %p162
      %p165 = scmp.ne.s32.totalorder %s150, %s164
      %p166 = scmp.eq.s32.totalorder %s35, 0
      %p167 = por %p165, %p166
      %s169 = sadd.s32 %s168, 1
      %p172 = scmp.eq.s32.totalorder %s29, 1
      %p173 = scmp.ne.s32.totalorder %s168, %s170
      %p174 = scmp.eq.s32.totalorder %s29, 0
      %p175 = por %p173, %p174
      %p176 = scmp.ne.s32.totalorder %s168, %s170
      %p177 = scmp.eq.s32.totalorder %s34, 1
      %p178 = por %p176, %p177
      %p179 = scmp.ne.s32.totalorder %s170, %s171
      %p180 = scmp.eq.s32.totalorder %s34, 0
      %p181 = por %p179, %p180
      %p182 = scmp.ne.s32.totalorder %s170, %s171
      %p183 = scmp.eq.s32.totalorder %s35, 1
      %p184 = por %p182, %p183
      %p186 = scmp.ne.s32.totalorder %s171, %s185
      %p187 = scmp.eq.s32.totalorder %s35, 0
      %p188 = por %p186, %p187
      %s190 = sadd.s32 %s189, 1
      %p193 = scmp.eq.s32.totalorder %s29, 1
      %p194 = scmp.ne.s32.totalorder %s189, %s191
      %p195 = scmp.eq.s32.totalorder %s29, 0
      %p196 = por %p194, %p195
      %p197 = scmp.ne.s32.totalorder %s189, %s191
      %p198 = scmp.eq.s32.totalorder %s34, 1
      %p199 = por %p197, %p198
      %p200 = scmp.ne.s32.totalorder %s191, %s192
      %p201 = scmp.eq.s32.totalorder %s34, 0
      %p202 = por %p200, %p201
      %p203 = scmp.ne.s32.totalorder %s191, %s192
      %p204 = scmp.eq.s32.totalorder %s35, 1
      %p205 = por %p203, %p204
      %p207 = scmp.ne.s32.totalorder %s192, %s206
      %p208 = scmp.eq.s32.totalorder %s35, 0
      %p209 = por %p207, %p208
      %s211 = sadd.s32 %s210, 1
      %p214 = scmp.eq.s32.totalorder %s29, 1
      %p215 = scmp.ne.s32.totalorder %s210, %s212
      %p216 = scmp.eq.s32.totalorder %s29, 0
      %p217 = por %p215, %p216
      %p218 = scmp.ne.s32.totalorder %s210, %s212
      %p219 = scmp.eq.s32.totalorder %s34, 1
      %p220 = por %p218, %p219
      %p221 = scmp.ne.s32.totalorder %s212, %s213
      %p222 = scmp.eq.s32.totalorder %s34, 0
      %p223 = por %p221, %p222
      %p224 = scmp.ne.s32.totalorder %s212, %s213
      %p225 = scmp.eq.s32.totalorder %s35, 1
      %p226 = por %p224, %p225
      %p228 = scmp.ne.s32.totalorder %s213, %s227
      %p229 = scmp.eq.s32.totalorder %s35, 0
      %p230 = por %p228, %p229
      %s232 = sadd.s32 %s231, 1
      %p235 = scmp.eq.s32.totalorder %s29, 1
      %p236 = scmp.ne.s32.totalorder %s231, %s233
      %p237 = scmp.eq.s32.totalorder %s29, 0
      %p238 = por %p236, %p237
      %p239 = scmp.ne.s32.totalorder %s231, %s233
      %p240 = scmp.eq.s32.totalorder %s34, 1
      %p241 = por %p239, %p240
      %p242 = scmp.ne.s32.totalorder %s233, %s234
      %p243 = scmp.eq.s32.totalorder %s34, 0
      %p244 = por %p242, %p243
      %p245 = scmp.ne.s32.totalorder %s233, %s234
      %p246 = scmp.eq.s32.totalorder %s35, 1
      %p247 = por %p245, %p246
      %p249 = scmp.ne.s32.totalorder %s234, %s248
      %p250 = scmp.eq.s32.totalorder %s35, 0
      %p251 = por %p249, %p250
      %s253 = sadd.s32 %s252, 1
      %p256 = scmp.eq.s32.totalorder %s29, 1
      %p257 = scmp.ne.s32.totalorder %s252, %s254
      %p258 = scmp.eq.s32.totalorder %s29, 0
      %p259 = por %p257, %p258
      %p260 = scmp.ne.s32.totalorder %s252, %s254
      %p261 = scmp.eq.s32.totalorder %s34, 1
      %p262 = por %p260, %p261
      %p263 = scmp.ne.s32.totalorder %s254, %s255
      %p264 = scmp.eq.s32.totalorder %s34, 0
      %p265 = por %p263, %p264
      %p266 = scmp.ne.s32.totalorder %s254, %s255
      %p267 = scmp.eq.s32.totalorder %s35, 1
      %p268 = por %p266, %p267
      %p270 = scmp.ne.s32.totalorder %s255, %s269
      %p271 = scmp.eq.s32.totalorder %s35, 0
      %p272 = por %p270, %p271
      %s274 = sadd.s32 %s273, 1
      %p277 = scmp.eq.s32.totalorder %s29, 1
      %p278 = scmp.ne.s32.totalorder %s273, %s275
      %p279 = scmp.eq.s32.totalorder %s29, 0
      %p280 = por %p278, %p279
      %p281 = scmp.ne.s32.totalorder %s273, %s275
      %p282 = scmp.eq.s32.totalorder %s34, 1
      %p283 = por %p281, %p282
      %p284 = scmp.ne.s32.totalorder %s275, %s276
      %p285 = scmp.eq.s32.totalorder %s34, 0
      %p286 = por %p284, %p285
      %p287 = scmp.ne.s32.totalorder %s275, %s276
      %p288 = scmp.eq.s32.totalorder %s35, 1
      %p289 = por %p287, %p288
      %p291 = scmp.ne.s32.totalorder %s276, %s290
      %p292 = scmp.eq.s32.totalorder %s35, 0
      %p293 = por %p291, %p292
      %s295 = sadd.s32 %s294, 1
      %p298 = scmp.eq.s32.totalorder %s29, 1
      %p299 = scmp.ne.s32.totalorder %s294, %s296
      %p300 = scmp.eq.s32.totalorder %s29, 0
      %p301 = por %p299, %p300
      %p302 = scmp.ne.s32.totalorder %s294, %s296
      %p303 = scmp.eq.s32.totalorder %s34, 1
      %p304 = por %p302, %p303
      %p305 = scmp.ne.s32.totalorder %s296, %s297
      %p306 = scmp.eq.s32.totalorder %s34, 0
      %p307 = por %p305, %p306
      %p308 = scmp.ne.s32.totalorder %s296, %s297
      %p309 = scmp.eq.s32.totalorder %s35, 1
      %p310 = por %p308, %p309
      %p312 = scmp.ne.s32.totalorder %s297, %s311
      %p313 = scmp.eq.s32.totalorder %s35, 0
      %p314 = por %p312, %p313
      %s315 = ssub.s32 %s29, %s36
      %p316 = scmp.eq.s32.totalorder %s315, 0
      %s318 = sadd.s32 %s317, 1
      %s319 = scalar_select %p316, %s317, %s318
      %p322 = pneg %p316
      %p323 = scmp.eq.s32.totalorder %s29, 1
      %p324 = por %p322, %p323
      %p325 = scmp.ne.s32.totalorder %s317, %s320
      %p326 = scmp.eq.s32.totalorder %s29, 0
      %p327 = por %p325, %p326
      %p328 = scmp.ne.s32.totalorder %s317, %s320
      %p329 = scmp.eq.s32.totalorder %s34, 1
      %p330 = por %p328, %p329
      %p331 = scmp.ne.s32.totalorder %s320, %s321
      %p332 = scmp.eq.s32.totalorder %s34, 0
      %p333 = por %p331, %p332
      %p334 = scmp.ne.s32.totalorder %s320, %s321
      %p335 = scmp.eq.s32.totalorder %s35, 1
      %p336 = por %p334, %p335
      %p338 = scmp.ne.s32.totalorder %s321, %s337
      %p339 = scmp.eq.s32.totalorder %s35, 0
      %p340 = por %p338, %p339
      %p341 = scmp.le.s32.totalorder 1, %s29
      %p342 = scmp.lt.s32.totalorder %s29, 3
      %p343 = pnand %p341, %p342
      %p344 = pneg %p343
      // Predicated region
      $region9: #{tpu_custom_call.1} parent=5 // pred_check
        _
      $region10: #{tpu_custom_call.1} parent=5 // pred_check_branch
        %346 = sbr.rel (%p343) target = $region12
      $region11: #{tpu_custom_call.1} parent=5 // pred_region
        %s347 = ssub.s32 %s29, 1
        // Predicated region
        $region13: #{tpu_custom_call.1} parent=11 // pred_check
          %p348 = pneg %p76
        $region14: #{tpu_custom_call.1} parent=11 // pred_check_branch
          %350 = sbr.rel (%p348) target = $region16
        $region15: #{tpu_custom_call.1} parent=11 // pred_region
          _
        $region16: #{tpu_custom_call.1} parent=11 // pred_fallthru
          _
        // Predicated region
        $region17: #{tpu_custom_call.1} parent=11 // pred_check
          %p351 = pneg %p97
        $region18: #{tpu_custom_call.1} parent=11 // pred_check_branch
          %353 = sbr.rel (%p351) target = $region20
        $region19: #{tpu_custom_call.1} parent=11 // pred_region
          _
        $region20: #{tpu_custom_call.1} parent=11 // pred_fallthru
          _
        // Predicated region
        $region21: #{tpu_custom_call.1} parent=11 // pred_check
          %p354 = pneg %p118
        $region22: #{tpu_custom_call.1} parent=11 // pred_check_branch
          %356 = sbr.rel (%p354) target = $region24
        $region23: #{tpu_custom_call.1} parent=11 // pred_region
          _
        $region24: #{tpu_custom_call.1} parent=11 // pred_fallthru
          _
        // Predicated region
        $region25: #{tpu_custom_call.1} parent=11 // pred_check
          %p357 = pneg %p139
        $region26: #{tpu_custom_call.1} parent=11 // pred_check_branch
          %359 = sbr.rel (%p357) target = $region28
        $region27: #{tpu_custom_call.1} parent=11 // pred_region
          _
        $region28: #{tpu_custom_call.1} parent=11 // pred_fallthru
          _
        // Predicated region
        $region29: #{tpu_custom_call.1} parent=11 // pred_check
          %p360 = pneg %p160
        $region30: #{tpu_custom_call.1} parent=11 // pred_check_branch
          %362 = sbr.rel (%p360) target = $region32
        $region31: #{tpu_custom_call.1} parent=11 // pred_region
          _
        $region32: #{tpu_custom_call.1} parent=11 // pred_fallthru
          _
        // Predicated region
        $region33: #{tpu_custom_call.1} parent=11 // pred_check
          %p363 = pneg %p181
        $region34: #{tpu_custom_call.1} parent=11 // pred_check_branch
          %365 = sbr.rel (%p363) target = $region36
        $region35: #{tpu_custom_call.1} parent=11 // pred_region
          %s367 = ssub.s32 256, 256
          %368 = vsyncadd [#allocation8], %s367
          %s369 = sshll.u32 [#allocation7], 4
          %s370 = int_to_ptr.vmem [resolvable:$true] %s369
          %375 = dma.hbm_to_vmem [thread:$0]  %s6, 256, %s370, [#allocation8], 128, 128, 8
        $region36: #{tpu_custom_call.1} parent=11 // pred_fallthru
          _
        // Predicated region
        $region37: #{tpu_custom_call.1} parent=11 // pred_check
          %p376 = pneg %p202
        $region38: #{tpu_custom_call.1} parent=11 // pred_check_branch
          %378 = sbr.rel (%p376) target = $region40
        $region39: #{tpu_custom_call.1} parent=11 // pred_region
          %s380 = ssub.s32 16, 16
          %381 = vsyncadd [#allocation8], %s380
          %s383 = sshll.u32 [#allocation9], 4
          %s384 = int_to_ptr.vmem [resolvable:$true] %s383
          %386 = dma.hbm_to_vmem [thread:$0]  %s7, 16, %s384, [#allocation8]
        $region40: #{tpu_custom_call.1} parent=11 // pred_fallthru
          _
        // Predicated region
        $region41: #{tpu_custom_call.1} parent=11 // pred_check
          %p387 = pneg %p223
        $region42: #{tpu_custom_call.1} parent=11 // pred_check_branch
          %389 = sbr.rel (%p387) target = $region44
        $region43: #{tpu_custom_call.1} parent=11 // pred_region
          _
        $region44: #{tpu_custom_call.1} parent=11 // pred_fallthru
          _
        // Predicated region
        $region45: #{tpu_custom_call.1} parent=11 // pred_check
          %p390 = pneg %p244
        $region46: #{tpu_custom_call.1} parent=11 // pred_check_branch
          %392 = sbr.rel (%p390) target = $region48
        $region47: #{tpu_custom_call.1} parent=11 // pred_region
          _
        $region48: #{tpu_custom_call.1} parent=11 // pred_fallthru
          _
        // Predicated region
        $region49: #{tpu_custom_call.1} parent=11 // pred_check
          %p393 = pneg %p265
        $region50: #{tpu_custom_call.1} parent=11 // pred_check_branch
          %395 = sbr.rel (%p393) target = $region52
        $region51: #{tpu_custom_call.1} parent=11 // pred_region
          _
        $region52: #{tpu_custom_call.1} parent=11 // pred_fallthru
          _
        // Predicated region
        $region53: #{tpu_custom_call.1} parent=11 // pred_check
          %p396 = pneg %p286
        $region54: #{tpu_custom_call.1} parent=11 // pred_check_branch
          %398 = sbr.rel (%p396) target = $region56
        $region55: #{tpu_custom_call.1} parent=11 // pred_region
          %s400 = ssub.s32 512, 512
          %401 = vsyncadd [#allocation11], %s400
          %s402 = sshll.u32 [#allocation10], 4
          %s403 = int_to_ptr.vmem [resolvable:$true] %s402
          %408 = dma.hbm_to_vmem [thread:$0]  %s11, 512, %s403, [#allocation11], 128, 128, 8
        $region56: #{tpu_custom_call.1} parent=11 // pred_fallthru
          _
        // Predicated region
        $region57: #{tpu_custom_call.1} parent=11 // pred_check
          %p409 = pneg %p307
        $region58: #{tpu_custom_call.1} parent=11 // pred_check_branch
          %411 = sbr.rel (%p409) target = $region60
        $region59: #{tpu_custom_call.1} parent=11 // pred_region
          _
        $region60: #{tpu_custom_call.1} parent=11 // pred_fallthru
          _
      $region12: #{tpu_custom_call.1} parent=5 // pred_fallthru
        _
      %p412 = scmp.lt.s32.totalorder %s29, 2
      // Predicated region
      $region61: #{tpu_custom_call.1} parent=5 // pred_check
        %p413 = pneg %p412
      $region62: #{tpu_custom_call.1} parent=5 // pred_check_branch
        %415 = sbr.rel (%p413) target = $region64
      $region63: #{tpu_custom_call.1} parent=5 // pred_region
        // Predicated region
        $region65: #{tpu_custom_call.1} parent=63 // pred_check
          %p416 = pneg %p49
        $region66: #{tpu_custom_call.1} parent=63 // pred_check_branch
          %418 = sbr.rel (%p416) target = $region68
        $region67: #{tpu_custom_call.1} parent=63 // pred_region
          %s419 = sand.u32 %s39, 1
          %s420 = scalar_lea.sflag [#allocation5], %s419
          %s421 = sand.u32 %s39, 1
          %s422 = smul.addr %s421, 128
          %s423 = scalar_lea.vmem [#allocation4], %s422
          %s425 = ssub.s32 2048, 2048
          %426 = vsyncadd %s420, %s425
          %s427 = smul.addr %s29, 16
          %s428 = smul.addr %s427, 128
          %s429 = scalar_lea.hbm %s0, %s428
          %s430 = sshll.u32 %s423, 4
          %s431 = int_to_ptr.vmem [resolvable:$true] %s430
          %436 = dma.hbm_to_vmem [thread:$0]  %s429, 2048, %s431, %s420, 256, 256, 16
        $region68: #{tpu_custom_call.1} parent=63 // pred_fallthru
          _
      $region64: #{tpu_custom_call.1} parent=5 // pred_fallthru
        _
      %p437 = scmp.le.s32.totalorder 1, %s29
      %p438 = scmp.lt.s32.totalorder %s29, 3
      %p439 = pnand %p437, %p438
      %p440 = pneg %p439
      // Predicated region
      $region69: #{tpu_custom_call.1} parent=5 // pred_check
        _
      $region70: #{tpu_custom_call.1} parent=5 // pred_check_branch
        %442 = sbr.rel (%p439) target = $region72
      $region71: #{tpu_custom_call.1} parent=5 // pred_region
        %s443 = ssub.s32 %s29, 1
        %s444 = sand.u32 %s42, 1
        %s445 = scalar_lea.sflag [#allocation5], %s444
        %s446 = sand.u32 %s42, 1
        %s447 = smul.addr %s446, 128
        %s448 = scalar_lea.vmem [#allocation4], %s447
        // Predicated region
        $region73: #{tpu_custom_call.1} parent=71 // pred_check
          %p449 = pneg %p55
        $region74: #{tpu_custom_call.1} parent=71 // pred_check_branch
          %451 = sbr.rel (%p449) target = $region76
        $region75: #{tpu_custom_call.1} parent=71 // pred_region
          %452 = dma.done %s445, 2048
        $region76: #{tpu_custom_call.1} parent=71 // pred_fallthru
          _
        // Predicated region
        $region77: #{tpu_custom_call.1} parent=71 // pred_check
          %p453 = pneg %p181
        $region78: #{tpu_custom_call.1} parent=71 // pred_check_branch
          %455 = sbr.rel (%p453) target = $region80
        $region79: #{tpu_custom_call.1} parent=71 // pred_region
          %456 = dma.done [#allocation8], 256
        $region80: #{tpu_custom_call.1} parent=71 // pred_fallthru
          _
        // Predicated region
        $region81: #{tpu_custom_call.1} parent=71 // pred_check
          %p457 = pneg %p202
        $region82: #{tpu_custom_call.1} parent=71 // pred_check_branch
          %459 = sbr.rel (%p457) target = $region84
        $region83: #{tpu_custom_call.1} parent=71 // pred_region
          %460 = dma.done [#allocation8], 16
        $region84: #{tpu_custom_call.1} parent=71 // pred_fallthru
          _
        // Predicated region
        $region85: #{tpu_custom_call.1} parent=71 // pred_check
          %p461 = pneg %p286
        $region86: #{tpu_custom_call.1} parent=71 // pred_check_branch
          %463 = sbr.rel (%p461) target = $region88
        $region87: #{tpu_custom_call.1} parent=71 // pred_region
          %464 = dma.done [#allocation11], 512
        $region88: #{tpu_custom_call.1} parent=71 // pred_fallthru
          _
        %s465 = sand.u32 %s42, 1
        %s466 = scalar_lea.sflag [#allocation5], %s465
        %s467 = sand.u32 %s42, 1
        %s468 = smul.addr %s467, 128
        %s469 = scalar_lea.vmem [#allocation4], %s468
        %p470 = pneg %p55
        %p471 = pneg %p52
        %p472 = pneg %p76
        %p473 = pneg %p73
        %p474 = pneg %p97
        %p475 = pneg %p94
        %p476 = pneg %p118
        %p477 = pneg %p115
        %p478 = pneg %p139
        %p479 = pneg %p136
        %p480 = pneg %p160
        %p481 = pneg %p157
        %p482 = pneg %p181
        %p483 = pneg %p178
        %p484 = pneg %p202
        %p485 = pneg %p199
        %p486 = pneg %p223
        %p487 = pneg %p220
        %p488 = pneg %p244
        %p489 = pneg %p241
        %p490 = pneg %p265
        %p491 = pneg %p262
        %p492 = pneg %p286
        %p493 = pneg %p283
        %p494 = pneg %p307
        %p495 = pneg %p304
        %p496 = pneg %p333
        %p497 = pneg %p330
        %s498 = sand.u32 %s320, 1
        %s499 = scalar_lea.sflag [#allocation6], %s498
        %s500 = sand.u32 %s320, 1
        %s501 = smul.addr %s500, 128
        %s502 = scalar_lea.vmem [#allocation12], %s501
        %v503 = vld [vmem:[%s448] sm:$0xff]
        %v504 = vld [vmem:[%s448 + $0x8] sm:$0xff]
        %v505 = vld [vmem:[%s448 + $0x10] sm:$0xff]
        %v506 = vld [vmem:[%s448 + $0x18] sm:$0xff]
        %v507 = vld [vmem:[%s448 + $0x20] sm:$0xff]
        %v508 = vld [vmem:[%s448 + $0x28] sm:$0xff]
        %v509 = vld [vmem:[%s448 + $0x30] sm:$0xff]
        %v510 = vld [vmem:[%s448 + $0x38] sm:$0xff]
        %v511 = vld [vmem:[%s448 + $0x40] sm:$0xff]
        %v512 = vld [vmem:[%s448 + $0x48] sm:$0xff]
        %v513 = vld [vmem:[%s448 + $0x50] sm:$0xff]
        %v514 = vld [vmem:[%s448 + $0x58] sm:$0xff]
        %v515 = vld [vmem:[%s448 + $0x60] sm:$0xff]
        %v516 = vld [vmem:[%s448 + $0x68] sm:$0xff]
        %v517 = vld [vmem:[%s448 + $0x70] sm:$0xff]
        %v518 = vld [vmem:[%s448 + $0x78] sm:$0xff]
        %519 = vxpose.xlu0.b32.start [1/16] %v503, 128
        %520 = vxpose.xlu0.b32.cont [2/16] %v505, 128
        %521 = vxpose.xlu0.b32.cont [3/16] %v507, 128
        %522 = vxpose.xlu0.b32.cont [4/16] %v509, 128
        %523 = vxpose.xlu0.b32.cont [5/16] %v511, 128
        %524 = vxpose.xlu0.b32.cont [6/16] %v513, 128
        %525 = vxpose.xlu0.b32.cont [7/16] %v515, 128
        %526 = vxpose.xlu0.b32.cont [8/16] %v517, 128
        %527 = vxpose.xlu0.b32.cont [9/16] 0.0, 128
        %528 = vxpose.xlu0.b32.cont [10/16] 0.0, 128
        %529 = vxpose.xlu0.b32.cont [11/16] 0.0, 128
        %530 = vxpose.xlu0.b32.cont [12/16] 0.0, 128
        %531 = vxpose.xlu0.b32.cont [13/16] 0.0, 128
        %532 = vxpose.xlu0.b32.cont [14/16] 0.0, 128
        %533 = vxpose.xlu0.b32.cont [15/16] 0.0, 128
        %534 = vxpose.xlu0.b32.end [16/16] 0.0, 128
        %v535 = vpop.trf.xlu0
        %v536 = vpop.trf.xlu0
        %v537 = vpop.trf.xlu0
        %v538 = vpop.trf.xlu0
        %v539 = vpop.trf.xlu0
        %v540 = vpop.trf.xlu0
        %v541 = vpop.trf.xlu0
        %v542 = vpop.trf.xlu0
        %v543 = vpop.trf.xlu0
        %v544 = vpop.trf.xlu0
        %v545 = vpop.trf.xlu0
        %v546 = vpop.trf.xlu0
        %v547 = vpop.trf.xlu0
        %v548 = vpop.trf.xlu0
        %v549 = vpop.trf.xlu0
        %v550 = vpop.trf.xlu0
        %551 = vxpose.xlu0.b32.start [1/16] %v504, 128
        %552 = vxpose.xlu0.b32.cont [2/16] %v506, 128
        %553 = vxpose.xlu0.b32.cont [3/16] %v508, 128
        %554 = vxpose.xlu0.b32.cont [4/16] %v510, 128
        %555 = vxpose.xlu0.b32.cont [5/16] %v512, 128
        %556 = vxpose.xlu0.b32.cont [6/16] %v514, 128
        %557 = vxpose.xlu0.b32.cont [7/16] %v516, 128
        %558 = vxpose.xlu0.b32.cont [8/16] %v518, 128
        %559 = vxpose.xlu0.b32.cont [9/16] 0.0, 128
        %560 = vxpose.xlu0.b32.cont [10/16] 0.0, 128
        %561 = vxpose.xlu0.b32.cont [11/16] 0.0, 128
        %562 = vxpose.xlu0.b32.cont [12/16] 0.0, 128
        %563 = vxpose.xlu0.b32.cont [13/16] 0.0, 128
        %564 = vxpose.xlu0.b32.cont [14/16] 0.0, 128
        %565 = vxpose.xlu0.b32.cont [15/16] 0.0, 128
        %566 = vxpose.xlu0.b32.end [16/16] 0.0, 128
        %v567 = vpop.trf.xlu0
        %v568 = vpop.trf.xlu0
        %v569 = vpop.trf.xlu0
        %v570 = vpop.trf.xlu0
        %v571 = vpop.trf.xlu0
        %v572 = vpop.trf.xlu0
        %v573 = vpop.trf.xlu0
        %v574 = vpop.trf.xlu0
        %v575 = vpop.trf.xlu0
        %v576 = vpop.trf.xlu0
        %v577 = vpop.trf.xlu0
        %v578 = vpop.trf.xlu0
        %v579 = vpop.trf.xlu0
        %v580 = vpop.trf.xlu0
        %v581 = vpop.trf.xlu0
        %v582 = vpop.trf.xlu0
        %vm583 = vcmask 523264
        %v584 = vsel %vm583, %v535, 0.0
        %585 = vadd.xlane.f32.xlu0 %v584
        %v586 = vpop.xlane.xlu0 %585
        %v587 = vsel %vm583, %v536, 0.0
        %588 = vadd.xlane.f32.xlu0 %v587
        %v589 = vpop.xlane.xlu0 %588
        %v590 = vsel %vm583, %v537, 0.0
        %591 = vadd.xlane.f32.xlu0 %v590
        %v592 = vpop.xlane.xlu0 %591
        %v593 = vsel %vm583, %v538, 0.0
        %594 = vadd.xlane.f32.xlu0 %v593
        %v595 = vpop.xlane.xlu0 %594
        %v596 = vsel %vm583, %v539, 0.0
        %597 = vadd.xlane.f32.xlu0 %v596
        %v598 = vpop.xlane.xlu0 %597
        %v599 = vsel %vm583, %v540, 0.0
        %600 = vadd.xlane.f32.xlu0 %v599
        %v601 = vpop.xlane.xlu0 %600
        %v602 = vsel %vm583, %v541, 0.0
        %603 = vadd.xlane.f32.xlu0 %v602
        %v604 = vpop.xlane.xlu0 %603
        %v605 = vsel %vm583, %v542, 0.0
        %606 = vadd.xlane.f32.xlu0 %v605
        %v607 = vpop.xlane.xlu0 %606
        %v608 = vsel %vm583, %v543, 0.0
        %609 = vadd.xlane.f32.xlu0 %v608
        %v610 = vpop.xlane.xlu0 %609
        %v611 = vsel %vm583, %v544, 0.0
        %612 = vadd.xlane.f32.xlu0 %v611
        %v613 = vpop.xlane.xlu0 %612
        %v614 = vsel %vm583, %v545, 0.0
        %615 = vadd.xlane.f32.xlu0 %v614
        %v616 = vpop.xlane.xlu0 %615
        %v617 = vsel %vm583, %v546, 0.0
        %618 = vadd.xlane.f32.xlu0 %v617
        %v619 = vpop.xlane.xlu0 %618
        %v620 = vsel %vm583, %v547, 0.0
        %621 = vadd.xlane.f32.xlu0 %v620
        %v622 = vpop.xlane.xlu0 %621
        %v623 = vsel %vm583, %v548, 0.0
        %624 = vadd.xlane.f32.xlu0 %v623
        %v625 = vpop.xlane.xlu0 %624
        %v626 = vsel %vm583, %v549, 0.0
        %627 = vadd.xlane.f32.xlu0 %v626
        %v628 = vpop.xlane.xlu0 %627
        %v629 = vsel %vm583, %v550, 0.0
        %630 = vadd.xlane.f32.xlu0 %v629
        %v631 = vpop.xlane.xlu0 %630
        %v632 = vsel %vm583, %v567, 0.0
        %633 = vadd.xlane.f32.xlu0 %v632
        %v634 = vpop.xlane.xlu0 %633
        %v635 = vsel %vm583, %v568, 0.0
        %636 = vadd.xlane.f32.xlu0 %v635
        %v637 = vpop.xlane.xlu0 %636
        %v638 = vsel %vm583, %v569, 0.0
        %639 = vadd.xlane.f32.xlu0 %v638
        %v640 = vpop.xlane.xlu0 %639
        %v641 = vsel %vm583, %v570, 0.0
        %642 = vadd.xlane.f32.xlu0 %v641
        %v643 = vpop.xlane.xlu0 %642
        %v644 = vsel %vm583, %v571, 0.0
        %645 = vadd.xlane.f32.xlu0 %v644
        %v646 = vpop.xlane.xlu0 %645
        %v647 = vsel %vm583, %v572, 0.0
        %648 = vadd.xlane.f32.xlu0 %v647
        %v649 = vpop.xlane.xlu0 %648
        %v650 = vsel %vm583, %v573, 0.0
        %651 = vadd.xlane.f32.xlu0 %v650
        %v652 = vpop.xlane.xlu0 %651
        %v653 = vsel %vm583, %v574, 0.0
        %654 = vadd.xlane.f32.xlu0 %v653
        %v655 = vpop.xlane.xlu0 %654
        %v656 = vsel %vm583, %v575, 0.0
        %657 = vadd.xlane.f32.xlu0 %v656
        %v658 = vpop.xlane.xlu0 %657
        %v659 = vsel %vm583, %v576, 0.0
        %660 = vadd.xlane.f32.xlu0 %v659
        %v661 = vpop.xlane.xlu0 %660
        %v662 = vsel %vm583, %v577, 0.0
        %663 = vadd.xlane.f32.xlu0 %v662
        %v664 = vpop.xlane.xlu0 %663
        %v665 = vsel %vm583, %v578, 0.0
        %666 = vadd.xlane.f32.xlu0 %v665
        %v667 = vpop.xlane.xlu0 %666
        %v668 = vsel %vm583, %v579, 0.0
        %669 = vadd.xlane.f32.xlu0 %v668
        %v670 = vpop.xlane.xlu0 %669
        %v671 = vsel %vm583, %v580, 0.0
        %672 = vadd.xlane.f32.xlu0 %v671
        %v673 = vpop.xlane.xlu0 %672
        %v674 = vsel %vm583, %v581, 0.0
        %675 = vadd.xlane.f32.xlu0 %v674
        %v676 = vpop.xlane.xlu0 %675
        %v677 = vsel %vm583, %v582, 0.0
        %678 = vadd.xlane.f32.xlu0 %v677
        %v679 = vpop.xlane.xlu0 %678
        %v680 = vrcp.pop 64.0
        %v681 = vmul.f32 %v586, %v680
        %v682 = vmul.f32 %v589, %v680
        %v683 = vmul.f32 %v592, %v680
        %v684 = vmul.f32 %v595, %v680
        %v685 = vmul.f32 %v598, %v680
        %v686 = vmul.f32 %v601, %v680
        %v687 = vmul.f32 %v604, %v680
        %v688 = vmul.f32 %v607, %v680
        %v689 = vmul.f32 %v610, %v680
        %v690 = vmul.f32 %v613, %v680
        %v691 = vmul.f32 %v616, %v680
        %v692 = vmul.f32 %v619, %v680
        %v693 = vmul.f32 %v622, %v680
        %v694 = vmul.f32 %v625, %v680
        %v695 = vmul.f32 %v628, %v680
        %v696 = vmul.f32 %v631, %v680
        %v697 = vmul.f32 %v634, %v680
        %v698 = vmul.f32 %v637, %v680
        %v699 = vmul.f32 %v640, %v680
        %v700 = vmul.f32 %v643, %v680
        %v701 = vmul.f32 %v646, %v680
        %v702 = vmul.f32 %v649, %v680
        %v703 = vmul.f32 %v652, %v680
        %v704 = vmul.f32 %v655, %v680
        %v705 = vmul.f32 %v658, %v680
        %v706 = vmul.f32 %v661, %v680
        %v707 = vmul.f32 %v664, %v680
        %v708 = vmul.f32 %v667, %v680
        %v709 = vmul.f32 %v670, %v680
        %v710 = vmul.f32 %v673, %v680
        %v711 = vmul.f32 %v676, %v680
        %v712 = vmul.f32 %v679, %v680
        %v713 = vsub.f32 %v535, %v681
        %v714 = vsub.f32 %v536, %v682
        %v715 = vsub.f32 %v537, %v683
        %v716 = vsub.f32 %v538, %v684
        %v717 = vsub.f32 %v539, %v685
        %v718 = vsub.f32 %v540, %v686
        %v719 = vsub.f32 %v541, %v687
        %v720 = vsub.f32 %v542, %v688
        %v721 = vsub.f32 %v543, %v689
        %v722 = vsub.f32 %v544, %v690
        %v723 = vsub.f32 %v545, %v691
        %v724 = vsub.f32 %v546, %v692
        %v725 = vsub.f32 %v547, %v693
        %v726 = vsub.f32 %v548, %v694
        %v727 = vsub.f32 %v549, %v695
        %v728 = vsub.f32 %v550, %v696
        %v729 = vsub.f32 %v567, %v697
        %v730 = vsub.f32 %v568, %v698
        %v731 = vsub.f32 %v569, %v699
        %v732 = vsub.f32 %v570, %v700
        %v733 = vsub.f32 %v571, %v701
        %v734 = vsub.f32 %v572, %v702
        %v735 = vsub.f32 %v573, %v703
        %v736 = vsub.f32 %v574, %v704
        %v737 = vsub.f32 %v575, %v705
        %v738 = vsub.f32 %v576, %v706
        %v739 = vsub.f32 %v577, %v707
        %v740 = vsub.f32 %v578, %v708
        %v741 = vsub.f32 %v579, %v709
        %v742 = vsub.f32 %v580, %v710
        %v743 = vsub.f32 %v581, %v711
        %v744 = vsub.f32 %v582, %v712
        %v745 = vmul.f32 %v713, %v713
        %v746 = vmul.f32 %v714, %v714
        %v747 = vmul.f32 %v715, %v715
        %v748 = vmul.f32 %v716, %v716
        %v749 = vmul.f32 %v717, %v717
        %v750 = vmul.f32 %v718, %v718
        %v751 = vmul.f32 %v719, %v719
        %v752 = vmul.f32 %v720, %v720
        %v753 = vmul.f32 %v721, %v721
        %v754 = vmul.f32 %v722, %v722
        %v755 = vmul.f32 %v723, %v723
        %v756 = vmul.f32 %v724, %v724
        %v757 = vmul.f32 %v725, %v725
        %v758 = vmul.f32 %v726, %v726
        %v759 = vmul.f32 %v727, %v727
        %v760 = vmul.f32 %v728, %v728
        %v761 = vmul.f32 %v729, %v729
        %v762 = vmul.f32 %v730, %v730
        %v763 = vmul.f32 %v731, %v731
        %v764 = vmul.f32 %v732, %v732
        %v765 = vmul.f32 %v733, %v733
        %v766 = vmul.f32 %v734, %v734
        %v767 = vmul.f32 %v735, %v735
        %v768 = vmul.f32 %v736, %v736
        %v769 = vmul.f32 %v737, %v737
        %v770 = vmul.f32 %v738, %v738
        %v771 = vmul.f32 %v739, %v739
        %v772 = vmul.f32 %v740, %v740
        %v773 = vmul.f32 %v741, %v741
        %v774 = vmul.f32 %v742, %v742
        %v775 = vmul.f32 %v743, %v743
        %v776 = vmul.f32 %v744, %v744
        %v777 = vsel %vm583, %v745, 0.0
        %778 = vadd.xlane.f32.xlu0 %v777
        %v779 = vpop.xlane.xlu0 %778
        %v780 = vsel %vm583, %v746, 0.0
        %781 = vadd.xlane.f32.xlu0 %v780
        %v782 = vpop.xlane.xlu0 %781
        %v783 = vsel %vm583, %v747, 0.0
        %784 = vadd.xlane.f32.xlu0 %v783
        %v785 = vpop.xlane.xlu0 %784
        %v786 = vsel %vm583, %v748, 0.0
        %787 = vadd.xlane.f32.xlu0 %v786
        %v788 = vpop.xlane.xlu0 %787
        %v789 = vsel %vm583, %v749, 0.0
        %790 = vadd.xlane.f32.xlu0 %v789
        %v791 = vpop.xlane.xlu0 %790
        %v792 = vsel %vm583, %v750, 0.0
        %793 = vadd.xlane.f32.xlu0 %v792
        %v794 = vpop.xlane.xlu0 %793
        %v795 = vsel %vm583, %v751, 0.0
        %796 = vadd.xlane.f32.xlu0 %v795
        %v797 = vpop.xlane.xlu0 %796
        %v798 = vsel %vm583, %v752, 0.0
        %799 = vadd.xlane.f32.xlu0 %v798
        %v800 = vpop.xlane.xlu0 %799
        %v801 = vsel %vm583, %v753, 0.0
        %802 = vadd.xlane.f32.xlu0 %v801
        %v803 = vpop.xlane.xlu0 %802
        %v804 = vsel %vm583, %v754, 0.0
        %805 = vadd.xlane.f32.xlu0 %v804
        %v806 = vpop.xlane.xlu0 %805
        %v807 = vsel %vm583, %v755, 0.0
        %808 = vadd.xlane.f32.xlu0 %v807
        %v809 = vpop.xlane.xlu0 %808
        %v810 = vsel %vm583, %v756, 0.0
        %811 = vadd.xlane.f32.xlu0 %v810
        %v812 = vpop.xlane.xlu0 %811
        %v813 = vsel %vm583, %v757, 0.0
        %814 = vadd.xlane.f32.xlu0 %v813
        %v815 = vpop.xlane.xlu0 %814
        %v816 = vsel %vm583, %v758, 0.0
        %817 = vadd.xlane.f32.xlu0 %v816
        %v818 = vpop.xlane.xlu0 %817
        %v819 = vsel %vm583, %v759, 0.0
        %820 = vadd.xlane.f32.xlu0 %v819
        %v821 = vpop.xlane.xlu0 %820
        %v822 = vsel %vm583, %v760, 0.0
        %823 = vadd.xlane.f32.xlu0 %v822
        %v824 = vpop.xlane.xlu0 %823
        %v825 = vsel %vm583, %v761, 0.0
        %826 = vadd.xlane.f32.xlu0 %v825
        %v827 = vpop.xlane.xlu0 %826
        %v828 = vsel %vm583, %v762, 0.0
        %829 = vadd.xlane.f32.xlu0 %v828
        %v830 = vpop.xlane.xlu0 %829
        %v831 = vsel %vm583, %v763, 0.0
        %832 = vadd.xlane.f32.xlu0 %v831
        %v833 = vpop.xlane.xlu0 %832
        %v834 = vsel %vm583, %v764, 0.0
        %835 = vadd.xlane.f32.xlu0 %v834
        %v836 = vpop.xlane.xlu0 %835
        %v837 = vsel %vm583, %v765, 0.0
        %838 = vadd.xlane.f32.xlu0 %v837
        %v839 = vpop.xlane.xlu0 %838
        %v840 = vsel %vm583, %v766, 0.0
        %841 = vadd.xlane.f32.xlu0 %v840
        %v842 = vpop.xlane.xlu0 %841
        %v843 = vsel %vm583, %v767, 0.0
        %844 = vadd.xlane.f32.xlu0 %v843
        %v845 = vpop.xlane.xlu0 %844
        %v846 = vsel %vm583, %v768, 0.0
        %847 = vadd.xlane.f32.xlu0 %v846
        %v848 = vpop.xlane.xlu0 %847
        %v849 = vsel %vm583, %v769, 0.0
        %850 = vadd.xlane.f32.xlu0 %v849
        %v851 = vpop.xlane.xlu0 %850
        %v852 = vsel %vm583, %v770, 0.0
        %853 = vadd.xlane.f32.xlu0 %v852
        %v854 = vpop.xlane.xlu0 %853
        %v855 = vsel %vm583, %v771, 0.0
        %856 = vadd.xlane.f32.xlu0 %v855
        %v857 = vpop.xlane.xlu0 %856
        %v858 = vsel %vm583, %v772, 0.0
        %859 = vadd.xlane.f32.xlu0 %v858
        %v860 = vpop.xlane.xlu0 %859
        %v861 = vsel %vm583, %v773, 0.0
        %862 = vadd.xlane.f32.xlu0 %v861
        %v863 = vpop.xlane.xlu0 %862
        %v864 = vsel %vm583, %v774, 0.0
        %865 = vadd.xlane.f32.xlu0 %v864
        %v866 = vpop.xlane.xlu0 %865
        %v867 = vsel %vm583, %v775, 0.0
        %868 = vadd.xlane.f32.xlu0 %v867
        %v869 = vpop.xlane.xlu0 %868
        %v870 = vsel %vm583, %v776, 0.0
        %871 = vadd.xlane.f32.xlu0 %v870
        %v872 = vpop.xlane.xlu0 %871
        %v873 = vmul.f32 %v779, %v680
        %v874 = vmul.f32 %v782, %v680
        %v875 = vmul.f32 %v785, %v680
        %v876 = vmul.f32 %v788, %v680
        %v877 = vmul.f32 %v791, %v680
        %v878 = vmul.f32 %v794, %v680
        %v879 = vmul.f32 %v797, %v680
        %v880 = vmul.f32 %v800, %v680
        %v881 = vmul.f32 %v803, %v680
        %v882 = vmul.f32 %v806, %v680
        %v883 = vmul.f32 %v809, %v680
        %v884 = vmul.f32 %v812, %v680
        %v885 = vmul.f32 %v815, %v680
        %v886 = vmul.f32 %v818, %v680
        %v887 = vmul.f32 %v821, %v680
        %v888 = vmul.f32 %v824, %v680
        %v889 = vmul.f32 %v827, %v680
        %v890 = vmul.f32 %v830, %v680
        %v891 = vmul.f32 %v833, %v680
        %v892 = vmul.f32 %v836, %v680
        %v893 = vmul.f32 %v839, %v680
        %v894 = vmul.f32 %v842, %v680
        %v895 = vmul.f32 %v845, %v680
        %v896 = vmul.f32 %v848, %v680
        %v897 = vmul.f32 %v851, %v680
        %v898 = vmul.f32 %v854, %v680
        %v899 = vmul.f32 %v857, %v680
        %v900 = vmul.f32 %v860, %v680
        %v901 = vmul.f32 %v863, %v680
        %v902 = vmul.f32 %v866, %v680
        %v903 = vmul.f32 %v869, %v680
        %v904 = vmul.f32 %v872, %v680
        %v905 = vadd.f32 %v873, 1e-06
        %v906 = vadd.f32 %v874, 1e-06
        %v907 = vadd.f32 %v875, 1e-06
        %v908 = vadd.f32 %v876, 1e-06
        %v909 = vadd.f32 %v877, 1e-06
        %v910 = vadd.f32 %v878, 1e-06
        %v911 = vadd.f32 %v879, 1e-06
        %v912 = vadd.f32 %v880, 1e-06
        %v913 = vadd.f32 %v881, 1e-06
        %v914 = vadd.f32 %v882, 1e-06
        %v915 = vadd.f32 %v883, 1e-06
        %v916 = vadd.f32 %v884, 1e-06
        %v917 = vadd.f32 %v885, 1e-06
        %v918 = vadd.f32 %v886, 1e-06
        %v919 = vadd.f32 %v887, 1e-06
        %v920 = vadd.f32 %v888, 1e-06
        %v921 = vadd.f32 %v889, 1e-06
        %v922 = vadd.f32 %v890, 1e-06
        %v923 = vadd.f32 %v891, 1e-06
        %v924 = vadd.f32 %v892, 1e-06
        %v925 = vadd.f32 %v893, 1e-06
        %v926 = vadd.f32 %v894, 1e-06
        %v927 = vadd.f32 %v895, 1e-06
        %v928 = vadd.f32 %v896, 1e-06
        %v929 = vadd.f32 %v897, 1e-06
        %v930 = vadd.f32 %v898, 1e-06
        %v931 = vadd.f32 %v899, 1e-06
        %v932 = vadd.f32 %v900, 1e-06
        %v933 = vadd.f32 %v901, 1e-06
        %v934 = vadd.f32 %v902, 1e-06
        %v935 = vadd.f32 %v903, 1e-06
        %v936 = vadd.f32 %v904, 1e-06
        %v937 = vrsqrt.pop %v905
        %v938 = vrsqrt.pop %v906
        %v939 = vrsqrt.pop %v907
        %v940 = vrsqrt.pop %v908
        %v941 = vrsqrt.pop %v909
        %v942 = vrsqrt.pop %v910
        %v943 = vrsqrt.pop %v911
        %v944 = vrsqrt.pop %v912
        %v945 = vrsqrt.pop %v913
        %v946 = vrsqrt.pop %v914
        %v947 = vrsqrt.pop %v915
        %v948 = vrsqrt.pop %v916
        %v949 = vrsqrt.pop %v917
        %v950 = vrsqrt.pop %v918
        %v951 = vrsqrt.pop %v919
        %v952 = vrsqrt.pop %v920
        %v953 = vrsqrt.pop %v921
        %v954 = vrsqrt.pop %v922
        %v955 = vrsqrt.pop %v923
        %v956 = vrsqrt.pop %v924
        %v957 = vrsqrt.pop %v925
        %v958 = vrsqrt.pop %v926
        %v959 = vrsqrt.pop %v927
        %v960 = vrsqrt.pop %v928
        %v961 = vrsqrt.pop %v929
        %v962 = vrsqrt.pop %v930
        %v963 = vrsqrt.pop %v931
        %v964 = vrsqrt.pop %v932
        %v965 = vrsqrt.pop %v933
        %v966 = vrsqrt.pop %v934
        %v967 = vrsqrt.pop %v935
        %v968 = vrsqrt.pop %v936
        %v969 = vmul.f32 %v713, %v937
        %v970 = vmul.f32 %v714, %v938
        %v971 = vmul.f32 %v715, %v939
        %v972 = vmul.f32 %v716, %v940
        %v973 = vmul.f32 %v717, %v941
        %v974 = vmul.f32 %v718, %v942
        %v975 = vmul.f32 %v719, %v943
        %v976 = vmul.f32 %v720, %v944
        %v977 = vmul.f32 %v721, %v945
        %v978 = vmul.f32 %v722, %v946
        %v979 = vmul.f32 %v723, %v947
        %v980 = vmul.f32 %v724, %v948
        %v981 = vmul.f32 %v725, %v949
        %v982 = vmul.f32 %v726, %v950
        %v983 = vmul.f32 %v727, %v951
        %v984 = vmul.f32 %v728, %v952
        %v985 = vmul.f32 %v729, %v953
        %v986 = vmul.f32 %v730, %v954
        %v987 = vmul.f32 %v731, %v955
        %v988 = vmul.f32 %v732, %v956
        %v989 = vmul.f32 %v733, %v957
        %v990 = vmul.f32 %v734, %v958
        %v991 = vmul.f32 %v735, %v959
        %v992 = vmul.f32 %v736, %v960
        %v993 = vmul.f32 %v737, %v961
        %v994 = vmul.f32 %v738, %v962
        %v995 = vmul.f32 %v739, %v963
        %v996 = vmul.f32 %v740, %v964
        %v997 = vmul.f32 %v741, %v965
        %v998 = vmul.f32 %v742, %v966
        %v999 = vmul.f32 %v743, %v967
        %v1000 = vmul.f32 %v744, %v968
        %v1001 = vld [vmem:[%s1] sm:$0x1]
        %v1003 = vlaneseq
        %v1004 = vshrl.u32 %v1003, 7
        %v1005 = vsub.s32 0, %v1004
        %v1006 = vrot.slane %v1001, %v1005
        %v1008 = vmul.f32 %v969, %v1006
        %v1009 = vmul.f32 %v970, %v1006
        %v1010 = vmul.f32 %v971, %v1006
        %v1011 = vmul.f32 %v972, %v1006
        %v1012 = vmul.f32 %v973, %v1006
        %v1013 = vmul.f32 %v974, %v1006
        %v1014 = vmul.f32 %v975, %v1006
        %v1015 = vmul.f32 %v976, %v1006
        %v1016 = vmul.f32 %v977, %v1006
        %v1017 = vmul.f32 %v978, %v1006
        %v1018 = vmul.f32 %v979, %v1006
        %v1019 = vmul.f32 %v980, %v1006
        %v1020 = vmul.f32 %v981, %v1006
        %v1021 = vmul.f32 %v982, %v1006
        %v1022 = vmul.f32 %v983, %v1006
        %v1023 = vmul.f32 %v984, %v1006
        %v1024 = vmul.f32 %v985, %v1006
        %v1025 = vmul.f32 %v986, %v1006
        %v1026 = vmul.f32 %v987, %v1006
        %v1027 = vmul.f32 %v988, %v1006
        %v1028 = vmul.f32 %v989, %v1006
        %v1029 = vmul.f32 %v990, %v1006
        %v1030 = vmul.f32 %v991, %v1006
        %v1031 = vmul.f32 %v992, %v1006
        %v1032 = vmul.f32 %v993, %v1006
        %v1033 = vmul.f32 %v994, %v1006
        %v1034 = vmul.f32 %v995, %v1006
        %v1035 = vmul.f32 %v996, %v1006
        %v1036 = vmul.f32 %v997, %v1006
        %v1037 = vmul.f32 %v998, %v1006
        %v1038 = vmul.f32 %v999, %v1006
        %v1039 = vmul.f32 %v1000, %v1006
        %v1040 = vld [vmem:[%s2] sm:$0x1]
        %v1042 = vlaneseq
        %v1043 = vshrl.u32 %v1042, 7
        %v1044 = vsub.s32 0, %v1043
        %v1045 = vrot.slane %v1040, %v1044
        %v1047 = vadd.f32 %v1008, %v1045
        %v1048 = vadd.f32 %v1009, %v1045
        %v1049 = vadd.f32 %v1010, %v1045
        %v1050 = vadd.f32 %v1011, %v1045
        %v1051 = vadd.f32 %v1012, %v1045
        %v1052 = vadd.f32 %v1013, %v1045
        %v1053 = vadd.f32 %v1014, %v1045
        %v1054 = vadd.f32 %v1015, %v1045
        %v1055 = vadd.f32 %v1016, %v1045
        %v1056 = vadd.f32 %v1017, %v1045
        %v1057 = vadd.f32 %v1018, %v1045
        %v1058 = vadd.f32 %v1019, %v1045
        %v1059 = vadd.f32 %v1020, %v1045
        %v1060 = vadd.f32 %v1021, %v1045
        %v1061 = vadd.f32 %v1022, %v1045
        %v1062 = vadd.f32 %v1023, %v1045
        %v1063 = vadd.f32 %v1024, %v1045
        %v1064 = vadd.f32 %v1025, %v1045
        %v1065 = vadd.f32 %v1026, %v1045
        %v1066 = vadd.f32 %v1027, %v1045
        %v1067 = vadd.f32 %v1028, %v1045
        %v1068 = vadd.f32 %v1029, %v1045
        %v1069 = vadd.f32 %v1030, %v1045
        %v1070 = vadd.f32 %v1031, %v1045
        %v1071 = vadd.f32 %v1032, %v1045
        %v1072 = vadd.f32 %v1033, %v1045
        %v1073 = vadd.f32 %v1034, %v1045
        %v1074 = vadd.f32 %v1035, %v1045
        %v1075 = vadd.f32 %v1036, %v1045
        %v1076 = vadd.f32 %v1037, %v1045
        %v1077 = vadd.f32 %v1038, %v1045
        %v1078 = vadd.f32 %v1039, %v1045
        %v1079 = vld [vmem:[%s4] sm:$0xff]
        %v1080 = vld [vmem:[%s4 + $0x8] sm:$0xff]
        %v1081 = vld [vmem:[%s4 + $0x10] sm:$0xff]
        %v1082 = vld [vmem:[%s4 + $0x18] sm:$0xff]
        %v1083 = vld [vmem:[%s4 + $0x20] sm:$0xff]
        %v1084 = vld [vmem:[%s4 + $0x28] sm:$0xff]
        %v1085 = vld [vmem:[%s4 + $0x30] sm:$0xff]
        %v1086 = vld [vmem:[%s4 + $0x38] sm:$0xff]
        %v1087 = vld [vmem:[%s5] sm:$0x1]
        %v1089 = vlaneseq
        %v1090 = vshrl.u32 %v1089, 7
        %v1091 = vsub.s32 0, %v1090
        %v1092 = vrot.slane %v1087, %v1091
        %v1095 = vsel %vm583, %v1047, 0
        %v1098 = vsel %vm583, %v1048, 0
        %v1101 = vsel %vm583, %v1049, 0
        %v1104 = vsel %vm583, %v1050, 0
        %v1107 = vsel %vm583, %v1051, 0
        %v1110 = vsel %vm583, %v1052, 0
        %v1113 = vsel %vm583, %v1053, 0
        %v1116 = vsel %vm583, %v1054, 0
        %v1119 = vsel %vm583, %v1055, 0
        %v1122 = vsel %vm583, %v1056, 0
        %v1125 = vsel %vm583, %v1057, 0
        %v1128 = vsel %vm583, %v1058, 0
        %v1131 = vsel %vm583, %v1059, 0
        %v1134 = vsel %vm583, %v1060, 0
        %v1137 = vsel %vm583, %v1061, 0
        %v1140 = vsel %vm583, %v1062, 0
        %v1143 = vsel %vm583, %v1063, 0
        %v1146 = vsel %vm583, %v1064, 0
        %v1149 = vsel %vm583, %v1065, 0
        %v1152 = vsel %vm583, %v1066, 0
        %v1155 = vsel %vm583, %v1067, 0
        %v1158 = vsel %vm583, %v1068, 0
        %v1161 = vsel %vm583, %v1069, 0
        %v1164 = vsel %vm583, %v1070, 0
        %v1167 = vsel %vm583, %v1071, 0
        %v1170 = vsel %vm583, %v1072, 0
        %v1173 = vsel %vm583, %v1073, 0
        %v1176 = vsel %vm583, %v1074, 0
        %v1179 = vsel %vm583, %v1075, 0
        %v1182 = vsel %vm583, %v1076, 0
        %v1185 = vsel %vm583, %v1077, 0
        %v1188 = vsel %vm583, %v1078, 0
        %1190 = vmatprep.subr.mxu0 0.0
        %1191 = vmatpush1.msra.mxu0 %v1079
        %1192 = vmatprep.subr.mxu0 0.0
        %1193 = vmatpush1.msra.mxu0 %v1080
        %1194 = vmatprep.subr.mxu0 0.0
        %1195 = vmatpush1.msra.mxu0 %v1081
        %1196 = vmatprep.subr.mxu0 0.0
        %1197 = vmatpush1.msra.mxu0 %v1082
        %1198 = vmatprep.subr.mxu0 0.0
        %1199 = vmatpush1.msra.mxu0 %v1083
        %1200 = vmatprep.subr.mxu0 0.0
        %1201 = vmatpush1.msra.mxu0 %v1084
        %1202 = vmatprep.subr.mxu0 0.0
        %1203 = vmatpush1.msra.mxu0 %v1085
        %1204 = vmatprep.subr.mxu0 0.0
        %1205 = vmatpush1.msra.mxu0 %v1086
        %1206 = vmatprep.subr.mxu0 0.0
        %1207 = vmatpush1.msra.mxu0 0.0
        %1208 = vmatprep.subr.mxu0 0.0
        %1209 = vmatpush1.msra.mxu0 0.0
        %1210 = vmatprep.subr.mxu0 0.0
        %1211 = vmatpush1.msra.mxu0 0.0
        %1212 = vmatprep.subr.mxu0 0.0
        %1213 = vmatpush1.msra.mxu0 0.0
        %1214 = vmatprep.subr.mxu0 0.0
        %1215 = vmatpush1.msra.mxu0 0.0
        %1216 = vmatprep.subr.mxu0 0.0
        %1217 = vmatpush1.msra.mxu0 0.0
        %1218 = vmatprep.subr.mxu0 0.0
        %1219 = vmatpush1.msra.mxu0 0.0
        %1220 = vmatprep.subr.mxu0 0.0
        %1221 = vmatpush1.msra.mxu0 0.0
        %1222 = vmatprep.subr.mxu0 0.0
        %1223 = vmatpush1.msra.mxu0 0.0
        %1224 = vmatprep.subr.mxu0 0.0
        %1225 = vmatpush1.msra.mxu0 0.0
        %1226 = vmatprep.subr.mxu0 0.0
        %1227 = vmatpush1.msra.mxu0 0.0
        %1228 = vmatprep.subr.mxu0 0.0
        %1229 = vmatpush1.msra.mxu0 0.0
        %1230 = vmatprep.subr.mxu0 0.0
        %1231 = vmatpush1.msra.mxu0 0.0
        %1232 = vmatprep.subr.mxu0 0.0
        %1233 = vmatpush1.msra.mxu0 0.0
        %1234 = vmatprep.subr.mxu0 0.0
        %1235 = vmatpush1.msra.mxu0 0.0
        %1236 = vmatprep.subr.mxu0 0.0
        %1237 = vmatpush1.msra.mxu0 0.0
        %1238 = vmatprep.subr.mxu0 0.0
        %1239 = vmatpush1.msra.mxu0 0.0
        %1240 = vmatprep.subr.mxu0 0.0
        %1241 = vmatpush1.msra.mxu0 0.0
        %1242 = vmatprep.subr.mxu0 0.0
        %1243 = vmatpush1.msra.mxu0 0.0
        %1244 = vmatprep.subr.mxu0 0.0
        %1245 = vmatpush1.msra.mxu0 0.0
        %1246 = vmatprep.subr.mxu0 0.0
        %1247 = vmatpush1.msra.mxu0 0.0
        %1248 = vmatprep.subr.mxu0 0.0
        %1249 = vmatpush1.msra.mxu0 0.0
        %1250 = vmatprep.subr.mxu0 0.0
        %1251 = vmatpush1.msra.mxu0 0.0
        %1252 = vmatprep.subr.mxu0 0.0
        %1253 = vmatpush1.msra.mxu0 0.0
        %1254 = vmatprep.mubr.f32.mxu0 0.0
        %1255 = vmatmul.mubr.f32.gmra.mrb[0].mxu0 %v1095
        %v1256 = vpop.f32.mrb[0].mxu0
        %v1257 = vadd.f32 %v1092, %v1256
        %v1258 = vpop.f32.mrb[0].mxu0
        %1259 = vmatprep.mubr.f32.mxu0 0.0
        %1260 = vmatmul.mubr.f32.gmra.mrb[0].mxu0 %v1098
        %v1261 = vpop.f32.mrb[0].mxu0
        %v1262 = vadd.f32 %v1092, %v1261
        %v1263 = vpop.f32.mrb[0].mxu0
        %1264 = vmatprep.mubr.f32.mxu0 0.0
        %1265 = vmatmul.mubr.f32.gmra.mrb[0].mxu0 %v1101
        %v1266 = vpop.f32.mrb[0].mxu0
        %v1267 = vadd.f32 %v1092, %v1266
        %v1268 = vpop.f32.mrb[0].mxu0
        %1269 = vmatprep.mubr.f32.mxu0 0.0
        %1270 = vmatmul.mubr.f32.gmra.mrb[0].mxu0 %v1104
        %v1271 = vpop.f32.mrb[0].mxu0
        %v1272 = vadd.f32 %v1092, %v1271
        %v1273 = vpop.f32.mrb[0].mxu0
        %1274 = vmatprep.mubr.f32.mxu0 0.0
        %1275 = vmatmul.mubr.f32.gmra.mrb[0].mxu0 %v1107
        %v1276 = vpop.f32.mrb[0].mxu0
        %v1277 = vadd.f32 %v1092, %v1276
        %v1278 = vpop.f32.mrb[0].mxu0
        %1279 = vmatprep.mubr.f32.mxu0 0.0
        %1280 = vmatmul.mubr.f32.gmra.mrb[0].mxu0 %v1110
        %v1281 = vpop.f32.mrb[0].mxu0
        %v1282 = vadd.f32 %v1092, %v1281
        %v1283 = vpop.f32.mrb[0].mxu0
        %1284 = vmatprep.mubr.f32.mxu0 0.0
        %1285 = vmatmul.mubr.f32.gmra.mrb[0].mxu0 %v1113
        %v1286 = vpop.f32.mrb[0].mxu0
        %v1287 = vadd.f32 %v1092, %v1286
        %v1288 = vpop.f32.mrb[0].mxu0
        %1289 = vmatprep.mubr.f32.mxu0 0.0
        %1290 = vmatmul.mubr.f32.gmra.mrb[0].mxu0 %v1116
        %v1291 = vpop.f32.mrb[0].mxu0
        %v1292 = vadd.f32 %v1092, %v1291
        %v1293 = vpop.f32.mrb[0].mxu0
        %1294 = vmatprep.mubr.f32.mxu0 0.0
        %1295 = vmatmul.mubr.f32.gmra.mrb[0].mxu0 %v1119
        %v1296 = vpop.f32.mrb[0].mxu0
        %v1297 = vadd.f32 %v1092, %v1296
        %v1298 = vpop.f32.mrb[0].mxu0
        %1299 = vmatprep.mubr.f32.mxu0 0.0
        %1300 = vmatmul.mubr.f32.gmra.mrb[0].mxu0 %v1122
        %v1301 = vpop.f32.mrb[0].mxu0
        %v1302 = vadd.f32 %v1092, %v1301
        %v1303 = vpop.f32.mrb[0].mxu0
        %1304 = vmatprep.mubr.f32.mxu0 0.0
        %1305 = vmatmul.mubr.f32.gmra.mrb[0].mxu0 %v1125
        %v1306 = vpop.f32.mrb[0].mxu0
        %v1307 = vadd.f32 %v1092, %v1306
        %v1308 = vpop.f32.mrb[0].mxu0
        %1309 = vmatprep.mubr.f32.mxu0 0.0
        %1310 = vmatmul.mubr.f32.gmra.mrb[0].mxu0 %v1128
        %v1311 = vpop.f32.mrb[0].mxu0
        %v1312 = vadd.f32 %v1092, %v1311
        %v1313 = vpop.f32.mrb[0].mxu0
        %1314 = vmatprep.mubr.f32.mxu0 0.0
        %1315 = vmatmul.mubr.f32.gmra.mrb[0].mxu0 %v1131
        %v1316 = vpop.f32.mrb[0].mxu0
        %v1317 = vadd.f32 %v1092, %v1316
        %v1318 = vpop.f32.mrb[0].mxu0
        %1319 = vmatprep.mubr.f32.mxu0 0.0
        %1320 = vmatmul.mubr.f32.gmra.mrb[0].mxu0 %v1134
        %v1321 = vpop.f32.mrb[0].mxu0
        %v1322 = vadd.f32 %v1092, %v1321
        %v1323 = vpop.f32.mrb[0].mxu0
        %1324 = vmatprep.mubr.f32.mxu0 0.0
        %1325 = vmatmul.mubr.f32.gmra.mrb[0].mxu0 %v1137
        %v1326 = vpop.f32.mrb[0].mxu0
        %v1327 = vadd.f32 %v1092, %v1326
        %v1328 = vpop.f32.mrb[0].mxu0
        %1329 = vmatprep.mubr.f32.mxu0 0.0
        %1330 = vmatmul.mubr.f32.gmra.mrb[0].mxu0 %v1140
        %v1331 = vpop.f32.mrb[0].mxu0
        %v1332 = vadd.f32 %v1092, %v1331
        %v1333 = vpop.f32.mrb[0].mxu0
        %1334 = vmatprep.mubr.f32.mxu0 0.0
        %1335 = vmatmul.mubr.f32.gmra.mrb[0].mxu0 %v1143
        %v1336 = vpop.f32.mrb[0].mxu0
        %v1337 = vadd.f32 %v1092, %v1336
        %v1338 = vpop.f32.mrb[0].mxu0
        %1339 = vmatprep.mubr.f32.mxu0 0.0
        %1340 = vmatmul.mubr.f32.gmra.mrb[0].mxu0 %v1146
        %v1341 = vpop.f32.mrb[0].mxu0
        %v1342 = vadd.f32 %v1092, %v1341
        %v1343 = vpop.f32.mrb[0].mxu0
        %1344 = vmatprep.mubr.f32.mxu0 0.0
        %1345 = vmatmul.mubr.f32.gmra.mrb[0].mxu0 %v1149
        %v1346 = vpop.f32.mrb[0].mxu0
        %v1347 = vadd.f32 %v1092, %v1346
        %v1348 = vpop.f32.mrb[0].mxu0
        %1349 = vmatprep.mubr.f32.mxu0 0.0
        %1350 = vmatmul.mubr.f32.gmra.mrb[0].mxu0 %v1152
        %v1351 = vpop.f32.mrb[0].mxu0
        %v1352 = vadd.f32 %v1092, %v1351
        %v1353 = vpop.f32.mrb[0].mxu0
        %1354 = vmatprep.mubr.f32.mxu0 0.0
        %1355 = vmatmul.mubr.f32.gmra.mrb[0].mxu0 %v1155
        %v1356 = vpop.f32.mrb[0].mxu0
        %v1357 = vadd.f32 %v1092, %v1356
        %v1358 = vpop.f32.mrb[0].mxu0
        %1359 = vmatprep.mubr.f32.mxu0 0.0
        %1360 = vmatmul.mubr.f32.gmra.mrb[0].mxu0 %v1158
        %v1361 = vpop.f32.mrb[0].mxu0
        %v1362 = vadd.f32 %v1092, %v1361
        %v1363 = vpop.f32.mrb[0].mxu0
        %1364 = vmatprep.mubr.f32.mxu0 0.0
        %1365 = vmatmul.mubr.f32.gmra.mrb[0].mxu0 %v1161
        %v1366 = vpop.f32.mrb[0].mxu0
        %v1367 = vadd.f32 %v1092, %v1366
        %v1368 = vpop.f32.mrb[0].mxu0
        %1369 = vmatprep.mubr.f32.mxu0 0.0
        %1370 = vmatmul.mubr.f32.gmra.mrb[0].mxu0 %v1164
        %v1371 = vpop.f32.mrb[0].mxu0
        %v1372 = vadd.f32 %v1092, %v1371
        %v1373 = vpop.f32.mrb[0].mxu0
        %1374 = vmatprep.mubr.f32.mxu0 0.0
        %1375 = vmatmul.mubr.f32.gmra.mrb[0].mxu0 %v1167
        %v1376 = vpop.f32.mrb[0].mxu0
        %v1377 = vadd.f32 %v1092, %v1376
        %v1378 = vpop.f32.mrb[0].mxu0
        %1379 = vmatprep.mubr.f32.mxu0 0.0
        %1380 = vmatmul.mubr.f32.gmra.mrb[0].mxu0 %v1170
        %v1381 = vpop.f32.mrb[0].mxu0
        %v1382 = vadd.f32 %v1092, %v1381
        %v1383 = vpop.f32.mrb[0].mxu0
        %1384 = vmatprep.mubr.f32.mxu0 0.0
        %1385 = vmatmul.mubr.f32.gmra.mrb[0].mxu0 %v1173
        %v1386 = vpop.f32.mrb[0].mxu0
        %v1387 = vadd.f32 %v1092, %v1386
        %v1388 = vpop.f32.mrb[0].mxu0
        %1389 = vmatprep.mubr.f32.mxu0 0.0
        %1390 = vmatmul.mubr.f32.gmra.mrb[0].mxu0 %v1176
        %v1391 = vpop.f32.mrb[0].mxu0
        %v1392 = vadd.f32 %v1092, %v1391
        %v1393 = vpop.f32.mrb[0].mxu0
        %1394 = vmatprep.mubr.f32.mxu0 0.0
        %1395 = vmatmul.mubr.f32.gmra.mrb[0].mxu0 %v1179
        %v1396 = vpop.f32.mrb[0].mxu0
        %v1397 = vadd.f32 %v1092, %v1396
        %v1398 = vpop.f32.mrb[0].mxu0
        %1399 = vmatprep.mubr.f32.mxu0 0.0
        %1400 = vmatmul.mubr.f32.gmra.mrb[0].mxu0 %v1182
        %v1401 = vpop.f32.mrb[0].mxu0
        %v1402 = vadd.f32 %v1092, %v1401
        %v1403 = vpop.f32.mrb[0].mxu0
        %1404 = vmatprep.mubr.f32.mxu0 0.0
        %1405 = vmatmul.mubr.f32.gmra.mrb[0].mxu0 %v1185
        %v1406 = vpop.f32.mrb[0].mxu0
        %v1407 = vadd.f32 %v1092, %v1406
        %v1408 = vpop.f32.mrb[0].mxu0
        %1409 = vmatprep.mubr.f32.mxu0 0.0
        %1410 = vmatmul.mubr.f32.gmra.mrb[0].mxu0 %v1188
        %v1411 = vpop.f32.mrb[0].mxu0
        %v1412 = vadd.f32 %v1092, %v1411
        %v1413 = vpop.f32.mrb[0].mxu0
        %1414 = vdwg.mxu0
        %v1415 = vld [vmem:[#allocation7] sm:$0xff]
        %v1416 = vld [vmem:[#allocation7 + $0x8] sm:$0x1]
        %v1417 = vlaneseq
        %v1418 = vshrl.u32 %v1417, 7
        %v1419 = vsub.s32 4, %v1418
        %v1420 = vrot.slane %v1415, %v1419
        %v1421 = vmul.f32 %v1257, %v1420
        %v1422 = vmul.f32 %v1262, %v1420
        %v1423 = vmul.f32 %v1267, %v1420
        %v1424 = vmul.f32 %v1272, %v1420
        %v1425 = vmul.f32 %v1277, %v1420
        %v1426 = vmul.f32 %v1282, %v1420
        %v1427 = vmul.f32 %v1287, %v1420
        %v1428 = vmul.f32 %v1292, %v1420
        %v1429 = vmul.f32 %v1297, %v1420
        %v1430 = vmul.f32 %v1302, %v1420
        %v1431 = vmul.f32 %v1307, %v1420
        %v1432 = vmul.f32 %v1312, %v1420
        %v1433 = vmul.f32 %v1317, %v1420
        %v1434 = vmul.f32 %v1322, %v1420
        %v1435 = vmul.f32 %v1327, %v1420
        %v1436 = vmul.f32 %v1332, %v1420
        %v1437 = vmul.f32 %v1337, %v1420
        %v1438 = vmul.f32 %v1342, %v1420
        %v1439 = vmul.f32 %v1347, %v1420
        %v1440 = vmul.f32 %v1352, %v1420
        %v1441 = vmul.f32 %v1357, %v1420
        %v1442 = vmul.f32 %v1362, %v1420
        %v1443 = vmul.f32 %v1367, %v1420
        %v1444 = vmul.f32 %v1372, %v1420
        %v1445 = vmul.f32 %v1377, %v1420
        %v1446 = vmul.f32 %v1382, %v1420
        %v1447 = vmul.f32 %v1387, %v1420
        %v1448 = vmul.f32 %v1392, %v1420
        %v1449 = vmul.f32 %v1397, %v1420
        %v1450 = vmul.f32 %v1402, %v1420
        %v1451 = vmul.f32 %v1407, %v1420
        %v1452 = vmul.f32 %v1412, %v1420
        %1453 = vst.msk [vmem:[#allocation2] sm:$0xff] %vm583, %v1421
        %1454 = vst.msk [vmem:[#allocation2 + $0x8] sm:$0xff] %vm583, %v1422
        %1455 = vst.msk [vmem:[#allocation2 + $0x10] sm:$0xff] %vm583, %v1423
        %1456 = vst.msk [vmem:[#allocation2 + $0x18] sm:$0xff] %vm583, %v1424
        %1457 = vst.msk [vmem:[#allocation2 + $0x20] sm:$0xff] %vm583, %v1425
        %1458 = vst.msk [vmem:[#allocation2 + $0x28] sm:$0xff] %vm583, %v1426
        %1459 = vst.msk [vmem:[#allocation2 + $0x30] sm:$0xff] %vm583, %v1427
        %1460 = vst.msk [vmem:[#allocation2 + $0x38] sm:$0xff] %vm583, %v1428
        %1461 = vst.msk [vmem:[#allocation2 + $0x40] sm:$0xff] %vm583, %v1429
        %1462 = vst.msk [vmem:[#allocation2 + $0x48] sm:$0xff] %vm583, %v1430
        %1463 = vst.msk [vmem:[#allocation2 + $0x50] sm:$0xff] %vm583, %v1431
        %1464 = vst.msk [vmem:[#allocation2 + $0x58] sm:$0xff] %vm583, %v1432
        %1465 = vst.msk [vmem:[#allocation2 + $0x60] sm:$0xff] %vm583, %v1433
        %1466 = vst.msk [vmem:[#allocation2 + $0x68] sm:$0xff] %vm583, %v1434
        %1467 = vst.msk [vmem:[#allocation2 + $0x70] sm:$0xff] %vm583, %v1435
        %1468 = vst.msk [vmem:[#allocation2 + $0x78] sm:$0xff] %vm583, %v1436
        %1469 = vst.msk [vmem:[#allocation2 + $0x80] sm:$0xff] %vm583, %v1437
        %1470 = vst.msk [vmem:[#allocation2 + $0x88] sm:$0xff] %vm583, %v1438
        %1471 = vst.msk [vmem:[#allocation2 + $0x90] sm:$0xff] %vm583, %v1439
        %1472 = vst.msk [vmem:[#allocation2 + $0x98] sm:$0xff] %vm583, %v1440
        %1473 = vst.msk [vmem:[#allocation2 + $0xa0] sm:$0xff] %vm583, %v1441
        %1474 = vst.msk [vmem:[#allocation2 + $0xa8] sm:$0xff] %vm583, %v1442
        %1475 = vst.msk [vmem:[#allocation2 + $0xb0] sm:$0xff] %vm583, %v1443
        %1476 = vst.msk [vmem:[#allocation2 + $0xb8] sm:$0xff] %vm583, %v1444
        %1477 = vst.msk [vmem:[#allocation2 + $0xc0] sm:$0xff] %vm583, %v1445
        %1478 = vst.msk [vmem:[#allocation2 + $0xc8] sm:$0xff] %vm583, %v1446
        %1479 = vst.msk [vmem:[#allocation2 + $0xd0] sm:$0xff] %vm583, %v1447
        %1480 = vst.msk [vmem:[#allocation2 + $0xd8] sm:$0xff] %vm583, %v1448
        %1481 = vst.msk [vmem:[#allocation2 + $0xe0] sm:$0xff] %vm583, %v1449
        %1482 = vst.msk [vmem:[#allocation2 + $0xe8] sm:$0xff] %vm583, %v1450
        %1483 = vst.msk [vmem:[#allocation2 + $0xf0] sm:$0xff] %vm583, %v1451
        %1484 = vst.msk [vmem:[#allocation2 + $0xf8] sm:$0xff] %vm583, %v1452
        %s1485 = scalar_lea.vmem [#allocation2], 16
        %v1486 = vld [vmem:[%s1485 + $0x1] sm:$0xff]
        %v1487 = vld [vmem:[%s1485 + $0x9] sm:$0x7f]
        %v1488 = vld [vmem:[%s1485 + $0x11] sm:$0xff]
        %v1489 = vld [vmem:[%s1485 + $0x19] sm:$0x7f]
        %v1490 = vld [vmem:[%s1485 + $0x21] sm:$0xff]
        %v1491 = vld [vmem:[%s1485 + $0x29] sm:$0x7f]
        %v1492 = vld [vmem:[%s1485 + $0x31] sm:$0xff]
        %v1493 = vld [vmem:[%s1485 + $0x39] sm:$0x7f]
        %v1494 = vld [vmem:[%s1485 + $0x41] sm:$0xff]
        %v1495 = vld [vmem:[%s1485 + $0x49] sm:$0x7f]
        %v1496 = vld [vmem:[%s1485 + $0x51] sm:$0xff]
        %v1497 = vld [vmem:[%s1485 + $0x59] sm:$0x7f]
        %v1498 = vld [vmem:[%s1485 + $0x61] sm:$0xff]
        %v1499 = vld [vmem:[%s1485 + $0x69] sm:$0x7f]
        %v1500 = vld [vmem:[%s1485 + $0x71] sm:$0xff]
        %v1501 = vld [vmem:[%s1485 + $0x79] sm:$0x7f]
        %v1502 = vld [vmem:[%s1485 + $0x81] sm:$0xff]
        %v1503 = vld [vmem:[%s1485 + $0x89] sm:$0x7f]
        %v1504 = vld [vmem:[%s1485 + $0x91] sm:$0xff]
        %v1505 = vld [vmem:[%s1485 + $0x99] sm:$0x7f]
        %v1506 = vld [vmem:[%s1485 + $0xa1] sm:$0xff]
        %v1507 = vld [vmem:[%s1485 + $0xa9] sm:$0x7f]
        %v1508 = vld [vmem:[%s1485 + $0xb1] sm:$0xff]
        %v1509 = vld [vmem:[%s1485 + $0xb9] sm:$0x7f]
        %v1510 = vld [vmem:[%s1485 + $0xc1] sm:$0xff]
        %v1511 = vld [vmem:[%s1485 + $0xc9] sm:$0x7f]
        %v1512 = vld [vmem:[%s1485 + $0xd1] sm:$0xff]
        %v1513 = vld [vmem:[%s1485 + $0xd9] sm:$0x7f]
        %v1514 = vld [vmem:[%s1485 + $0xe1] sm:$0xff]
        %v1515 = vld [vmem:[%s1485 + $0xe9] sm:$0x7f]
        %v1516 = vlaneseq
        %v1517 = vshrl.u32 %v1516, 7
        %v1518 = vsub.s32 0, %v1517
        %v1519 = vrot.slane %v1415, %v1518
        %v1520 = vmul.f32 %v1257, %v1519
        %v1521 = vmul.f32 %v1262, %v1519
        %v1522 = vmul.f32 %v1267, %v1519
        %v1523 = vmul.f32 %v1272, %v1519
        %v1524 = vmul.f32 %v1277, %v1519
        %v1525 = vmul.f32 %v1282, %v1519
        %v1526 = vmul.f32 %v1287, %v1519
        %v1527 = vmul.f32 %v1292, %v1519
        %v1528 = vmul.f32 %v1297, %v1519
        %v1529 = vmul.f32 %v1302, %v1519
        %v1530 = vmul.f32 %v1307, %v1519
        %v1531 = vmul.f32 %v1312, %v1519
        %v1532 = vmul.f32 %v1317, %v1519
        %v1533 = vmul.f32 %v1322, %v1519
        %v1534 = vmul.f32 %v1327, %v1519
        %v1535 = vmul.f32 %v1332, %v1519
        %v1536 = vmul.f32 %v1337, %v1519
        %v1537 = vmul.f32 %v1342, %v1519
        %v1538 = vmul.f32 %v1347, %v1519
        %v1539 = vmul.f32 %v1352, %v1519
        %v1540 = vmul.f32 %v1357, %v1519
        %v1541 = vmul.f32 %v1362, %v1519
        %v1542 = vmul.f32 %v1367, %v1519
        %v1543 = vmul.f32 %v1372, %v1519
        %v1544 = vmul.f32 %v1377, %v1519
        %v1545 = vmul.f32 %v1382, %v1519
        %v1546 = vmul.f32 %v1387, %v1519
        %v1547 = vmul.f32 %v1392, %v1519
        %v1548 = vmul.f32 %v1397, %v1519
        %v1549 = vmul.f32 %v1402, %v1519
        %v1550 = vadd.f32 %v1486, %v1520
        %v1551 = vadd.f32 %v1487, %v1521
        %v1552 = vadd.f32 %v1488, %v1522
        %v1553 = vadd.f32 %v1489, %v1523
        %v1554 = vadd.f32 %v1490, %v1524
        %v1555 = vadd.f32 %v1491, %v1525
        %v1556 = vadd.f32 %v1492, %v1526
        %v1557 = vadd.f32 %v1493, %v1527
        %v1558 = vadd.f32 %v1494, %v1528
        %v1559 = vadd.f32 %v1495, %v1529
        %v1560 = vadd.f32 %v1496, %v1530
        %v1561 = vadd.f32 %v1497, %v1531
        %v1562 = vadd.f32 %v1498, %v1532
        %v1563 = vadd.f32 %v1499, %v1533
        %v1564 = vadd.f32 %v1500, %v1534
        %v1565 = vadd.f32 %v1501, %v1535
        %v1566 = vadd.f32 %v1502, %v1536
        %v1567 = vadd.f32 %v1503, %v1537
        %v1568 = vadd.f32 %v1504, %v1538
        %v1569 = vadd.f32 %v1505, %v1539
        %v1570 = vadd.f32 %v1506, %v1540
        %v1571 = vadd.f32 %v1507, %v1541
        %v1572 = vadd.f32 %v1508, %v1542
        %v1573 = vadd.f32 %v1509, %v1543
        %v1574 = vadd.f32 %v1510, %v1544
        %v1575 = vadd.f32 %v1511, %v1545
        %v1576 = vadd.f32 %v1512, %v1546
        %v1577 = vadd.f32 %v1513, %v1547
        %v1578 = vadd.f32 %v1514, %v1548
        %v1579 = vadd.f32 %v1515, %v1549
        %1580 = vst.msk [vmem:[%s1485 + $0x1] sm:$0xff] %vm583, %v1550
        %vm1581 = vcmask 522240
        %1582 = vst.msk [vmem:[%s1485 + $0x9] sm:$0x7f] %vm1581, %v1551
        %1583 = vst.msk [vmem:[%s1485 + $0x11] sm:$0xff] %vm583, %v1552
        %1584 = vst.msk [vmem:[%s1485 + $0x19] sm:$0x7f] %vm1581, %v1553
        %1585 = vst.msk [vmem:[%s1485 + $0x21] sm:$0xff] %vm583, %v1554
        %1586 = vst.msk [vmem:[%s1485 + $0x29] sm:$0x7f] %vm1581, %v1555
        %1587 = vst.msk [vmem:[%s1485 + $0x31] sm:$0xff] %vm583, %v1556
        %1588 = vst.msk [vmem:[%s1485 + $0x39] sm:$0x7f] %vm1581, %v1557
        %1589 = vst.msk [vmem:[%s1485 + $0x41] sm:$0xff] %vm583, %v1558
        %1590 = vst.msk [vmem:[%s1485 + $0x49] sm:$0x7f] %vm1581, %v1559
        %1591 = vst.msk [vmem:[%s1485 + $0x51] sm:$0xff] %vm583, %v1560
        %1592 = vst.msk [vmem:[%s1485 + $0x59] sm:$0x7f] %vm1581, %v1561
        %1593 = vst.msk [vmem:[%s1485 + $0x61] sm:$0xff] %vm583, %v1562
        %1594 = vst.msk [vmem:[%s1485 + $0x69] sm:$0x7f] %vm1581, %v1563
        %1595 = vst.msk [vmem:[%s1485 + $0x71] sm:$0xff] %vm583, %v1564
        %1596 = vst.msk [vmem:[%s1485 + $0x79] sm:$0x7f] %vm1581, %v1565
        %1597 = vst.msk [vmem:[%s1485 + $0x81] sm:$0xff] %vm583, %v1566
        %1598 = vst.msk [vmem:[%s1485 + $0x89] sm:$0x7f] %vm1581, %v1567
        %1599 = vst.msk [vmem:[%s1485 + $0x91] sm:$0xff] %vm583, %v1568
        %1600 = vst.msk [vmem:[%s1485 + $0x99] sm:$0x7f] %vm1581, %v1569
        %1601 = vst.msk [vmem:[%s1485 + $0xa1] sm:$0xff] %vm583, %v1570
        %1602 = vst.msk [vmem:[%s1485 + $0xa9] sm:$0x7f] %vm1581, %v1571
        %1603 = vst.msk [vmem:[%s1485 + $0xb1] sm:$0xff] %vm583, %v1572
        %1604 = vst.msk [vmem:[%s1485 + $0xb9] sm:$0x7f] %vm1581, %v1573
        %1605 = vst.msk [vmem:[%s1485 + $0xc1] sm:$0xff] %vm583, %v1574
        %1606 = vst.msk [vmem:[%s1485 + $0xc9] sm:$0x7f] %vm1581, %v1575
        %1607 = vst.msk [vmem:[%s1485 + $0xd1] sm:$0xff] %vm583, %v1576
        %1608 = vst.msk [vmem:[%s1485 + $0xd9] sm:$0x7f] %vm1581, %v1577
        %1609 = vst.msk [vmem:[%s1485 + $0xe1] sm:$0xff] %vm583, %v1578
        %1610 = vst.msk [vmem:[%s1485 + $0xe9] sm:$0x7f] %vm1581, %v1579
        %v1611 = vld [vmem:[%s1485] sm:$0xff]
        %v1612 = vld [vmem:[%s1485 + $0x8] sm:$0xff]
        %v1613 = vld [vmem:[%s1485 + $0x10] sm:$0xff]
        %v1614 = vld [vmem:[%s1485 + $0x18] sm:$0xff]
        %v1615 = vld [vmem:[%s1485 + $0x20] sm:$0xff]
        %v1616 = vld [vmem:[%s1485 + $0x28] sm:$0xff]
        %v1617 = vld [vmem:[%s1485 + $0x30] sm:$0xff]
        %v1618 = vld [vmem:[%s1485 + $0x38] sm:$0xff]
        %v1619 = vld [vmem:[%s1485 + $0x40] sm:$0xff]
        %v1620 = vld [vmem:[%s1485 + $0x48] sm:$0xff]
        %v1621 = vld [vmem:[%s1485 + $0x50] sm:$0xff]
        %v1622 = vld [vmem:[%s1485 + $0x58] sm:$0xff]
        %v1623 = vld [vmem:[%s1485 + $0x60] sm:$0xff]
        %v1624 = vld [vmem:[%s1485 + $0x68] sm:$0xff]
        %v1625 = vld [vmem:[%s1485 + $0x70] sm:$0xff]
        %v1626 = vld [vmem:[%s1485 + $0x78] sm:$0xff]
        %v1627 = vld [vmem:[%s1485 + $0x80] sm:$0xff]
        %v1628 = vld [vmem:[%s1485 + $0x88] sm:$0xff]
        %v1629 = vld [vmem:[%s1485 + $0x90] sm:$0xff]
        %v1630 = vld [vmem:[%s1485 + $0x98] sm:$0xff]
        %v1631 = vld [vmem:[%s1485 + $0xa0] sm:$0xff]
        %v1632 = vld [vmem:[%s1485 + $0xa8] sm:$0xff]
        %v1633 = vld [vmem:[%s1485 + $0xb0] sm:$0xff]
        %v1634 = vld [vmem:[%s1485 + $0xb8] sm:$0xff]
        %v1635 = vld [vmem:[%s1485 + $0xc0] sm:$0xff]
        %v1636 = vld [vmem:[%s1485 + $0xc8] sm:$0xff]
        %v1637 = vld [vmem:[%s1485 + $0xd0] sm:$0xff]
        %v1638 = vld [vmem:[%s1485 + $0xd8] sm:$0xff]
        %v1639 = vld [vmem:[%s1485 + $0xe0] sm:$0xff]
        %v1640 = vld [vmem:[%s1485 + $0xe8] sm:$0xff]
        %v1641 = vlaneseq
        %v1642 = vshrl.u32 %v1641, 7
        %v1643 = vsub.s32 1, %v1642
        %v1644 = vrot.slane %v1415, %v1643
        %v1645 = vmul.f32 %v1257, %v1644
        %v1646 = vmul.f32 %v1262, %v1644
        %v1647 = vmul.f32 %v1267, %v1644
        %v1648 = vmul.f32 %v1272, %v1644
        %v1649 = vmul.f32 %v1277, %v1644
        %v1650 = vmul.f32 %v1282, %v1644
        %v1651 = vmul.f32 %v1287, %v1644
        %v1652 = vmul.f32 %v1292, %v1644
        %v1653 = vmul.f32 %v1297, %v1644
        %v1654 = vmul.f32 %v1302, %v1644
        %v1655 = vmul.f32 %v1307, %v1644
        %v1656 = vmul.f32 %v1312, %v1644
        %v1657 = vmul.f32 %v1317, %v1644
        %v1658 = vmul.f32 %v1322, %v1644
        %v1659 = vmul.f32 %v1327, %v1644
        %v1660 = vmul.f32 %v1332, %v1644
        %v1661 = vmul.f32 %v1337, %v1644
        %v1662 = vmul.f32 %v1342, %v1644
        %v1663 = vmul.f32 %v1347, %v1644
        %v1664 = vmul.f32 %v1352, %v1644
        %v1665 = vmul.f32 %v1357, %v1644
        %v1666 = vmul.f32 %v1362, %v1644
        %v1667 = vmul.f32 %v1367, %v1644
        %v1668 = vmul.f32 %v1372, %v1644
        %v1669 = vmul.f32 %v1377, %v1644
        %v1670 = vmul.f32 %v1382, %v1644
        %v1671 = vmul.f32 %v1387, %v1644
        %v1672 = vmul.f32 %v1392, %v1644
        %v1673 = vmul.f32 %v1397, %v1644
        %v1674 = vmul.f32 %v1402, %v1644
        %v1675 = vadd.f32 %v1611, %v1645
        %v1676 = vadd.f32 %v1612, %v1646
        %v1677 = vadd.f32 %v1613, %v1647
        %v1678 = vadd.f32 %v1614, %v1648
        %v1679 = vadd.f32 %v1615, %v1649
        %v1680 = vadd.f32 %v1616, %v1650
        %v1681 = vadd.f32 %v1617, %v1651
        %v1682 = vadd.f32 %v1618, %v1652
        %v1683 = vadd.f32 %v1619, %v1653
        %v1684 = vadd.f32 %v1620, %v1654
        %v1685 = vadd.f32 %v1621, %v1655
        %v1686 = vadd.f32 %v1622, %v1656
        %v1687 = vadd.f32 %v1623, %v1657
        %v1688 = vadd.f32 %v1624, %v1658
        %v1689 = vadd.f32 %v1625, %v1659
        %v1690 = vadd.f32 %v1626, %v1660
        %v1691 = vadd.f32 %v1627, %v1661
        %v1692 = vadd.f32 %v1628, %v1662
        %v1693 = vadd.f32 %v1629, %v1663
        %v1694 = vadd.f32 %v1630, %v1664
        %v1695 = vadd.f32 %v1631, %v1665
        %v1696 = vadd.f32 %v1632, %v1666
        %v1697 = vadd.f32 %v1633, %v1667
        %v1698 = vadd.f32 %v1634, %v1668
        %v1699 = vadd.f32 %v1635, %v1669
        %v1700 = vadd.f32 %v1636, %v1670
        %v1701 = vadd.f32 %v1637, %v1671
        %v1702 = vadd.f32 %v1638, %v1672
        %v1703 = vadd.f32 %v1639, %v1673
        %v1704 = vadd.f32 %v1640, %v1674
        %1705 = vst.msk [vmem:[%s1485] sm:$0xff] %vm583, %v1675
        %1706 = vst.msk [vmem:[%s1485 + $0x8] sm:$0xff] %vm583, %v1676
        %1707 = vst.msk [vmem:[%s1485 + $0x10] sm:$0xff] %vm583, %v1677
        %1708 = vst.msk [vmem:[%s1485 + $0x18] sm:$0xff] %vm583, %v1678
        %1709 = vst.msk [vmem:[%s1485 + $0x20] sm:$0xff] %vm583, %v1679
        %1710 = vst.msk [vmem:[%s1485 + $0x28] sm:$0xff] %vm583, %v1680
        %1711 = vst.msk [vmem:[%s1485 + $0x30] sm:$0xff] %vm583, %v1681
        %1712 = vst.msk [vmem:[%s1485 + $0x38] sm:$0xff] %vm583, %v1682
        %1713 = vst.msk [vmem:[%s1485 + $0x40] sm:$0xff] %vm583, %v1683
        %1714 = vst.msk [vmem:[%s1485 + $0x48] sm:$0xff] %vm583, %v1684
        %1715 = vst.msk [vmem:[%s1485 + $0x50] sm:$0xff] %vm583, %v1685
        %1716 = vst.msk [vmem:[%s1485 + $0x58] sm:$0xff] %vm583, %v1686
        %1717 = vst.msk [vmem:[%s1485 + $0x60] sm:$0xff] %vm583, %v1687
        %1718 = vst.msk [vmem:[%s1485 + $0x68] sm:$0xff] %vm583, %v1688
        %1719 = vst.msk [vmem:[%s1485 + $0x70] sm:$0xff] %vm583, %v1689
        %1720 = vst.msk [vmem:[%s1485 + $0x78] sm:$0xff] %vm583, %v1690
        %1721 = vst.msk [vmem:[%s1485 + $0x80] sm:$0xff] %vm583, %v1691
        %1722 = vst.msk [vmem:[%s1485 + $0x88] sm:$0xff] %vm583, %v1692
        %1723 = vst.msk [vmem:[%s1485 + $0x90] sm:$0xff] %vm583, %v1693
        %1724 = vst.msk [vmem:[%s1485 + $0x98] sm:$0xff] %vm583, %v1694
        %1725 = vst.msk [vmem:[%s1485 + $0xa0] sm:$0xff] %vm583, %v1695
        %1726 = vst.msk [vmem:[%s1485 + $0xa8] sm:$0xff] %vm583, %v1696
        %1727 = vst.msk [vmem:[%s1485 + $0xb0] sm:$0xff] %vm583, %v1697
        %1728 = vst.msk [vmem:[%s1485 + $0xb8] sm:$0xff] %vm583, %v1698
        %1729 = vst.msk [vmem:[%s1485 + $0xc0] sm:$0xff] %vm583, %v1699
        %1730 = vst.msk [vmem:[%s1485 + $0xc8] sm:$0xff] %vm583, %v1700
        %1731 = vst.msk [vmem:[%s1485 + $0xd0] sm:$0xff] %vm583, %v1701
        %1732 = vst.msk [vmem:[%s1485 + $0xd8] sm:$0xff] %vm583, %v1702
        %1733 = vst.msk [vmem:[%s1485 + $0xe0] sm:$0xff] %vm583, %v1703
        %1734 = vst.msk [vmem:[%s1485 + $0xe8] sm:$0xff] %vm583, %v1704
        %v1735 = vld [vmem:[%s1485] sm:$0xff]
        %v1736 = vld [vmem:[%s1485 + $0x8] sm:$0x7f]
        %v1737 = vld [vmem:[%s1485 + $0x10] sm:$0xff]
        %v1738 = vld [vmem:[%s1485 + $0x18] sm:$0x7f]
        %v1739 = vld [vmem:[%s1485 + $0x20] sm:$0xff]
        %v1740 = vld [vmem:[%s1485 + $0x28] sm:$0x7f]
        %v1741 = vld [vmem:[%s1485 + $0x30] sm:$0xff]
        %v1742 = vld [vmem:[%s1485 + $0x38] sm:$0x7f]
        %v1743 = vld [vmem:[%s1485 + $0x40] sm:$0xff]
        %v1744 = vld [vmem:[%s1485 + $0x48] sm:$0x7f]
        %v1745 = vld [vmem:[%s1485 + $0x50] sm:$0xff]
        %v1746 = vld [vmem:[%s1485 + $0x58] sm:$0x7f]
        %v1747 = vld [vmem:[%s1485 + $0x60] sm:$0xff]
        %v1748 = vld [vmem:[%s1485 + $0x68] sm:$0x7f]
        %v1749 = vld [vmem:[%s1485 + $0x70] sm:$0xff]
        %v1750 = vld [vmem:[%s1485 + $0x78] sm:$0x7f]
        %v1751 = vld [vmem:[%s1485 + $0x80] sm:$0xff]
        %v1752 = vld [vmem:[%s1485 + $0x88] sm:$0x7f]
        %v1753 = vld [vmem:[%s1485 + $0x90] sm:$0xff]
        %v1754 = vld [vmem:[%s1485 + $0x98] sm:$0x7f]
        %v1755 = vld [vmem:[%s1485 + $0xa0] sm:$0xff]
        %v1756 = vld [vmem:[%s1485 + $0xa8] sm:$0x7f]
        %v1757 = vld [vmem:[%s1485 + $0xb0] sm:$0xff]
        %v1758 = vld [vmem:[%s1485 + $0xb8] sm:$0x7f]
        %v1759 = vld [vmem:[%s1485 + $0xc0] sm:$0xff]
        %v1760 = vld [vmem:[%s1485 + $0xc8] sm:$0x7f]
        %v1761 = vld [vmem:[%s1485 + $0xd0] sm:$0xff]
        %v1762 = vld [vmem:[%s1485 + $0xd8] sm:$0x7f]
        %v1763 = vld [vmem:[%s1485 + $0xe0] sm:$0xff]
        %v1764 = vld [vmem:[%s1485 + $0xe8] sm:$0x7f]
        %v1765 = vlaneseq
        %v1766 = vshrl.u32 %v1765, 7
        %v1767 = vsub.s32 2, %v1766
        %v1768 = vrot.slane %v1415, %v1767
        %v1769 = vmul.f32 %v1257, %v1768
        %v1770 = vmul.f32 %v1262, %v1768
        %v1771 = vmul.f32 %v1267, %v1768
        %v1772 = vmul.f32 %v1272, %v1768
        %v1773 = vmul.f32 %v1277, %v1768
        %v1774 = vmul.f32 %v1282, %v1768
        %v1775 = vmul.f32 %v1287, %v1768
        %v1776 = vmul.f32 %v1292, %v1768
        %v1777 = vmul.f32 %v1297, %v1768
        %v1778 = vmul.f32 %v1302, %v1768
        %v1779 = vmul.f32 %v1307, %v1768
        %v1780 = vmul.f32 %v1312, %v1768
        %v1781 = vmul.f32 %v1317, %v1768
        %v1782 = vmul.f32 %v1322, %v1768
        %v1783 = vmul.f32 %v1327, %v1768
        %v1784 = vmul.f32 %v1332, %v1768
        %v1785 = vmul.f32 %v1337, %v1768
        %v1786 = vmul.f32 %v1342, %v1768
        %v1787 = vmul.f32 %v1347, %v1768
        %v1788 = vmul.f32 %v1352, %v1768
        %v1789 = vmul.f32 %v1357, %v1768
        %v1790 = vmul.f32 %v1362, %v1768
        %v1791 = vmul.f32 %v1367, %v1768
        %v1792 = vmul.f32 %v1372, %v1768
        %v1793 = vmul.f32 %v1377, %v1768
        %v1794 = vmul.f32 %v1382, %v1768
        %v1795 = vmul.f32 %v1387, %v1768
        %v1796 = vmul.f32 %v1392, %v1768
        %v1797 = vmul.f32 %v1397, %v1768
        %v1798 = vmul.f32 %v1402, %v1768
        %vm1829 = vcmask 1046528
        %v1830 = vrot.slane %v1769, 1
        %v1831 = vrot.slane %v1770, 1
        %v1832 = vsel %vm1829, %v1830, %v1831
        %v1833 = vrot.slane %v1771, 1
        %v1834 = vrot.slane %v1772, 1
        %v1835 = vsel %vm1829, %v1833, %v1834
        %v1836 = vrot.slane %v1773, 1
        %v1837 = vrot.slane %v1774, 1
        %v1838 = vsel %vm1829, %v1836, %v1837
        %v1839 = vrot.slane %v1775, 1
        %v1840 = vrot.slane %v1776, 1
        %v1841 = vsel %vm1829, %v1839, %v1840
        %v1842 = vrot.slane %v1777, 1
        %v1843 = vrot.slane %v1778, 1
        %v1844 = vsel %vm1829, %v1842, %v1843
        %v1845 = vrot.slane %v1779, 1
        %v1846 = vrot.slane %v1780, 1
        %v1847 = vsel %vm1829, %v1845, %v1846
        %v1848 = vrot.slane %v1781, 1
        %v1849 = vrot.slane %v1782, 1
        %v1850 = vsel %vm1829, %v1848, %v1849
        %v1851 = vrot.slane %v1783, 1
        %v1852 = vrot.slane %v1784, 1
        %v1853 = vsel %vm1829, %v1851, %v1852
        %v1854 = vrot.slane %v1785, 1
        %v1855 = vrot.slane %v1786, 1
        %v1856 = vsel %vm1829, %v1854, %v1855
        %v1857 = vrot.slane %v1787, 1
        %v1858 = vrot.slane %v1788, 1
        %v1859 = vsel %vm1829, %v1857, %v1858
        %v1860 = vrot.slane %v1789, 1
        %v1861 = vrot.slane %v1790, 1
        %v1862 = vsel %vm1829, %v1860, %v1861
        %v1863 = vrot.slane %v1791, 1
        %v1864 = vrot.slane %v1792, 1
        %v1865 = vsel %vm1829, %v1863, %v1864
        %v1866 = vrot.slane %v1793, 1
        %v1867 = vrot.slane %v1794, 1
        %v1868 = vsel %vm1829, %v1866, %v1867
        %v1869 = vrot.slane %v1795, 1
        %v1870 = vrot.slane %v1796, 1
        %v1871 = vsel %vm1829, %v1869, %v1870
        %v1872 = vrot.slane %v1797, 1
        %v1873 = vrot.slane %v1798, 1
        %v1874 = vsel %vm1829, %v1872, %v1873
        %v1905 = vadd.f32 %v1735, %v1832
        %v1906 = vadd.f32 %v1736, %v1831
        %v1907 = vadd.f32 %v1737, %v1835
        %v1908 = vadd.f32 %v1738, %v1834
        %v1909 = vadd.f32 %v1739, %v1838
        %v1910 = vadd.f32 %v1740, %v1837
        %v1911 = vadd.f32 %v1741, %v1841
        %v1912 = vadd.f32 %v1742, %v1840
        %v1913 = vadd.f32 %v1743, %v1844
        %v1914 = vadd.f32 %v1744, %v1843
        %v1915 = vadd.f32 %v1745, %v1847
        %v1916 = vadd.f32 %v1746, %v1846
        %v1917 = vadd.f32 %v1747, %v1850
        %v1918 = vadd.f32 %v1748, %v1849
        %v1919 = vadd.f32 %v1749, %v1853
        %v1920 = vadd.f32 %v1750, %v1852
        %v1921 = vadd.f32 %v1751, %v1856
        %v1922 = vadd.f32 %v1752, %v1855
        %v1923 = vadd.f32 %v1753, %v1859
        %v1924 = vadd.f32 %v1754, %v1858
        %v1925 = vadd.f32 %v1755, %v1862
        %v1926 = vadd.f32 %v1756, %v1861
        %v1927 = vadd.f32 %v1757, %v1865
        %v1928 = vadd.f32 %v1758, %v1864
        %v1929 = vadd.f32 %v1759, %v1868
        %v1930 = vadd.f32 %v1760, %v1867
        %v1931 = vadd.f32 %v1761, %v1871
        %v1932 = vadd.f32 %v1762, %v1870
        %v1933 = vadd.f32 %v1763, %v1874
        %v1934 = vadd.f32 %v1764, %v1873
        %1935 = vst.msk [vmem:[%s1485] sm:$0xff] %vm583, %v1905
        %1936 = vst.msk [vmem:[%s1485 + $0x8] sm:$0x7f] %vm1581, %v1906
        %1937 = vst.msk [vmem:[%s1485 + $0x10] sm:$0xff] %vm583, %v1907
        %1938 = vst.msk [vmem:[%s1485 + $0x18] sm:$0x7f] %vm1581, %v1908
        %1939 = vst.msk [vmem:[%s1485 + $0x20] sm:$0xff] %vm583, %v1909
        %1940 = vst.msk [vmem:[%s1485 + $0x28] sm:$0x7f] %vm1581, %v1910
        %1941 = vst.msk [vmem:[%s1485 + $0x30] sm:$0xff] %vm583, %v1911
        %1942 = vst.msk [vmem:[%s1485 + $0x38] sm:$0x7f] %vm1581, %v1912
        %1943 = vst.msk [vmem:[%s1485 + $0x40] sm:$0xff] %vm583, %v1913
        %1944 = vst.msk [vmem:[%s1485 + $0x48] sm:$0x7f] %vm1581, %v1914
        %1945 = vst.msk [vmem:[%s1485 + $0x50] sm:$0xff] %vm583, %v1915
        %1946 = vst.msk [vmem:[%s1485 + $0x58] sm:$0x7f] %vm1581, %v1916
        %1947 = vst.msk [vmem:[%s1485 + $0x60] sm:$0xff] %vm583, %v1917
        %1948 = vst.msk [vmem:[%s1485 + $0x68] sm:$0x7f] %vm1581, %v1918
        %1949 = vst.msk [vmem:[%s1485 + $0x70] sm:$0xff] %vm583, %v1919
        %1950 = vst.msk [vmem:[%s1485 + $0x78] sm:$0x7f] %vm1581, %v1920
        %1951 = vst.msk [vmem:[%s1485 + $0x80] sm:$0xff] %vm583, %v1921
        %1952 = vst.msk [vmem:[%s1485 + $0x88] sm:$0x7f] %vm1581, %v1922
        %1953 = vst.msk [vmem:[%s1485 + $0x90] sm:$0xff] %vm583, %v1923
        %1954 = vst.msk [vmem:[%s1485 + $0x98] sm:$0x7f] %vm1581, %v1924
        %1955 = vst.msk [vmem:[%s1485 + $0xa0] sm:$0xff] %vm583, %v1925
        %1956 = vst.msk [vmem:[%s1485 + $0xa8] sm:$0x7f] %vm1581, %v1926
        %1957 = vst.msk [vmem:[%s1485 + $0xb0] sm:$0xff] %vm583, %v1927
        %1958 = vst.msk [vmem:[%s1485 + $0xb8] sm:$0x7f] %vm1581, %v1928
        %1959 = vst.msk [vmem:[%s1485 + $0xc0] sm:$0xff] %vm583, %v1929
        %1960 = vst.msk [vmem:[%s1485 + $0xc8] sm:$0x7f] %vm1581, %v1930
        %1961 = vst.msk [vmem:[%s1485 + $0xd0] sm:$0xff] %vm583, %v1931
        %1962 = vst.msk [vmem:[%s1485 + $0xd8] sm:$0x7f] %vm1581, %v1932
        %1963 = vst.msk [vmem:[%s1485 + $0xe0] sm:$0xff] %vm583, %v1933
        %1964 = vst.msk [vmem:[%s1485 + $0xe8] sm:$0x7f] %vm1581, %v1934
        %v1965 = vld [vmem:[#allocation2 + $0x1] sm:$0xff]
        %v1966 = vld [vmem:[#allocation2 + $0x9] sm:$0x7f]
        %v1967 = vld [vmem:[#allocation2 + $0x11] sm:$0xff]
        %v1968 = vld [vmem:[#allocation2 + $0x19] sm:$0x7f]
        %v1969 = vld [vmem:[#allocation2 + $0x21] sm:$0xff]
        %v1970 = vld [vmem:[#allocation2 + $0x29] sm:$0x7f]
        %v1971 = vld [vmem:[#allocation2 + $0x31] sm:$0xff]
        %v1972 = vld [vmem:[#allocation2 + $0x39] sm:$0x7f]
        %v1973 = vld [vmem:[#allocation2 + $0x41] sm:$0xff]
        %v1974 = vld [vmem:[#allocation2 + $0x49] sm:$0x7f]
        %v1975 = vld [vmem:[#allocation2 + $0x51] sm:$0xff]
        %v1976 = vld [vmem:[#allocation2 + $0x59] sm:$0x7f]
        %v1977 = vld [vmem:[#allocation2 + $0x61] sm:$0xff]
        %v1978 = vld [vmem:[#allocation2 + $0x69] sm:$0x7f]
        %v1979 = vld [vmem:[#allocation2 + $0x71] sm:$0xff]
        %v1980 = vld [vmem:[#allocation2 + $0x79] sm:$0x7f]
        %v1981 = vld [vmem:[#allocation2 + $0x81] sm:$0xff]
        %v1982 = vld [vmem:[#allocation2 + $0x89] sm:$0x7f]
        %v1983 = vld [vmem:[#allocation2 + $0x91] sm:$0xff]
        %v1984 = vld [vmem:[#allocation2 + $0x99] sm:$0x7f]
        %v1985 = vld [vmem:[#allocation2 + $0xa1] sm:$0xff]
        %v1986 = vld [vmem:[#allocation2 + $0xa9] sm:$0x7f]
        %v1987 = vld [vmem:[#allocation2 + $0xb1] sm:$0xff]
        %v1988 = vld [vmem:[#allocation2 + $0xb9] sm:$0x7f]
        %v1989 = vld [vmem:[#allocation2 + $0xc1] sm:$0xff]
        %v1990 = vld [vmem:[#allocation2 + $0xc9] sm:$0x7f]
        %v1991 = vld [vmem:[#allocation2 + $0xd1] sm:$0xff]
        %v1992 = vld [vmem:[#allocation2 + $0xd9] sm:$0x7f]
        %v1993 = vld [vmem:[#allocation2 + $0xe1] sm:$0xff]
        %v1994 = vld [vmem:[#allocation2 + $0xe9] sm:$0x7f]
        %v1995 = vld [vmem:[#allocation2 + $0xf1] sm:$0xff]
        %v1996 = vld [vmem:[#allocation2 + $0xf9] sm:$0x7f]
        %v1997 = vlaneseq
        %v1998 = vshrl.u32 %v1997, 7
        %v1999 = vsub.s32 3, %v1998
        %v2000 = vrot.slane %v1415, %v1999
        %v2001 = vmul.f32 %v1257, %v2000
        %v2002 = vmul.f32 %v1262, %v2000
        %v2003 = vmul.f32 %v1267, %v2000
        %v2004 = vmul.f32 %v1272, %v2000
        %v2005 = vmul.f32 %v1277, %v2000
        %v2006 = vmul.f32 %v1282, %v2000
        %v2007 = vmul.f32 %v1287, %v2000
        %v2008 = vmul.f32 %v1292, %v2000
        %v2009 = vmul.f32 %v1297, %v2000
        %v2010 = vmul.f32 %v1302, %v2000
        %v2011 = vmul.f32 %v1307, %v2000
        %v2012 = vmul.f32 %v1312, %v2000
        %v2013 = vmul.f32 %v1317, %v2000
        %v2014 = vmul.f32 %v1322, %v2000
        %v2015 = vmul.f32 %v1327, %v2000
        %v2016 = vmul.f32 %v1332, %v2000
        %v2017 = vmul.f32 %v1337, %v2000
        %v2018 = vmul.f32 %v1342, %v2000
        %v2019 = vmul.f32 %v1347, %v2000
        %v2020 = vmul.f32 %v1352, %v2000
        %v2021 = vmul.f32 %v1357, %v2000
        %v2022 = vmul.f32 %v1362, %v2000
        %v2023 = vmul.f32 %v1367, %v2000
        %v2024 = vmul.f32 %v1372, %v2000
        %v2025 = vmul.f32 %v1377, %v2000
        %v2026 = vmul.f32 %v1382, %v2000
        %v2027 = vmul.f32 %v1387, %v2000
        %v2028 = vmul.f32 %v1392, %v2000
        %v2029 = vmul.f32 %v1397, %v2000
        %v2030 = vmul.f32 %v1402, %v2000
        %v2031 = vmul.f32 %v1407, %v2000
        %v2032 = vmul.f32 %v1412, %v2000
        %v2033 = vadd.f32 %v1965, %v2001
        %v2034 = vadd.f32 %v1966, %v2002
        %v2035 = vadd.f32 %v1967, %v2003
        %v2036 = vadd.f32 %v1968, %v2004
        %v2037 = vadd.f32 %v1969, %v2005
        %v2038 = vadd.f32 %v1970, %v2006
        %v2039 = vadd.f32 %v1971, %v2007
        %v2040 = vadd.f32 %v1972, %v2008
        %v2041 = vadd.f32 %v1973, %v2009
        %v2042 = vadd.f32 %v1974, %v2010
        %v2043 = vadd.f32 %v1975, %v2011
        %v2044 = vadd.f32 %v1976, %v2012
        %v2045 = vadd.f32 %v1977, %v2013
        %v2046 = vadd.f32 %v1978, %v2014
        %v2047 = vadd.f32 %v1979, %v2015
        %v2048 = vadd.f32 %v1980, %v2016
        %v2049 = vadd.f32 %v1981, %v2017
        %v2050 = vadd.f32 %v1982, %v2018
        %v2051 = vadd.f32 %v1983, %v2019
        %v2052 = vadd.f32 %v1984, %v2020
        %v2053 = vadd.f32 %v1985, %v2021
        %v2054 = vadd.f32 %v1986, %v2022
        %v2055 = vadd.f32 %v1987, %v2023
        %v2056 = vadd.f32 %v1988, %v2024
        %v2057 = vadd.f32 %v1989, %v2025
        %v2058 = vadd.f32 %v1990, %v2026
        %v2059 = vadd.f32 %v1991, %v2027
        %v2060 = vadd.f32 %v1992, %v2028
        %v2061 = vadd.f32 %v1993, %v2029
        %v2062 = vadd.f32 %v1994, %v2030
        %v2063 = vadd.f32 %v1995, %v2031
        %v2064 = vadd.f32 %v1996, %v2032
        %2065 = vst.msk [vmem:[#allocation2 + $0x1] sm:$0xff] %vm583, %v2033
        %2066 = vst.msk [vmem:[#allocation2 + $0x9] sm:$0x7f] %vm1581, %v2034
        %2067 = vst.msk [vmem:[#allocation2 + $0x11] sm:$0xff] %vm583, %v2035
        %2068 = vst.msk [vmem:[#allocation2 + $0x19] sm:$0x7f] %vm1581, %v2036
        %2069 = vst.msk [vmem:[#allocation2 + $0x21] sm:$0xff] %vm583, %v2037
        %2070 = vst.msk [vmem:[#allocation2 + $0x29] sm:$0x7f] %vm1581, %v2038
        %2071 = vst.msk [vmem:[#allocation2 + $0x31] sm:$0xff] %vm583, %v2039
        %2072 = vst.msk [vmem:[#allocation2 + $0x39] sm:$0x7f] %vm1581, %v2040
        %2073 = vst.msk [vmem:[#allocation2 + $0x41] sm:$0xff] %vm583, %v2041
        %2074 = vst.msk [vmem:[#allocation2 + $0x49] sm:$0x7f] %vm1581, %v2042
        %2075 = vst.msk [vmem:[#allocation2 + $0x51] sm:$0xff] %vm583, %v2043
        %2076 = vst.msk [vmem:[#allocation2 + $0x59] sm:$0x7f] %vm1581, %v2044
        %2077 = vst.msk [vmem:[#allocation2 + $0x61] sm:$0xff] %vm583, %v2045
        %2078 = vst.msk [vmem:[#allocation2 + $0x69] sm:$0x7f] %vm1581, %v2046
        %2079 = vst.msk [vmem:[#allocation2 + $0x71] sm:$0xff] %vm583, %v2047
        %2080 = vst.msk [vmem:[#allocation2 + $0x79] sm:$0x7f] %vm1581, %v2048
        %2081 = vst.msk [vmem:[#allocation2 + $0x81] sm:$0xff] %vm583, %v2049
        %2082 = vst.msk [vmem:[#allocation2 + $0x89] sm:$0x7f] %vm1581, %v2050
        %2083 = vst.msk [vmem:[#allocation2 + $0x91] sm:$0xff] %vm583, %v2051
        %2084 = vst.msk [vmem:[#allocation2 + $0x99] sm:$0x7f] %vm1581, %v2052
        %2085 = vst.msk [vmem:[#allocation2 + $0xa1] sm:$0xff] %vm583, %v2053
        %2086 = vst.msk [vmem:[#allocation2 + $0xa9] sm:$0x7f] %vm1581, %v2054
        %2087 = vst.msk [vmem:[#allocation2 + $0xb1] sm:$0xff] %vm583, %v2055
        %2088 = vst.msk [vmem:[#allocation2 + $0xb9] sm:$0x7f] %vm1581, %v2056
        %2089 = vst.msk [vmem:[#allocation2 + $0xc1] sm:$0xff] %vm583, %v2057
        %2090 = vst.msk [vmem:[#allocation2 + $0xc9] sm:$0x7f] %vm1581, %v2058
        %2091 = vst.msk [vmem:[#allocation2 + $0xd1] sm:$0xff] %vm583, %v2059
        %2092 = vst.msk [vmem:[#allocation2 + $0xd9] sm:$0x7f] %vm1581, %v2060
        %2093 = vst.msk [vmem:[#allocation2 + $0xe1] sm:$0xff] %vm583, %v2061
        %2094 = vst.msk [vmem:[#allocation2 + $0xe9] sm:$0x7f] %vm1581, %v2062
        %2095 = vst.msk [vmem:[#allocation2 + $0xf1] sm:$0xff] %vm583, %v2063
        %2096 = vst.msk [vmem:[#allocation2 + $0xf9] sm:$0x7f] %vm1581, %v2064
        %v2097 = vld [vmem:[#allocation2] sm:$0xff]
        %v2098 = vld [vmem:[#allocation2 + $0x8] sm:$0x7f]
        %v2099 = vld [vmem:[#allocation2 + $0x10] sm:$0xff]
        %v2100 = vld [vmem:[#allocation2 + $0x18] sm:$0x7f]
        %v2101 = vld [vmem:[#allocation2 + $0x20] sm:$0xff]
        %v2102 = vld [vmem:[#allocation2 + $0x28] sm:$0x7f]
        %v2103 = vld [vmem:[#allocation2 + $0x30] sm:$0xff]
        %v2104 = vld [vmem:[#allocation2 + $0x38] sm:$0x7f]
        %v2105 = vld [vmem:[#allocation2 + $0x40] sm:$0xff]
        %v2106 = vld [vmem:[#allocation2 + $0x48] sm:$0x7f]
        %v2107 = vld [vmem:[#allocation2 + $0x50] sm:$0xff]
        %v2108 = vld [vmem:[#allocation2 + $0x58] sm:$0x7f]
        %v2109 = vld [vmem:[#allocation2 + $0x60] sm:$0xff]
        %v2110 = vld [vmem:[#allocation2 + $0x68] sm:$0x7f]
        %v2111 = vld [vmem:[#allocation2 + $0x70] sm:$0xff]
        %v2112 = vld [vmem:[#allocation2 + $0x78] sm:$0x7f]
        %v2113 = vld [vmem:[#allocation2 + $0x80] sm:$0xff]
        %v2114 = vld [vmem:[#allocation2 + $0x88] sm:$0x7f]
        %v2115 = vld [vmem:[#allocation2 + $0x90] sm:$0xff]
        %v2116 = vld [vmem:[#allocation2 + $0x98] sm:$0x7f]
        %v2117 = vld [vmem:[#allocation2 + $0xa0] sm:$0xff]
        %v2118 = vld [vmem:[#allocation2 + $0xa8] sm:$0x7f]
        %v2119 = vld [vmem:[#allocation2 + $0xb0] sm:$0xff]
        %v2120 = vld [vmem:[#allocation2 + $0xb8] sm:$0x7f]
        %v2121 = vld [vmem:[#allocation2 + $0xc0] sm:$0xff]
        %v2122 = vld [vmem:[#allocation2 + $0xc8] sm:$0x7f]
        %v2123 = vld [vmem:[#allocation2 + $0xd0] sm:$0xff]
        %v2124 = vld [vmem:[#allocation2 + $0xd8] sm:$0x7f]
        %v2125 = vld [vmem:[#allocation2 + $0xe0] sm:$0xff]
        %v2126 = vld [vmem:[#allocation2 + $0xe8] sm:$0x7f]
        %v2127 = vld [vmem:[#allocation2 + $0xf0] sm:$0xff]
        %v2128 = vld [vmem:[#allocation2 + $0xf8] sm:$0x7f]
        %v2129 = vlaneseq
        %v2130 = vshrl.u32 %v2129, 7
        %v2131 = vsub.s32 5, %v2130
        %v2132 = vrot.slane %v1415, %v2131
        %v2133 = vmul.f32 %v1257, %v2132
        %v2134 = vmul.f32 %v1262, %v2132
        %v2135 = vmul.f32 %v1267, %v2132
        %v2136 = vmul.f32 %v1272, %v2132
        %v2137 = vmul.f32 %v1277, %v2132
        %v2138 = vmul.f32 %v1282, %v2132
        %v2139 = vmul.f32 %v1287, %v2132
        %v2140 = vmul.f32 %v1292, %v2132
        %v2141 = vmul.f32 %v1297, %v2132
        %v2142 = vmul.f32 %v1302, %v2132
        %v2143 = vmul.f32 %v1307, %v2132
        %v2144 = vmul.f32 %v1312, %v2132
        %v2145 = vmul.f32 %v1317, %v2132
        %v2146 = vmul.f32 %v1322, %v2132
        %v2147 = vmul.f32 %v1327, %v2132
        %v2148 = vmul.f32 %v1332, %v2132
        %v2149 = vmul.f32 %v1337, %v2132
        %v2150 = vmul.f32 %v1342, %v2132
        %v2151 = vmul.f32 %v1347, %v2132
        %v2152 = vmul.f32 %v1352, %v2132
        %v2153 = vmul.f32 %v1357, %v2132
        %v2154 = vmul.f32 %v1362, %v2132
        %v2155 = vmul.f32 %v1367, %v2132
        %v2156 = vmul.f32 %v1372, %v2132
        %v2157 = vmul.f32 %v1377, %v2132
        %v2158 = vmul.f32 %v1382, %v2132
        %v2159 = vmul.f32 %v1387, %v2132
        %v2160 = vmul.f32 %v1392, %v2132
        %v2161 = vmul.f32 %v1397, %v2132
        %v2162 = vmul.f32 %v1402, %v2132
        %v2163 = vmul.f32 %v1407, %v2132
        %v2164 = vmul.f32 %v1412, %v2132
        %v2197 = vrot.slane %v2133, 1
        %v2198 = vrot.slane %v2134, 1
        %v2199 = vsel %vm1829, %v2197, %v2198
        %v2200 = vrot.slane %v2135, 1
        %v2201 = vrot.slane %v2136, 1
        %v2202 = vsel %vm1829, %v2200, %v2201
        %v2203 = vrot.slane %v2137, 1
        %v2204 = vrot.slane %v2138, 1
        %v2205 = vsel %vm1829, %v2203, %v2204
        %v2206 = vrot.slane %v2139, 1
        %v2207 = vrot.slane %v2140, 1
        %v2208 = vsel %vm1829, %v2206, %v2207
        %v2209 = vrot.slane %v2141, 1
        %v2210 = vrot.slane %v2142, 1
        %v2211 = vsel %vm1829, %v2209, %v2210
        %v2212 = vrot.slane %v2143, 1
        %v2213 = vrot.slane %v2144, 1
        %v2214 = vsel %vm1829, %v2212, %v2213
        %v2215 = vrot.slane %v2145, 1
        %v2216 = vrot.slane %v2146, 1
        %v2217 = vsel %vm1829, %v2215, %v2216
        %v2218 = vrot.slane %v2147, 1
        %v2219 = vrot.slane %v2148, 1
        %v2220 = vsel %vm1829, %v2218, %v2219
        %v2221 = vrot.slane %v2149, 1
        %v2222 = vrot.slane %v2150, 1
        %v2223 = vsel %vm1829, %v2221, %v2222
        %v2224 = vrot.slane %v2151, 1
        %v2225 = vrot.slane %v2152, 1
        %v2226 = vsel %vm1829, %v2224, %v2225
        %v2227 = vrot.slane %v2153, 1
        %v2228 = vrot.slane %v2154, 1
        %v2229 = vsel %vm1829, %v2227, %v2228
        %v2230 = vrot.slane %v2155, 1
        %v2231 = vrot.slane %v2156, 1
        %v2232 = vsel %vm1829, %v2230, %v2231
        %v2233 = vrot.slane %v2157, 1
        %v2234 = vrot.slane %v2158, 1
        %v2235 = vsel %vm1829, %v2233, %v2234
        %v2236 = vrot.slane %v2159, 1
        %v2237 = vrot.slane %v2160, 1
        %v2238 = vsel %vm1829, %v2236, %v2237
        %v2239 = vrot.slane %v2161, 1
        %v2240 = vrot.slane %v2162, 1
        %v2241 = vsel %vm1829, %v2239, %v2240
        %v2242 = vrot.slane %v2163, 1
        %v2243 = vrot.slane %v2164, 1
        %v2244 = vsel %vm1829, %v2242, %v2243
        %v2277 = vadd.f32 %v2097, %v2199
        %v2278 = vadd.f32 %v2098, %v2198
        %v2279 = vadd.f32 %v2099, %v2202
        %v2280 = vadd.f32 %v2100, %v2201
        %v2281 = vadd.f32 %v2101, %v2205
        %v2282 = vadd.f32 %v2102, %v2204
        %v2283 = vadd.f32 %v2103, %v2208
        %v2284 = vadd.f32 %v2104, %v2207
        %v2285 = vadd.f32 %v2105, %v2211
        %v2286 = vadd.f32 %v2106, %v2210
        %v2287 = vadd.f32 %v2107, %v2214
        %v2288 = vadd.f32 %v2108, %v2213
        %v2289 = vadd.f32 %v2109, %v2217
        %v2290 = vadd.f32 %v2110, %v2216
        %v2291 = vadd.f32 %v2111, %v2220
        %v2292 = vadd.f32 %v2112, %v2219
        %v2293 = vadd.f32 %v2113, %v2223
        %v2294 = vadd.f32 %v2114, %v2222
        %v2295 = vadd.f32 %v2115, %v2226
        %v2296 = vadd.f32 %v2116, %v2225
        %v2297 = vadd.f32 %v2117, %v2229
        %v2298 = vadd.f32 %v2118, %v2228
        %v2299 = vadd.f32 %v2119, %v2232
        %v2300 = vadd.f32 %v2120, %v2231
        %v2301 = vadd.f32 %v2121, %v2235
        %v2302 = vadd.f32 %v2122, %v2234
        %v2303 = vadd.f32 %v2123, %v2238
        %v2304 = vadd.f32 %v2124, %v2237
        %v2305 = vadd.f32 %v2125, %v2241
        %v2306 = vadd.f32 %v2126, %v2240
        %v2307 = vadd.f32 %v2127, %v2244
        %v2308 = vadd.f32 %v2128, %v2243
        %2309 = vst.msk [vmem:[#allocation2] sm:$0xff] %vm583, %v2277
        %2310 = vst.msk [vmem:[#allocation2 + $0x8] sm:$0x7f] %vm1581, %v2278
        %2311 = vst.msk [vmem:[#allocation2 + $0x10] sm:$0xff] %vm583, %v2279
        %2312 = vst.msk [vmem:[#allocation2 + $0x18] sm:$0x7f] %vm1581, %v2280
        %2313 = vst.msk [vmem:[#allocation2 + $0x20] sm:$0xff] %vm583, %v2281
        %2314 = vst.msk [vmem:[#allocation2 + $0x28] sm:$0x7f] %vm1581, %v2282
        %2315 = vst.msk [vmem:[#allocation2 + $0x30] sm:$0xff] %vm583, %v2283
        %2316 = vst.msk [vmem:[#allocation2 + $0x38] sm:$0x7f] %vm1581, %v2284
        %2317 = vst.msk [vmem:[#allocation2 + $0x40] sm:$0xff] %vm583, %v2285
        %2318 = vst.msk [vmem:[#allocation2 + $0x48] sm:$0x7f] %vm1581, %v2286
        %2319 = vst.msk [vmem:[#allocation2 + $0x50] sm:$0xff] %vm583, %v2287
        %2320 = vst.msk [vmem:[#allocation2 + $0x58] sm:$0x7f] %vm1581, %v2288
        %2321 = vst.msk [vmem:[#allocation2 + $0x60] sm:$0xff] %vm583, %v2289
        %2322 = vst.msk [vmem:[#allocation2 + $0x68] sm:$0x7f] %vm1581, %v2290
        %2323 = vst.msk [vmem:[#allocation2 + $0x70] sm:$0xff] %vm583, %v2291
        %2324 = vst.msk [vmem:[#allocation2 + $0x78] sm:$0x7f] %vm1581, %v2292
        %2325 = vst.msk [vmem:[#allocation2 + $0x80] sm:$0xff] %vm583, %v2293
        %2326 = vst.msk [vmem:[#allocation2 + $0x88] sm:$0x7f] %vm1581, %v2294
        %2327 = vst.msk [vmem:[#allocation2 + $0x90] sm:$0xff] %vm583, %v2295
        %2328 = vst.msk [vmem:[#allocation2 + $0x98] sm:$0x7f] %vm1581, %v2296
        %2329 = vst.msk [vmem:[#allocation2 + $0xa0] sm:$0xff] %vm583, %v2297
        %2330 = vst.msk [vmem:[#allocation2 + $0xa8] sm:$0x7f] %vm1581, %v2298
        %2331 = vst.msk [vmem:[#allocation2 + $0xb0] sm:$0xff] %vm583, %v2299
        %2332 = vst.msk [vmem:[#allocation2 + $0xb8] sm:$0x7f] %vm1581, %v2300
        %2333 = vst.msk [vmem:[#allocation2 + $0xc0] sm:$0xff] %vm583, %v2301
        %2334 = vst.msk [vmem:[#allocation2 + $0xc8] sm:$0x7f] %vm1581, %v2302
        %2335 = vst.msk [vmem:[#allocation2 + $0xd0] sm:$0xff] %vm583, %v2303
        %2336 = vst.msk [vmem:[#allocation2 + $0xd8] sm:$0x7f] %vm1581, %v2304
        %2337 = vst.msk [vmem:[#allocation2 + $0xe0] sm:$0xff] %vm583, %v2305
        %2338 = vst.msk [vmem:[#allocation2 + $0xe8] sm:$0x7f] %vm1581, %v2306
        %2339 = vst.msk [vmem:[#allocation2 + $0xf0] sm:$0xff] %vm583, %v2307
        %2340 = vst.msk [vmem:[#allocation2 + $0xf8] sm:$0x7f] %vm1581, %v2308
        %v2341 = vld [vmem:[#allocation2 + $0x1] sm:$0xff]
        %v2342 = vld [vmem:[#allocation2 + $0x9] sm:$0x7f]
        %v2343 = vld [vmem:[#allocation2 + $0x11] sm:$0xff]
        %v2344 = vld [vmem:[#allocation2 + $0x19] sm:$0x7f]
        %v2345 = vld [vmem:[#allocation2 + $0x21] sm:$0xff]
        %v2346 = vld [vmem:[#allocation2 + $0x29] sm:$0x7f]
        %v2347 = vld [vmem:[#allocation2 + $0x31] sm:$0xff]
        %v2348 = vld [vmem:[#allocation2 + $0x39] sm:$0x7f]
        %v2349 = vld [vmem:[#allocation2 + $0x41] sm:$0xff]
        %v2350 = vld [vmem:[#allocation2 + $0x49] sm:$0x7f]
        %v2351 = vld [vmem:[#allocation2 + $0x51] sm:$0xff]
        %v2352 = vld [vmem:[#allocation2 + $0x59] sm:$0x7f]
        %v2353 = vld [vmem:[#allocation2 + $0x61] sm:$0xff]
        %v2354 = vld [vmem:[#allocation2 + $0x69] sm:$0x7f]
        %v2355 = vld [vmem:[#allocation2 + $0x71] sm:$0xff]
        %v2356 = vld [vmem:[#allocation2 + $0x79] sm:$0x7f]
        %v2357 = vld [vmem:[#allocation2 + $0x81] sm:$0xff]
        %v2358 = vld [vmem:[#allocation2 + $0x89] sm:$0x7f]
        %v2359 = vld [vmem:[#allocation2 + $0x91] sm:$0xff]
        %v2360 = vld [vmem:[#allocation2 + $0x99] sm:$0x7f]
        %v2361 = vld [vmem:[#allocation2 + $0xa1] sm:$0xff]
        %v2362 = vld [vmem:[#allocation2 + $0xa9] sm:$0x7f]
        %v2363 = vld [vmem:[#allocation2 + $0xb1] sm:$0xff]
        %v2364 = vld [vmem:[#allocation2 + $0xb9] sm:$0x7f]
        %v2365 = vld [vmem:[#allocation2 + $0xc1] sm:$0xff]
        %v2366 = vld [vmem:[#allocation2 + $0xc9] sm:$0x7f]
        %v2367 = vld [vmem:[#allocation2 + $0xd1] sm:$0xff]
        %v2368 = vld [vmem:[#allocation2 + $0xd9] sm:$0x7f]
        %v2369 = vld [vmem:[#allocation2 + $0xe1] sm:$0xff]
        %v2370 = vld [vmem:[#allocation2 + $0xe9] sm:$0x7f]
        %v2371 = vlaneseq
        %v2372 = vshrl.u32 %v2371, 7
        %v2373 = vsub.s32 6, %v2372
        %v2374 = vrot.slane %v1415, %v2373
        %v2375 = vmul.f32 %v1267, %v2374
        %v2376 = vmul.f32 %v1272, %v2374
        %v2377 = vmul.f32 %v1277, %v2374
        %v2378 = vmul.f32 %v1282, %v2374
        %v2379 = vmul.f32 %v1287, %v2374
        %v2380 = vmul.f32 %v1292, %v2374
        %v2381 = vmul.f32 %v1297, %v2374
        %v2382 = vmul.f32 %v1302, %v2374
        %v2383 = vmul.f32 %v1307, %v2374
        %v2384 = vmul.f32 %v1312, %v2374
        %v2385 = vmul.f32 %v1317, %v2374
        %v2386 = vmul.f32 %v1322, %v2374
        %v2387 = vmul.f32 %v1327, %v2374
        %v2388 = vmul.f32 %v1332, %v2374
        %v2389 = vmul.f32 %v1337, %v2374
        %v2390 = vmul.f32 %v1342, %v2374
        %v2391 = vmul.f32 %v1347, %v2374
        %v2392 = vmul.f32 %v1352, %v2374
        %v2393 = vmul.f32 %v1357, %v2374
        %v2394 = vmul.f32 %v1362, %v2374
        %v2395 = vmul.f32 %v1367, %v2374
        %v2396 = vmul.f32 %v1372, %v2374
        %v2397 = vmul.f32 %v1377, %v2374
        %v2398 = vmul.f32 %v1382, %v2374
        %v2399 = vmul.f32 %v1387, %v2374
        %v2400 = vmul.f32 %v1392, %v2374
        %v2401 = vmul.f32 %v1397, %v2374
        %v2402 = vmul.f32 %v1402, %v2374
        %v2403 = vmul.f32 %v1407, %v2374
        %v2404 = vmul.f32 %v1412, %v2374
        %v2405 = vadd.f32 %v2341, %v2375
        %v2406 = vadd.f32 %v2342, %v2376
        %v2407 = vadd.f32 %v2343, %v2377
        %v2408 = vadd.f32 %v2344, %v2378
        %v2409 = vadd.f32 %v2345, %v2379
        %v2410 = vadd.f32 %v2346, %v2380
        %v2411 = vadd.f32 %v2347, %v2381
        %v2412 = vadd.f32 %v2348, %v2382
        %v2413 = vadd.f32 %v2349, %v2383
        %v2414 = vadd.f32 %v2350, %v2384
        %v2415 = vadd.f32 %v2351, %v2385
        %v2416 = vadd.f32 %v2352, %v2386
        %v2417 = vadd.f32 %v2353, %v2387
        %v2418 = vadd.f32 %v2354, %v2388
        %v2419 = vadd.f32 %v2355, %v2389
        %v2420 = vadd.f32 %v2356, %v2390
        %v2421 = vadd.f32 %v2357, %v2391
        %v2422 = vadd.f32 %v2358, %v2392
        %v2423 = vadd.f32 %v2359, %v2393
        %v2424 = vadd.f32 %v2360, %v2394
        %v2425 = vadd.f32 %v2361, %v2395
        %v2426 = vadd.f32 %v2362, %v2396
        %v2427 = vadd.f32 %v2363, %v2397
        %v2428 = vadd.f32 %v2364, %v2398
        %v2429 = vadd.f32 %v2365, %v2399
        %v2430 = vadd.f32 %v2366, %v2400
        %v2431 = vadd.f32 %v2367, %v2401
        %v2432 = vadd.f32 %v2368, %v2402
        %v2433 = vadd.f32 %v2369, %v2403
        %v2434 = vadd.f32 %v2370, %v2404
        %2435 = vst.msk [vmem:[#allocation2 + $0x1] sm:$0xff] %vm583, %v2405
        %2436 = vst.msk [vmem:[#allocation2 + $0x9] sm:$0x7f] %vm1581, %v2406
        %2437 = vst.msk [vmem:[#allocation2 + $0x11] sm:$0xff] %vm583, %v2407
        %2438 = vst.msk [vmem:[#allocation2 + $0x19] sm:$0x7f] %vm1581, %v2408
        %2439 = vst.msk [vmem:[#allocation2 + $0x21] sm:$0xff] %vm583, %v2409
        %2440 = vst.msk [vmem:[#allocation2 + $0x29] sm:$0x7f] %vm1581, %v2410
        %2441 = vst.msk [vmem:[#allocation2 + $0x31] sm:$0xff] %vm583, %v2411
        %2442 = vst.msk [vmem:[#allocation2 + $0x39] sm:$0x7f] %vm1581, %v2412
        %2443 = vst.msk [vmem:[#allocation2 + $0x41] sm:$0xff] %vm583, %v2413
        %2444 = vst.msk [vmem:[#allocation2 + $0x49] sm:$0x7f] %vm1581, %v2414
        %2445 = vst.msk [vmem:[#allocation2 + $0x51] sm:$0xff] %vm583, %v2415
        %2446 = vst.msk [vmem:[#allocation2 + $0x59] sm:$0x7f] %vm1581, %v2416
        %2447 = vst.msk [vmem:[#allocation2 + $0x61] sm:$0xff] %vm583, %v2417
        %2448 = vst.msk [vmem:[#allocation2 + $0x69] sm:$0x7f] %vm1581, %v2418
        %2449 = vst.msk [vmem:[#allocation2 + $0x71] sm:$0xff] %vm583, %v2419
        %2450 = vst.msk [vmem:[#allocation2 + $0x79] sm:$0x7f] %vm1581, %v2420
        %2451 = vst.msk [vmem:[#allocation2 + $0x81] sm:$0xff] %vm583, %v2421
        %2452 = vst.msk [vmem:[#allocation2 + $0x89] sm:$0x7f] %vm1581, %v2422
        %2453 = vst.msk [vmem:[#allocation2 + $0x91] sm:$0xff] %vm583, %v2423
        %2454 = vst.msk [vmem:[#allocation2 + $0x99] sm:$0x7f] %vm1581, %v2424
        %2455 = vst.msk [vmem:[#allocation2 + $0xa1] sm:$0xff] %vm583, %v2425
        %2456 = vst.msk [vmem:[#allocation2 + $0xa9] sm:$0x7f] %vm1581, %v2426
        %2457 = vst.msk [vmem:[#allocation2 + $0xb1] sm:$0xff] %vm583, %v2427
        %2458 = vst.msk [vmem:[#allocation2 + $0xb9] sm:$0x7f] %vm1581, %v2428
        %2459 = vst.msk [vmem:[#allocation2 + $0xc1] sm:$0xff] %vm583, %v2429
        %2460 = vst.msk [vmem:[#allocation2 + $0xc9] sm:$0x7f] %vm1581, %v2430
        %2461 = vst.msk [vmem:[#allocation2 + $0xd1] sm:$0xff] %vm583, %v2431
        %2462 = vst.msk [vmem:[#allocation2 + $0xd9] sm:$0x7f] %vm1581, %v2432
        %2463 = vst.msk [vmem:[#allocation2 + $0xe1] sm:$0xff] %vm583, %v2433
        %2464 = vst.msk [vmem:[#allocation2 + $0xe9] sm:$0x7f] %vm1581, %v2434
        %v2465 = vld [vmem:[#allocation2] sm:$0xff]
        %v2466 = vld [vmem:[#allocation2 + $0x8] sm:$0xff]
        %v2467 = vld [vmem:[#allocation2 + $0x10] sm:$0xff]
        %v2468 = vld [vmem:[#allocation2 + $0x18] sm:$0xff]
        %v2469 = vld [vmem:[#allocation2 + $0x20] sm:$0xff]
        %v2470 = vld [vmem:[#allocation2 + $0x28] sm:$0xff]
        %v2471 = vld [vmem:[#allocation2 + $0x30] sm:$0xff]
        %v2472 = vld [vmem:[#allocation2 + $0x38] sm:$0xff]
        %v2473 = vld [vmem:[#allocation2 + $0x40] sm:$0xff]
        %v2474 = vld [vmem:[#allocation2 + $0x48] sm:$0xff]
        %v2475 = vld [vmem:[#allocation2 + $0x50] sm:$0xff]
        %v2476 = vld [vmem:[#allocation2 + $0x58] sm:$0xff]
        %v2477 = vld [vmem:[#allocation2 + $0x60] sm:$0xff]
        %v2478 = vld [vmem:[#allocation2 + $0x68] sm:$0xff]
        %v2479 = vld [vmem:[#allocation2 + $0x70] sm:$0xff]
        %v2480 = vld [vmem:[#allocation2 + $0x78] sm:$0xff]
        %v2481 = vld [vmem:[#allocation2 + $0x80] sm:$0xff]
        %v2482 = vld [vmem:[#allocation2 + $0x88] sm:$0xff]
        %v2483 = vld [vmem:[#allocation2 + $0x90] sm:$0xff]
        %v2484 = vld [vmem:[#allocation2 + $0x98] sm:$0xff]
        %v2485 = vld [vmem:[#allocation2 + $0xa0] sm:$0xff]
        %v2486 = vld [vmem:[#allocation2 + $0xa8] sm:$0xff]
        %v2487 = vld [vmem:[#allocation2 + $0xb0] sm:$0xff]
        %v2488 = vld [vmem:[#allocation2 + $0xb8] sm:$0xff]
        %v2489 = vld [vmem:[#allocation2 + $0xc0] sm:$0xff]
        %v2490 = vld [vmem:[#allocation2 + $0xc8] sm:$0xff]
        %v2491 = vld [vmem:[#allocation2 + $0xd0] sm:$0xff]
        %v2492 = vld [vmem:[#allocation2 + $0xd8] sm:$0xff]
        %v2493 = vld [vmem:[#allocation2 + $0xe0] sm:$0xff]
        %v2494 = vld [vmem:[#allocation2 + $0xe8] sm:$0xff]
        %v2495 = vlaneseq
        %v2496 = vshrl.u32 %v2495, 7
        %v2497 = vsub.s32 7, %v2496
        %v2498 = vrot.slane %v1415, %v2497
        %v2499 = vmul.f32 %v1267, %v2498
        %v2500 = vmul.f32 %v1272, %v2498
        %v2501 = vmul.f32 %v1277, %v2498
        %v2502 = vmul.f32 %v1282, %v2498
        %v2503 = vmul.f32 %v1287, %v2498
        %v2504 = vmul.f32 %v1292, %v2498
        %v2505 = vmul.f32 %v1297, %v2498
        %v2506 = vmul.f32 %v1302, %v2498
        %v2507 = vmul.f32 %v1307, %v2498
        %v2508 = vmul.f32 %v1312, %v2498
        %v2509 = vmul.f32 %v1317, %v2498
        %v2510 = vmul.f32 %v1322, %v2498
        %v2511 = vmul.f32 %v1327, %v2498
        %v2512 = vmul.f32 %v1332, %v2498
        %v2513 = vmul.f32 %v1337, %v2498
        %v2514 = vmul.f32 %v1342, %v2498
        %v2515 = vmul.f32 %v1347, %v2498
        %v2516 = vmul.f32 %v1352, %v2498
        %v2517 = vmul.f32 %v1357, %v2498
        %v2518 = vmul.f32 %v1362, %v2498
        %v2519 = vmul.f32 %v1367, %v2498
        %v2520 = vmul.f32 %v1372, %v2498
        %v2521 = vmul.f32 %v1377, %v2498
        %v2522 = vmul.f32 %v1382, %v2498
        %v2523 = vmul.f32 %v1387, %v2498
        %v2524 = vmul.f32 %v1392, %v2498
        %v2525 = vmul.f32 %v1397, %v2498
        %v2526 = vmul.f32 %v1402, %v2498
        %v2527 = vmul.f32 %v1407, %v2498
        %v2528 = vmul.f32 %v1412, %v2498
        %v2529 = vadd.f32 %v2465, %v2499
        %v2530 = vadd.f32 %v2466, %v2500
        %v2531 = vadd.f32 %v2467, %v2501
        %v2532 = vadd.f32 %v2468, %v2502
        %v2533 = vadd.f32 %v2469, %v2503
        %v2534 = vadd.f32 %v2470, %v2504
        %v2535 = vadd.f32 %v2471, %v2505
        %v2536 = vadd.f32 %v2472, %v2506
        %v2537 = vadd.f32 %v2473, %v2507
        %v2538 = vadd.f32 %v2474, %v2508
        %v2539 = vadd.f32 %v2475, %v2509
        %v2540 = vadd.f32 %v2476, %v2510
        %v2541 = vadd.f32 %v2477, %v2511
        %v2542 = vadd.f32 %v2478, %v2512
        %v2543 = vadd.f32 %v2479, %v2513
        %v2544 = vadd.f32 %v2480, %v2514
        %v2545 = vadd.f32 %v2481, %v2515
        %v2546 = vadd.f32 %v2482, %v2516
        %v2547 = vadd.f32 %v2483, %v2517
        %v2548 = vadd.f32 %v2484, %v2518
        %v2549 = vadd.f32 %v2485, %v2519
        %v2550 = vadd.f32 %v2486, %v2520
        %v2551 = vadd.f32 %v2487, %v2521
        %v2552 = vadd.f32 %v2488, %v2522
        %v2553 = vadd.f32 %v2489, %v2523
        %v2554 = vadd.f32 %v2490, %v2524
        %v2555 = vadd.f32 %v2491, %v2525
        %v2556 = vadd.f32 %v2492, %v2526
        %v2557 = vadd.f32 %v2493, %v2527
        %v2558 = vadd.f32 %v2494, %v2528
        %2559 = vst.msk [vmem:[#allocation2] sm:$0xff] %vm583, %v2529
        %2560 = vst.msk [vmem:[#allocation2 + $0x8] sm:$0xff] %vm583, %v2530
        %2561 = vst.msk [vmem:[#allocation2 + $0x10] sm:$0xff] %vm583, %v2531
        %2562 = vst.msk [vmem:[#allocation2 + $0x18] sm:$0xff] %vm583, %v2532
        %2563 = vst.msk [vmem:[#allocation2 + $0x20] sm:$0xff] %vm583, %v2533
        %2564 = vst.msk [vmem:[#allocation2 + $0x28] sm:$0xff] %vm583, %v2534
        %2565 = vst.msk [vmem:[#allocation2 + $0x30] sm:$0xff] %vm583, %v2535
        %2566 = vst.msk [vmem:[#allocation2 + $0x38] sm:$0xff] %vm583, %v2536
        %2567 = vst.msk [vmem:[#allocation2 + $0x40] sm:$0xff] %vm583, %v2537
        %2568 = vst.msk [vmem:[#allocation2 + $0x48] sm:$0xff] %vm583, %v2538
        %2569 = vst.msk [vmem:[#allocation2 + $0x50] sm:$0xff] %vm583, %v2539
        %2570 = vst.msk [vmem:[#allocation2 + $0x58] sm:$0xff] %vm583, %v2540
        %2571 = vst.msk [vmem:[#allocation2 + $0x60] sm:$0xff] %vm583, %v2541
        %2572 = vst.msk [vmem:[#allocation2 + $0x68] sm:$0xff] %vm583, %v2542
        %2573 = vst.msk [vmem:[#allocation2 + $0x70] sm:$0xff] %vm583, %v2543
        %2574 = vst.msk [vmem:[#allocation2 + $0x78] sm:$0xff] %vm583, %v2544
        %2575 = vst.msk [vmem:[#allocation2 + $0x80] sm:$0xff] %vm583, %v2545
        %2576 = vst.msk [vmem:[#allocation2 + $0x88] sm:$0xff] %vm583, %v2546
        %2577 = vst.msk [vmem:[#allocation2 + $0x90] sm:$0xff] %vm583, %v2547
        %2578 = vst.msk [vmem:[#allocation2 + $0x98] sm:$0xff] %vm583, %v2548
        %2579 = vst.msk [vmem:[#allocation2 + $0xa0] sm:$0xff] %vm583, %v2549
        %2580 = vst.msk [vmem:[#allocation2 + $0xa8] sm:$0xff] %vm583, %v2550
        %2581 = vst.msk [vmem:[#allocation2 + $0xb0] sm:$0xff] %vm583, %v2551
        %2582 = vst.msk [vmem:[#allocation2 + $0xb8] sm:$0xff] %vm583, %v2552
        %2583 = vst.msk [vmem:[#allocation2 + $0xc0] sm:$0xff] %vm583, %v2553
        %2584 = vst.msk [vmem:[#allocation2 + $0xc8] sm:$0xff] %vm583, %v2554
        %2585 = vst.msk [vmem:[#allocation2 + $0xd0] sm:$0xff] %vm583, %v2555
        %2586 = vst.msk [vmem:[#allocation2 + $0xd8] sm:$0xff] %vm583, %v2556
        %2587 = vst.msk [vmem:[#allocation2 + $0xe0] sm:$0xff] %vm583, %v2557
        %2588 = vst.msk [vmem:[#allocation2 + $0xe8] sm:$0xff] %vm583, %v2558
        %v2589 = vld [vmem:[#allocation2] sm:$0xff]
        %v2590 = vld [vmem:[#allocation2 + $0x8] sm:$0x7f]
        %v2591 = vld [vmem:[#allocation2 + $0x10] sm:$0xff]
        %v2592 = vld [vmem:[#allocation2 + $0x18] sm:$0x7f]
        %v2593 = vld [vmem:[#allocation2 + $0x20] sm:$0xff]
        %v2594 = vld [vmem:[#allocation2 + $0x28] sm:$0x7f]
        %v2595 = vld [vmem:[#allocation2 + $0x30] sm:$0xff]
        %v2596 = vld [vmem:[#allocation2 + $0x38] sm:$0x7f]
        %v2597 = vld [vmem:[#allocation2 + $0x40] sm:$0xff]
        %v2598 = vld [vmem:[#allocation2 + $0x48] sm:$0x7f]
        %v2599 = vld [vmem:[#allocation2 + $0x50] sm:$0xff]
        %v2600 = vld [vmem:[#allocation2 + $0x58] sm:$0x7f]
        %v2601 = vld [vmem:[#allocation2 + $0x60] sm:$0xff]
        %v2602 = vld [vmem:[#allocation2 + $0x68] sm:$0x7f]
        %v2603 = vld [vmem:[#allocation2 + $0x70] sm:$0xff]
        %v2604 = vld [vmem:[#allocation2 + $0x78] sm:$0x7f]
        %v2605 = vld [vmem:[#allocation2 + $0x80] sm:$0xff]
        %v2606 = vld [vmem:[#allocation2 + $0x88] sm:$0x7f]
        %v2607 = vld [vmem:[#allocation2 + $0x90] sm:$0xff]
        %v2608 = vld [vmem:[#allocation2 + $0x98] sm:$0x7f]
        %v2609 = vld [vmem:[#allocation2 + $0xa0] sm:$0xff]
        %v2610 = vld [vmem:[#allocation2 + $0xa8] sm:$0x7f]
        %v2611 = vld [vmem:[#allocation2 + $0xb0] sm:$0xff]
        %v2612 = vld [vmem:[#allocation2 + $0xb8] sm:$0x7f]
        %v2613 = vld [vmem:[#allocation2 + $0xc0] sm:$0xff]
        %v2614 = vld [vmem:[#allocation2 + $0xc8] sm:$0x7f]
        %v2615 = vld [vmem:[#allocation2 + $0xd0] sm:$0xff]
        %v2616 = vld [vmem:[#allocation2 + $0xd8] sm:$0x7f]
        %v2617 = vld [vmem:[#allocation2 + $0xe0] sm:$0xff]
        %v2618 = vld [vmem:[#allocation2 + $0xe8] sm:$0x7f]
        %v2619 = vlaneseq
        %v2620 = vshrl.u32 %v2619, 7
        %v2621 = vsub.s32 0, %v2620
        %v2622 = vrot.slane %v1416, %v2621
        %v2623 = vmul.f32 %v1267, %v2622
        %v2624 = vmul.f32 %v1272, %v2622
        %v2625 = vmul.f32 %v1277, %v2622
        %v2626 = vmul.f32 %v1282, %v2622
        %v2627 = vmul.f32 %v1287, %v2622
        %v2628 = vmul.f32 %v1292, %v2622
        %v2629 = vmul.f32 %v1297, %v2622
        %v2630 = vmul.f32 %v1302, %v2622
        %v2631 = vmul.f32 %v1307, %v2622
        %v2632 = vmul.f32 %v1312, %v2622
        %v2633 = vmul.f32 %v1317, %v2622
        %v2634 = vmul.f32 %v1322, %v2622
        %v2635 = vmul.f32 %v1327, %v2622
        %v2636 = vmul.f32 %v1332, %v2622
        %v2637 = vmul.f32 %v1337, %v2622
        %v2638 = vmul.f32 %v1342, %v2622
        %v2639 = vmul.f32 %v1347, %v2622
        %v2640 = vmul.f32 %v1352, %v2622
        %v2641 = vmul.f32 %v1357, %v2622
        %v2642 = vmul.f32 %v1362, %v2622
        %v2643 = vmul.f32 %v1367, %v2622
        %v2644 = vmul.f32 %v1372, %v2622
        %v2645 = vmul.f32 %v1377, %v2622
        %v2646 = vmul.f32 %v1382, %v2622
        %v2647 = vmul.f32 %v1387, %v2622
        %v2648 = vmul.f32 %v1392, %v2622
        %v2649 = vmul.f32 %v1397, %v2622
        %v2650 = vmul.f32 %v1402, %v2622
        %v2651 = vmul.f32 %v1407, %v2622
        %v2652 = vmul.f32 %v1412, %v2622
        %v2683 = vrot.slane %v2623, 1
        %v2684 = vrot.slane %v2624, 1
        %v2685 = vsel %vm1829, %v2683, %v2684
        %v2686 = vrot.slane %v2625, 1
        %v2687 = vrot.slane %v2626, 1
        %v2688 = vsel %vm1829, %v2686, %v2687
        %v2689 = vrot.slane %v2627, 1
        %v2690 = vrot.slane %v2628, 1
        %v2691 = vsel %vm1829, %v2689, %v2690
        %v2692 = vrot.slane %v2629, 1
        %v2693 = vrot.slane %v2630, 1
        %v2694 = vsel %vm1829, %v2692, %v2693
        %v2695 = vrot.slane %v2631, 1
        %v2696 = vrot.slane %v2632, 1
        %v2697 = vsel %vm1829, %v2695, %v2696
        %v2698 = vrot.slane %v2633, 1
        %v2699 = vrot.slane %v2634, 1
        %v2700 = vsel %vm1829, %v2698, %v2699
        %v2701 = vrot.slane %v2635, 1
        %v2702 = vrot.slane %v2636, 1
        %v2703 = vsel %vm1829, %v2701, %v2702
        %v2704 = vrot.slane %v2637, 1
        %v2705 = vrot.slane %v2638, 1
        %v2706 = vsel %vm1829, %v2704, %v2705
        %v2707 = vrot.slane %v2639, 1
        %v2708 = vrot.slane %v2640, 1
        %v2709 = vsel %vm1829, %v2707, %v2708
        %v2710 = vrot.slane %v2641, 1
        %v2711 = vrot.slane %v2642, 1
        %v2712 = vsel %vm1829, %v2710, %v2711
        %v2713 = vrot.slane %v2643, 1
        %v2714 = vrot.slane %v2644, 1
        %v2715 = vsel %vm1829, %v2713, %v2714
        %v2716 = vrot.slane %v2645, 1
        %v2717 = vrot.slane %v2646, 1
        %v2718 = vsel %vm1829, %v2716, %v2717
        %v2719 = vrot.slane %v2647, 1
        %v2720 = vrot.slane %v2648, 1
        %v2721 = vsel %vm1829, %v2719, %v2720
        %v2722 = vrot.slane %v2649, 1
        %v2723 = vrot.slane %v2650, 1
        %v2724 = vsel %vm1829, %v2722, %v2723
        %v2725 = vrot.slane %v2651, 1
        %v2726 = vrot.slane %v2652, 1
        %v2727 = vsel %vm1829, %v2725, %v2726
        %v2758 = vadd.f32 %v2589, %v2685
        %v2759 = vadd.f32 %v2590, %v2684
        %v2760 = vadd.f32 %v2591, %v2688
        %v2761 = vadd.f32 %v2592, %v2687
        %v2762 = vadd.f32 %v2593, %v2691
        %v2763 = vadd.f32 %v2594, %v2690
        %v2764 = vadd.f32 %v2595, %v2694
        %v2765 = vadd.f32 %v2596, %v2693
        %v2766 = vadd.f32 %v2597, %v2697
        %v2767 = vadd.f32 %v2598, %v2696
        %v2768 = vadd.f32 %v2599, %v2700
        %v2769 = vadd.f32 %v2600, %v2699
        %v2770 = vadd.f32 %v2601, %v2703
        %v2771 = vadd.f32 %v2602, %v2702
        %v2772 = vadd.f32 %v2603, %v2706
        %v2773 = vadd.f32 %v2604, %v2705
        %v2774 = vadd.f32 %v2605, %v2709
        %v2775 = vadd.f32 %v2606, %v2708
        %v2776 = vadd.f32 %v2607, %v2712
        %v2777 = vadd.f32 %v2608, %v2711
        %v2778 = vadd.f32 %v2609, %v2715
        %v2779 = vadd.f32 %v2610, %v2714
        %v2780 = vadd.f32 %v2611, %v2718
        %v2781 = vadd.f32 %v2612, %v2717
        %v2782 = vadd.f32 %v2613, %v2721
        %v2783 = vadd.f32 %v2614, %v2720
        %v2784 = vadd.f32 %v2615, %v2724
        %v2785 = vadd.f32 %v2616, %v2723
        %v2786 = vadd.f32 %v2617, %v2727
        %v2787 = vadd.f32 %v2618, %v2726
        %2788 = vst.msk [vmem:[#allocation2] sm:$0xff] %vm583, %v2758
        %2789 = vst.msk [vmem:[#allocation2 + $0x8] sm:$0x7f] %vm1581, %v2759
        %2790 = vst.msk [vmem:[#allocation2 + $0x10] sm:$0xff] %vm583, %v2760
        %2791 = vst.msk [vmem:[#allocation2 + $0x18] sm:$0x7f] %vm1581, %v2761
        %2792 = vst.msk [vmem:[#allocation2 + $0x20] sm:$0xff] %vm583, %v2762
        %2793 = vst.msk [vmem:[#allocation2 + $0x28] sm:$0x7f] %vm1581, %v2763
        %2794 = vst.msk [vmem:[#allocation2 + $0x30] sm:$0xff] %vm583, %v2764
        %2795 = vst.msk [vmem:[#allocation2 + $0x38] sm:$0x7f] %vm1581, %v2765
        %2796 = vst.msk [vmem:[#allocation2 + $0x40] sm:$0xff] %vm583, %v2766
        %2797 = vst.msk [vmem:[#allocation2 + $0x48] sm:$0x7f] %vm1581, %v2767
        %2798 = vst.msk [vmem:[#allocation2 + $0x50] sm:$0xff] %vm583, %v2768
        %2799 = vst.msk [vmem:[#allocation2 + $0x58] sm:$0x7f] %vm1581, %v2769
        %2800 = vst.msk [vmem:[#allocation2 + $0x60] sm:$0xff] %vm583, %v2770
        %2801 = vst.msk [vmem:[#allocation2 + $0x68] sm:$0x7f] %vm1581, %v2771
        %2802 = vst.msk [vmem:[#allocation2 + $0x70] sm:$0xff] %vm583, %v2772
        %2803 = vst.msk [vmem:[#allocation2 + $0x78] sm:$0x7f] %vm1581, %v2773
        %2804 = vst.msk [vmem:[#allocation2 + $0x80] sm:$0xff] %vm583, %v2774
        %2805 = vst.msk [vmem:[#allocation2 + $0x88] sm:$0x7f] %vm1581, %v2775
        %2806 = vst.msk [vmem:[#allocation2 + $0x90] sm:$0xff] %vm583, %v2776
        %2807 = vst.msk [vmem:[#allocation2 + $0x98] sm:$0x7f] %vm1581, %v2777
        %2808 = vst.msk [vmem:[#allocation2 + $0xa0] sm:$0xff] %vm583, %v2778
        %2809 = vst.msk [vmem:[#allocation2 + $0xa8] sm:$0x7f] %vm1581, %v2779
        %2810 = vst.msk [vmem:[#allocation2 + $0xb0] sm:$0xff] %vm583, %v2780
        %2811 = vst.msk [vmem:[#allocation2 + $0xb8] sm:$0x7f] %vm1581, %v2781
        %2812 = vst.msk [vmem:[#allocation2 + $0xc0] sm:$0xff] %vm583, %v2782
        %2813 = vst.msk [vmem:[#allocation2 + $0xc8] sm:$0x7f] %vm1581, %v2783
        %2814 = vst.msk [vmem:[#allocation2 + $0xd0] sm:$0xff] %vm583, %v2784
        %2815 = vst.msk [vmem:[#allocation2 + $0xd8] sm:$0x7f] %vm1581, %v2785
        %2816 = vst.msk [vmem:[#allocation2 + $0xe0] sm:$0xff] %vm583, %v2786
        %2817 = vst.msk [vmem:[#allocation2 + $0xe8] sm:$0x7f] %vm1581, %v2787
        %v2818 = vld [vmem:[#allocation2] sm:$0xff]
        %v2819 = vld [vmem:[#allocation2 + $0x8] sm:$0xff]
        %v2820 = vld [vmem:[#allocation2 + $0x10] sm:$0xff]
        %v2821 = vld [vmem:[#allocation2 + $0x18] sm:$0xff]
        %v2822 = vld [vmem:[#allocation2 + $0x20] sm:$0xff]
        %v2823 = vld [vmem:[#allocation2 + $0x28] sm:$0xff]
        %v2824 = vld [vmem:[#allocation2 + $0x30] sm:$0xff]
        %v2825 = vld [vmem:[#allocation2 + $0x38] sm:$0xff]
        %v2826 = vld [vmem:[#allocation2 + $0x40] sm:$0xff]
        %v2827 = vld [vmem:[#allocation2 + $0x48] sm:$0xff]
        %v2828 = vld [vmem:[#allocation2 + $0x50] sm:$0xff]
        %v2829 = vld [vmem:[#allocation2 + $0x58] sm:$0xff]
        %v2830 = vld [vmem:[#allocation2 + $0x60] sm:$0xff]
        %v2831 = vld [vmem:[#allocation2 + $0x68] sm:$0xff]
        %v2832 = vld [vmem:[#allocation2 + $0x70] sm:$0xff]
        %v2833 = vld [vmem:[#allocation2 + $0x78] sm:$0xff]
        %v2834 = vld [vmem:[#allocation2 + $0x80] sm:$0xff]
        %v2835 = vld [vmem:[#allocation2 + $0x88] sm:$0xff]
        %v2836 = vld [vmem:[#allocation2 + $0x90] sm:$0xff]
        %v2837 = vld [vmem:[#allocation2 + $0x98] sm:$0xff]
        %v2838 = vld [vmem:[#allocation2 + $0xa0] sm:$0xff]
        %v2839 = vld [vmem:[#allocation2 + $0xa8] sm:$0xff]
        %v2840 = vld [vmem:[#allocation2 + $0xb0] sm:$0xff]
        %v2841 = vld [vmem:[#allocation2 + $0xb8] sm:$0xff]
        %v2842 = vld [vmem:[#allocation2 + $0xc0] sm:$0xff]
        %v2843 = vld [vmem:[#allocation2 + $0xc8] sm:$0xff]
        %v2844 = vld [vmem:[#allocation2 + $0xd0] sm:$0xff]
        %v2845 = vld [vmem:[#allocation2 + $0xd8] sm:$0xff]
        %v2846 = vld [vmem:[#allocation2 + $0xe0] sm:$0xff]
        %v2847 = vld [vmem:[#allocation2 + $0xe8] sm:$0xff]
        %v2848 = vld [vmem:[#allocation2 + $0xf0] sm:$0xff]
        %v2849 = vld [vmem:[#allocation2 + $0xf8] sm:$0xff]
        %2882 = vrot.lane.b32.xlu0 %v2818, 96
        %v2883 = vpop.permute.xlu0 %2882
        %2884 = vrot.lane.b32.xlu0 %v2819, 96
        %v2885 = vpop.permute.xlu0 %2884
        %2886 = vrot.lane.b32.xlu0 %v2820, 96
        %v2887 = vpop.permute.xlu0 %2886
        %2888 = vrot.lane.b32.xlu0 %v2821, 96
        %v2889 = vpop.permute.xlu0 %2888
        %2890 = vrot.lane.b32.xlu0 %v2822, 96
        %v2891 = vpop.permute.xlu0 %2890
        %2892 = vrot.lane.b32.xlu0 %v2823, 96
        %v2893 = vpop.permute.xlu0 %2892
        %2894 = vrot.lane.b32.xlu0 %v2824, 96
        %v2895 = vpop.permute.xlu0 %2894
        %2896 = vrot.lane.b32.xlu0 %v2825, 96
        %v2897 = vpop.permute.xlu0 %2896
        %2898 = vrot.lane.b32.xlu0 %v2826, 96
        %v2899 = vpop.permute.xlu0 %2898
        %2900 = vrot.lane.b32.xlu0 %v2827, 96
        %v2901 = vpop.permute.xlu0 %2900
        %2902 = vrot.lane.b32.xlu0 %v2828, 96
        %v2903 = vpop.permute.xlu0 %2902
        %2904 = vrot.lane.b32.xlu0 %v2829, 96
        %v2905 = vpop.permute.xlu0 %2904
        %2906 = vrot.lane.b32.xlu0 %v2830, 96
        %v2907 = vpop.permute.xlu0 %2906
        %2908 = vrot.lane.b32.xlu0 %v2831, 96
        %v2909 = vpop.permute.xlu0 %2908
        %2910 = vrot.lane.b32.xlu0 %v2832, 96
        %v2911 = vpop.permute.xlu0 %2910
        %2912 = vrot.lane.b32.xlu0 %v2833, 96
        %v2913 = vpop.permute.xlu0 %2912
        %2914 = vrot.lane.b32.xlu0 %v2834, 96
        %v2915 = vpop.permute.xlu0 %2914
        %2916 = vrot.lane.b32.xlu0 %v2835, 96
        %v2917 = vpop.permute.xlu0 %2916
        %2918 = vrot.lane.b32.xlu0 %v2836, 96
        %v2919 = vpop.permute.xlu0 %2918
        %2920 = vrot.lane.b32.xlu0 %v2837, 96
        %v2921 = vpop.permute.xlu0 %2920
        %2922 = vrot.lane.b32.xlu0 %v2838, 96
        %v2923 = vpop.permute.xlu0 %2922
        %2924 = vrot.lane.b32.xlu0 %v2839, 96
        %v2925 = vpop.permute.xlu0 %2924
        %2926 = vrot.lane.b32.xlu0 %v2840, 96
        %v2927 = vpop.permute.xlu0 %2926
        %2928 = vrot.lane.b32.xlu0 %v2841, 96
        %v2929 = vpop.permute.xlu0 %2928
        %2930 = vrot.lane.b32.xlu0 %v2842, 96
        %v2931 = vpop.permute.xlu0 %2930
        %2932 = vrot.lane.b32.xlu0 %v2843, 96
        %v2933 = vpop.permute.xlu0 %2932
        %2934 = vrot.lane.b32.xlu0 %v2844, 96
        %v2935 = vpop.permute.xlu0 %2934
        %2936 = vrot.lane.b32.xlu0 %v2845, 96
        %v2937 = vpop.permute.xlu0 %2936
        %2938 = vrot.lane.b32.xlu0 %v2846, 96
        %v2939 = vpop.permute.xlu0 %2938
        %2940 = vrot.lane.b32.xlu0 %v2847, 96
        %v2941 = vpop.permute.xlu0 %2940
        %2942 = vrot.lane.b32.xlu0 %v2848, 96
        %v2943 = vpop.permute.xlu0 %2942
        %2944 = vrot.lane.b32.xlu0 %v2849, 96
        %v2945 = vpop.permute.xlu0 %2944
        %vm2978 = vcmask 261120
        %v2979 = vsel %vm2978, %v2883, 0.0
        %2980 = vadd.xlane.f32.xlu0 %v2979
        %v2981 = vpop.xlane.xlu0 %2980
        %v2982 = vsel %vm2978, %v2885, 0.0
        %2983 = vadd.xlane.f32.xlu0 %v2982
        %v2984 = vpop.xlane.xlu0 %2983
        %v2985 = vsel %vm2978, %v2887, 0.0
        %2986 = vadd.xlane.f32.xlu0 %v2985
        %v2987 = vpop.xlane.xlu0 %2986
        %v2988 = vsel %vm2978, %v2889, 0.0
        %2989 = vadd.xlane.f32.xlu0 %v2988
        %v2990 = vpop.xlane.xlu0 %2989
        %v2991 = vsel %vm2978, %v2891, 0.0
        %2992 = vadd.xlane.f32.xlu0 %v2991
        %v2993 = vpop.xlane.xlu0 %2992
        %v2994 = vsel %vm2978, %v2893, 0.0
        %2995 = vadd.xlane.f32.xlu0 %v2994
        %v2996 = vpop.xlane.xlu0 %2995
        %v2997 = vsel %vm2978, %v2895, 0.0
        %2998 = vadd.xlane.f32.xlu0 %v2997
        %v2999 = vpop.xlane.xlu0 %2998
        %v3000 = vsel %vm2978, %v2897, 0.0
        %3001 = vadd.xlane.f32.xlu0 %v3000
        %v3002 = vpop.xlane.xlu0 %3001
        %v3003 = vsel %vm2978, %v2899, 0.0
        %3004 = vadd.xlane.f32.xlu0 %v3003
        %v3005 = vpop.xlane.xlu0 %3004
        %v3006 = vsel %vm2978, %v2901, 0.0
        %3007 = vadd.xlane.f32.xlu0 %v3006
        %v3008 = vpop.xlane.xlu0 %3007
        %v3009 = vsel %vm2978, %v2903, 0.0
        %3010 = vadd.xlane.f32.xlu0 %v3009
        %v3011 = vpop.xlane.xlu0 %3010
        %v3012 = vsel %vm2978, %v2905, 0.0
        %3013 = vadd.xlane.f32.xlu0 %v3012
        %v3014 = vpop.xlane.xlu0 %3013
        %v3015 = vsel %vm2978, %v2907, 0.0
        %3016 = vadd.xlane.f32.xlu0 %v3015
        %v3017 = vpop.xlane.xlu0 %3016
        %v3018 = vsel %vm2978, %v2909, 0.0
        %3019 = vadd.xlane.f32.xlu0 %v3018
        %v3020 = vpop.xlane.xlu0 %3019
        %v3021 = vsel %vm2978, %v2911, 0.0
        %3022 = vadd.xlane.f32.xlu0 %v3021
        %v3023 = vpop.xlane.xlu0 %3022
        %v3024 = vsel %vm2978, %v2913, 0.0
        %3025 = vadd.xlane.f32.xlu0 %v3024
        %v3026 = vpop.xlane.xlu0 %3025
        %v3027 = vsel %vm2978, %v2915, 0.0
        %3028 = vadd.xlane.f32.xlu0 %v3027
        %v3029 = vpop.xlane.xlu0 %3028
        %v3030 = vsel %vm2978, %v2917, 0.0
        %3031 = vadd.xlane.f32.xlu0 %v3030
        %v3032 = vpop.xlane.xlu0 %3031
        %v3033 = vsel %vm2978, %v2919, 0.0
        %3034 = vadd.xlane.f32.xlu0 %v3033
        %v3035 = vpop.xlane.xlu0 %3034
        %v3036 = vsel %vm2978, %v2921, 0.0
        %3037 = vadd.xlane.f32.xlu0 %v3036
        %v3038 = vpop.xlane.xlu0 %3037
        %v3039 = vsel %vm2978, %v2923, 0.0
        %3040 = vadd.xlane.f32.xlu0 %v3039
        %v3041 = vpop.xlane.xlu0 %3040
        %v3042 = vsel %vm2978, %v2925, 0.0
        %3043 = vadd.xlane.f32.xlu0 %v3042
        %v3044 = vpop.xlane.xlu0 %3043
        %v3045 = vsel %vm2978, %v2927, 0.0
        %3046 = vadd.xlane.f32.xlu0 %v3045
        %v3047 = vpop.xlane.xlu0 %3046
        %v3048 = vsel %vm2978, %v2929, 0.0
        %3049 = vadd.xlane.f32.xlu0 %v3048
        %v3050 = vpop.xlane.xlu0 %3049
        %v3051 = vsel %vm2978, %v2931, 0.0
        %3052 = vadd.xlane.f32.xlu0 %v3051
        %v3053 = vpop.xlane.xlu0 %3052
        %v3054 = vsel %vm2978, %v2933, 0.0
        %3055 = vadd.xlane.f32.xlu0 %v3054
        %v3056 = vpop.xlane.xlu0 %3055
        %v3057 = vsel %vm2978, %v2935, 0.0
        %3058 = vadd.xlane.f32.xlu0 %v3057
        %v3059 = vpop.xlane.xlu0 %3058
        %v3060 = vsel %vm2978, %v2937, 0.0
        %3061 = vadd.xlane.f32.xlu0 %v3060
        %v3062 = vpop.xlane.xlu0 %3061
        %v3063 = vsel %vm2978, %v2939, 0.0
        %3064 = vadd.xlane.f32.xlu0 %v3063
        %v3065 = vpop.xlane.xlu0 %3064
        %v3066 = vsel %vm2978, %v2941, 0.0
        %3067 = vadd.xlane.f32.xlu0 %v3066
        %v3068 = vpop.xlane.xlu0 %3067
        %v3069 = vsel %vm2978, %v2943, 0.0
        %3070 = vadd.xlane.f32.xlu0 %v3069
        %v3071 = vpop.xlane.xlu0 %3070
        %v3072 = vsel %vm2978, %v2945, 0.0
        %3073 = vadd.xlane.f32.xlu0 %v3072
        %v3074 = vpop.xlane.xlu0 %3073
        %v3075 = vld [vmem:[#allocation3] sm:$0x1]
        %v3077 = vlaneseq
        %v3078 = vshrl.u32 %v3077, 7
        %v3079 = vsub.s32 0, %v3078
        %v3080 = vrot.slane %v3075, %v3079
        %v3082 = vadd.f32 %v2981, %v3080
        %v3083 = vadd.f32 %v2984, %v3080
        %v3084 = vadd.f32 %v2987, %v3080
        %v3085 = vadd.f32 %v2990, %v3080
        %v3086 = vadd.f32 %v2993, %v3080
        %v3087 = vadd.f32 %v2996, %v3080
        %v3088 = vadd.f32 %v2999, %v3080
        %v3089 = vadd.f32 %v3002, %v3080
        %v3090 = vadd.f32 %v3005, %v3080
        %v3091 = vadd.f32 %v3008, %v3080
        %v3092 = vadd.f32 %v3011, %v3080
        %v3093 = vadd.f32 %v3014, %v3080
        %v3094 = vadd.f32 %v3017, %v3080
        %v3095 = vadd.f32 %v3020, %v3080
        %v3096 = vadd.f32 %v3023, %v3080
        %v3097 = vadd.f32 %v3026, %v3080
        %v3098 = vadd.f32 %v3029, %v3080
        %v3099 = vadd.f32 %v3032, %v3080
        %v3100 = vadd.f32 %v3035, %v3080
        %v3101 = vadd.f32 %v3038, %v3080
        %v3102 = vadd.f32 %v3041, %v3080
        %v3103 = vadd.f32 %v3044, %v3080
        %v3104 = vadd.f32 %v3047, %v3080
        %v3105 = vadd.f32 %v3050, %v3080
        %v3106 = vadd.f32 %v3053, %v3080
        %v3107 = vadd.f32 %v3056, %v3080
        %v3108 = vadd.f32 %v3059, %v3080
        %v3109 = vadd.f32 %v3062, %v3080
        %v3110 = vadd.f32 %v3065, %v3080
        %v3111 = vadd.f32 %v3068, %v3080
        %v3112 = vadd.f32 %v3071, %v3080
        %v3113 = vadd.f32 %v3074, %v3080
        %v3114 = vxor.u32 %v3082, 2147483648
        %v3115 = vxor.u32 %v3083, 2147483648
        %v3116 = vxor.u32 %v3084, 2147483648
        %v3117 = vxor.u32 %v3085, 2147483648
        %v3118 = vxor.u32 %v3086, 2147483648
        %v3119 = vxor.u32 %v3087, 2147483648
        %v3120 = vxor.u32 %v3088, 2147483648
        %v3121 = vxor.u32 %v3089, 2147483648
        %v3122 = vxor.u32 %v3090, 2147483648
        %v3123 = vxor.u32 %v3091, 2147483648
        %v3124 = vxor.u32 %v3092, 2147483648
        %v3125 = vxor.u32 %v3093, 2147483648
        %v3126 = vxor.u32 %v3094, 2147483648
        %v3127 = vxor.u32 %v3095, 2147483648
        %v3128 = vxor.u32 %v3096, 2147483648
        %v3129 = vxor.u32 %v3097, 2147483648
        %v3130 = vxor.u32 %v3098, 2147483648
        %v3131 = vxor.u32 %v3099, 2147483648
        %v3132 = vxor.u32 %v3100, 2147483648
        %v3133 = vxor.u32 %v3101, 2147483648
        %v3134 = vxor.u32 %v3102, 2147483648
        %v3135 = vxor.u32 %v3103, 2147483648
        %v3136 = vxor.u32 %v3104, 2147483648
        %v3137 = vxor.u32 %v3105, 2147483648
        %v3138 = vxor.u32 %v3106, 2147483648
        %v3139 = vxor.u32 %v3107, 2147483648
        %v3140 = vxor.u32 %v3108, 2147483648
        %v3141 = vxor.u32 %v3109, 2147483648
        %v3142 = vxor.u32 %v3110, 2147483648
        %v3143 = vxor.u32 %v3111, 2147483648
        %v3144 = vxor.u32 %v3112, 2147483648
        %v3145 = vxor.u32 %v3113, 2147483648
        %v3146 = vmul.f32 %v3114, 1.442695
        %v3147 = vpow.pop %v3146
        %v3148 = vmul.f32 %v3115, 1.442695
        %v3149 = vpow.pop %v3148
        %v3150 = vmul.f32 %v3116, 1.442695
        %v3151 = vpow.pop %v3150
        %v3152 = vmul.f32 %v3117, 1.442695
        %v3153 = vpow.pop %v3152
        %v3154 = vmul.f32 %v3118, 1.442695
        %v3155 = vpow.pop %v3154
        %v3156 = vmul.f32 %v3119, 1.442695
        %v3157 = vpow.pop %v3156
        %v3158 = vmul.f32 %v3120, 1.442695
        %v3159 = vpow.pop %v3158
        %v3160 = vmul.f32 %v3121, 1.442695
        %v3161 = vpow.pop %v3160
        %v3162 = vmul.f32 %v3122, 1.442695
        %v3163 = vpow.pop %v3162
        %v3164 = vmul.f32 %v3123, 1.442695
        %v3165 = vpow.pop %v3164
        %v3166 = vmul.f32 %v3124, 1.442695
        %v3167 = vpow.pop %v3166
        %v3168 = vmul.f32 %v3125, 1.442695
        %v3169 = vpow.pop %v3168
        %v3170 = vmul.f32 %v3126, 1.442695
        %v3171 = vpow.pop %v3170
        %v3172 = vmul.f32 %v3127, 1.442695
        %v3173 = vpow.pop %v3172
        %v3174 = vmul.f32 %v3128, 1.442695
        %v3175 = vpow.pop %v3174
        %v3176 = vmul.f32 %v3129, 1.442695
        %v3177 = vpow.pop %v3176
        %v3178 = vmul.f32 %v3130, 1.442695
        %v3179 = vpow.pop %v3178
        %v3180 = vmul.f32 %v3131, 1.442695
        %v3181 = vpow.pop %v3180
        %v3182 = vmul.f32 %v3132, 1.442695
        %v3183 = vpow.pop %v3182
        %v3184 = vmul.f32 %v3133, 1.442695
        %v3185 = vpow.pop %v3184
        %v3186 = vmul.f32 %v3134, 1.442695
        %v3187 = vpow.pop %v3186
        %v3188 = vmul.f32 %v3135, 1.442695
        %v3189 = vpow.pop %v3188
        %v3190 = vmul.f32 %v3136, 1.442695
        %v3191 = vpow.pop %v3190
        %v3192 = vmul.f32 %v3137, 1.442695
        %v3193 = vpow.pop %v3192
        %v3194 = vmul.f32 %v3138, 1.442695
        %v3195 = vpow.pop %v3194
        %v3196 = vmul.f32 %v3139, 1.442695
        %v3197 = vpow.pop %v3196
        %v3198 = vmul.f32 %v3140, 1.442695
        %v3199 = vpow.pop %v3198
        %v3200 = vmul.f32 %v3141, 1.442695
        %v3201 = vpow.pop %v3200
        %v3202 = vmul.f32 %v3142, 1.442695
        %v3203 = vpow.pop %v3202
        %v3204 = vmul.f32 %v3143, 1.442695
        %v3205 = vpow.pop %v3204
        %v3206 = vmul.f32 %v3144, 1.442695
        %v3207 = vpow.pop %v3206
        %v3208 = vmul.f32 %v3145, 1.442695
        %v3209 = vpow.pop %v3208
        %v3210 = vadd.f32 %v3147, 1.0
        %v3211 = vadd.f32 %v3149, 1.0
        %v3212 = vadd.f32 %v3151, 1.0
        %v3213 = vadd.f32 %v3153, 1.0
        %v3214 = vadd.f32 %v3155, 1.0
        %v3215 = vadd.f32 %v3157, 1.0
        %v3216 = vadd.f32 %v3159, 1.0
        %v3217 = vadd.f32 %v3161, 1.0
        %v3218 = vadd.f32 %v3163, 1.0
        %v3219 = vadd.f32 %v3165, 1.0
        %v3220 = vadd.f32 %v3167, 1.0
        %v3221 = vadd.f32 %v3169, 1.0
        %v3222 = vadd.f32 %v3171, 1.0
        %v3223 = vadd.f32 %v3173, 1.0
        %v3224 = vadd.f32 %v3175, 1.0
        %v3225 = vadd.f32 %v3177, 1.0
        %v3226 = vadd.f32 %v3179, 1.0
        %v3227 = vadd.f32 %v3181, 1.0
        %v3228 = vadd.f32 %v3183, 1.0
        %v3229 = vadd.f32 %v3185, 1.0
        %v3230 = vadd.f32 %v3187, 1.0
        %v3231 = vadd.f32 %v3189, 1.0
        %v3232 = vadd.f32 %v3191, 1.0
        %v3233 = vadd.f32 %v3193, 1.0
        %v3234 = vadd.f32 %v3195, 1.0
        %v3235 = vadd.f32 %v3197, 1.0
        %v3236 = vadd.f32 %v3199, 1.0
        %v3237 = vadd.f32 %v3201, 1.0
        %v3238 = vadd.f32 %v3203, 1.0
        %v3239 = vadd.f32 %v3205, 1.0
        %v3240 = vadd.f32 %v3207, 1.0
        %v3241 = vadd.f32 %v3209, 1.0
        %v3242 = vrcp.pop %v3210
        %v3243 = vmul.f32 1.0, %v3242
        %v3244 = vrcp.pop %v3211
        %v3245 = vmul.f32 1.0, %v3244
        %v3246 = vrcp.pop %v3212
        %v3247 = vmul.f32 1.0, %v3246
        %v3248 = vrcp.pop %v3213
        %v3249 = vmul.f32 1.0, %v3248
        %v3250 = vrcp.pop %v3214
        %v3251 = vmul.f32 1.0, %v3250
        %v3252 = vrcp.pop %v3215
        %v3253 = vmul.f32 1.0, %v3252
        %v3254 = vrcp.pop %v3216
        %v3255 = vmul.f32 1.0, %v3254
        %v3256 = vrcp.pop %v3217
        %v3257 = vmul.f32 1.0, %v3256
        %v3258 = vrcp.pop %v3218
        %v3259 = vmul.f32 1.0, %v3258
        %v3260 = vrcp.pop %v3219
        %v3261 = vmul.f32 1.0, %v3260
        %v3262 = vrcp.pop %v3220
        %v3263 = vmul.f32 1.0, %v3262
        %v3264 = vrcp.pop %v3221
        %v3265 = vmul.f32 1.0, %v3264
        %v3266 = vrcp.pop %v3222
        %v3267 = vmul.f32 1.0, %v3266
        %v3268 = vrcp.pop %v3223
        %v3269 = vmul.f32 1.0, %v3268
        %v3270 = vrcp.pop %v3224
        %v3271 = vmul.f32 1.0, %v3270
        %v3272 = vrcp.pop %v3225
        %v3273 = vmul.f32 1.0, %v3272
        %v3274 = vrcp.pop %v3226
        %v3275 = vmul.f32 1.0, %v3274
        %v3276 = vrcp.pop %v3227
        %v3277 = vmul.f32 1.0, %v3276
        %v3278 = vrcp.pop %v3228
        %v3279 = vmul.f32 1.0, %v3278
        %v3280 = vrcp.pop %v3229
        %v3281 = vmul.f32 1.0, %v3280
        %v3282 = vrcp.pop %v3230
        %v3283 = vmul.f32 1.0, %v3282
        %v3284 = vrcp.pop %v3231
        %v3285 = vmul.f32 1.0, %v3284
        %v3286 = vrcp.pop %v3232
        %v3287 = vmul.f32 1.0, %v3286
        %v3288 = vrcp.pop %v3233
        %v3289 = vmul.f32 1.0, %v3288
        %v3290 = vrcp.pop %v3234
        %v3291 = vmul.f32 1.0, %v3290
        %v3292 = vrcp.pop %v3235
        %v3293 = vmul.f32 1.0, %v3292
        %v3294 = vrcp.pop %v3236
        %v3295 = vmul.f32 1.0, %v3294
        %v3296 = vrcp.pop %v3237
        %v3297 = vmul.f32 1.0, %v3296
        %v3298 = vrcp.pop %v3238
        %v3299 = vmul.f32 1.0, %v3298
        %v3300 = vrcp.pop %v3239
        %v3301 = vmul.f32 1.0, %v3300
        %v3302 = vrcp.pop %v3240
        %v3303 = vmul.f32 1.0, %v3302
        %v3304 = vrcp.pop %v3241
        %v3305 = vmul.f32 1.0, %v3304
        %v3306 = vld [vmem:[#allocation9] sm:$0x1]
        %v3308 = vlaneseq
        %v3309 = vshrl.u32 %v3308, 7
        %v3310 = vsub.s32 0, %v3309
        %v3311 = vrot.slane %v3306, %v3310
        %v3313 = vadd.f32 %v2818, %v3311
        %v3314 = vadd.f32 %v2819, %v3311
        %v3315 = vadd.f32 %v2820, %v3311
        %v3316 = vadd.f32 %v2821, %v3311
        %v3317 = vadd.f32 %v2822, %v3311
        %v3318 = vadd.f32 %v2823, %v3311
        %v3319 = vadd.f32 %v2824, %v3311
        %v3320 = vadd.f32 %v2825, %v3311
        %v3321 = vadd.f32 %v2826, %v3311
        %v3322 = vadd.f32 %v2827, %v3311
        %v3323 = vadd.f32 %v2828, %v3311
        %v3324 = vadd.f32 %v2829, %v3311
        %v3325 = vadd.f32 %v2830, %v3311
        %v3326 = vadd.f32 %v2831, %v3311
        %v3327 = vadd.f32 %v2832, %v3311
        %v3328 = vadd.f32 %v2833, %v3311
        %v3329 = vadd.f32 %v2834, %v3311
        %v3330 = vadd.f32 %v2835, %v3311
        %v3331 = vadd.f32 %v2836, %v3311
        %v3332 = vadd.f32 %v2837, %v3311
        %v3333 = vadd.f32 %v2838, %v3311
        %v3334 = vadd.f32 %v2839, %v3311
        %v3335 = vadd.f32 %v2840, %v3311
        %v3336 = vadd.f32 %v2841, %v3311
        %v3337 = vadd.f32 %v2842, %v3311
        %v3338 = vadd.f32 %v2843, %v3311
        %v3339 = vadd.f32 %v2844, %v3311
        %v3340 = vadd.f32 %v2845, %v3311
        %v3341 = vadd.f32 %v2846, %v3311
        %v3342 = vadd.f32 %v2847, %v3311
        %v3343 = vadd.f32 %v2848, %v3311
        %v3344 = vadd.f32 %v2849, %v3311
        %v3345 = vmul.f32 %v3313, 0.5
        %v3346 = vmul.f32 %v3314, 0.5
        %v3347 = vmul.f32 %v3315, 0.5
        %v3348 = vmul.f32 %v3316, 0.5
        %v3349 = vmul.f32 %v3317, 0.5
        %v3350 = vmul.f32 %v3318, 0.5
        %v3351 = vmul.f32 %v3319, 0.5
        %v3352 = vmul.f32 %v3320, 0.5
        %v3353 = vmul.f32 %v3321, 0.5
        %v3354 = vmul.f32 %v3322, 0.5
        %v3355 = vmul.f32 %v3323, 0.5
        %v3356 = vmul.f32 %v3324, 0.5
        %v3357 = vmul.f32 %v3325, 0.5
        %v3358 = vmul.f32 %v3326, 0.5
        %v3359 = vmul.f32 %v3327, 0.5
        %v3360 = vmul.f32 %v3328, 0.5
        %v3361 = vmul.f32 %v3329, 0.5
        %v3362 = vmul.f32 %v3330, 0.5
        %v3363 = vmul.f32 %v3331, 0.5
        %v3364 = vmul.f32 %v3332, 0.5
        %v3365 = vmul.f32 %v3333, 0.5
        %v3366 = vmul.f32 %v3334, 0.5
        %v3367 = vmul.f32 %v3335, 0.5
        %v3368 = vmul.f32 %v3336, 0.5
        %v3369 = vmul.f32 %v3337, 0.5
        %v3370 = vmul.f32 %v3338, 0.5
        %v3371 = vmul.f32 %v3339, 0.5
        %v3372 = vmul.f32 %v3340, 0.5
        %v3373 = vmul.f32 %v3341, 0.5
        %v3374 = vmul.f32 %v3342, 0.5
        %v3375 = vmul.f32 %v3343, 0.5
        %v3376 = vmul.f32 %v3344, 0.5
        %v3377 = vmul.f32 %v3313, 0.70710677
        %v3378 = vmul.f32 %v3314, 0.70710677
        %v3379 = vmul.f32 %v3315, 0.70710677
        %v3380 = vmul.f32 %v3316, 0.70710677
        %v3381 = vmul.f32 %v3317, 0.70710677
        %v3382 = vmul.f32 %v3318, 0.70710677
        %v3383 = vmul.f32 %v3319, 0.70710677
        %v3384 = vmul.f32 %v3320, 0.70710677
        %v3385 = vmul.f32 %v3321, 0.70710677
        %v3386 = vmul.f32 %v3322, 0.70710677
        %v3387 = vmul.f32 %v3323, 0.70710677
        %v3388 = vmul.f32 %v3324, 0.70710677
        %v3389 = vmul.f32 %v3325, 0.70710677
        %v3390 = vmul.f32 %v3326, 0.70710677
        %v3391 = vmul.f32 %v3327, 0.70710677
        %v3392 = vmul.f32 %v3328, 0.70710677
        %v3393 = vmul.f32 %v3329, 0.70710677
        %v3394 = vmul.f32 %v3330, 0.70710677
        %v3395 = vmul.f32 %v3331, 0.70710677
        %v3396 = vmul.f32 %v3332, 0.70710677
        %v3397 = vmul.f32 %v3333, 0.70710677
        %v3398 = vmul.f32 %v3334, 0.70710677
        %v3399 = vmul.f32 %v3335, 0.70710677
        %v3400 = vmul.f32 %v3336, 0.70710677
        %v3401 = vmul.f32 %v3337, 0.70710677
        %v3402 = vmul.f32 %v3338, 0.70710677
        %v3403 = vmul.f32 %v3339, 0.70710677
        %v3404 = vmul.f32 %v3340, 0.70710677
        %v3405 = vmul.f32 %v3341, 0.70710677
        %v3406 = vmul.f32 %v3342, 0.70710677
        %v3407 = vmul.f32 %v3343, 0.70710677
        %v3408 = vmul.f32 %v3344, 0.70710677
        %v3409 = verf.f32.pop %v3377
        %v3410 = verf.f32.pop %v3378
        %v3411 = verf.f32.pop %v3379
        %v3412 = verf.f32.pop %v3380
        %v3413 = verf.f32.pop %v3381
        %v3414 = verf.f32.pop %v3382
        %v3415 = verf.f32.pop %v3383
        %v3416 = verf.f32.pop %v3384
        %v3417 = verf.f32.pop %v3385
        %v3418 = verf.f32.pop %v3386
        %v3419 = verf.f32.pop %v3387
        %v3420 = verf.f32.pop %v3388
        %v3421 = verf.f32.pop %v3389
        %v3422 = verf.f32.pop %v3390
        %v3423 = verf.f32.pop %v3391
        %v3424 = verf.f32.pop %v3392
        %v3425 = verf.f32.pop %v3393
        %v3426 = verf.f32.pop %v3394
        %v3427 = verf.f32.pop %v3395
        %v3428 = verf.f32.pop %v3396
        %v3429 = verf.f32.pop %v3397
        %v3430 = verf.f32.pop %v3398
        %v3431 = verf.f32.pop %v3399
        %v3432 = verf.f32.pop %v3400
        %v3433 = verf.f32.pop %v3401
        %v3434 = verf.f32.pop %v3402
        %v3435 = verf.f32.pop %v3403
        %v3436 = verf.f32.pop %v3404
        %v3437 = verf.f32.pop %v3405
        %v3438 = verf.f32.pop %v3406
        %v3439 = verf.f32.pop %v3407
        %v3440 = verf.f32.pop %v3408
        %v3441 = vadd.f32 %v3409, 1.0
        %v3442 = vadd.f32 %v3410, 1.0
        %v3443 = vadd.f32 %v3411, 1.0
        %v3444 = vadd.f32 %v3412, 1.0
        %v3445 = vadd.f32 %v3413, 1.0
        %v3446 = vadd.f32 %v3414, 1.0
        %v3447 = vadd.f32 %v3415, 1.0
        %v3448 = vadd.f32 %v3416, 1.0
        %v3449 = vadd.f32 %v3417, 1.0
        %v3450 = vadd.f32 %v3418, 1.0
        %v3451 = vadd.f32 %v3419, 1.0
        %v3452 = vadd.f32 %v3420, 1.0
        %v3453 = vadd.f32 %v3421, 1.0
        %v3454 = vadd.f32 %v3422, 1.0
        %v3455 = vadd.f32 %v3423, 1.0
        %v3456 = vadd.f32 %v3424, 1.0
        %v3457 = vadd.f32 %v3425, 1.0
        %v3458 = vadd.f32 %v3426, 1.0
        %v3459 = vadd.f32 %v3427, 1.0
        %v3460 = vadd.f32 %v3428, 1.0
        %v3461 = vadd.f32 %v3429, 1.0
        %v3462 = vadd.f32 %v3430, 1.0
        %v3463 = vadd.f32 %v3431, 1.0
        %v3464 = vadd.f32 %v3432, 1.0
        %v3465 = vadd.f32 %v3433, 1.0
        %v3466 = vadd.f32 %v3434, 1.0
        %v3467 = vadd.f32 %v3435, 1.0
        %v3468 = vadd.f32 %v3436, 1.0
        %v3469 = vadd.f32 %v3437, 1.0
        %v3470 = vadd.f32 %v3438, 1.0
        %v3471 = vadd.f32 %v3439, 1.0
        %v3472 = vadd.f32 %v3440, 1.0
        %v3473 = vmul.f32 %v3345, %v3441
        %v3474 = vmul.f32 %v3346, %v3442
        %v3475 = vmul.f32 %v3347, %v3443
        %v3476 = vmul.f32 %v3348, %v3444
        %v3477 = vmul.f32 %v3349, %v3445
        %v3478 = vmul.f32 %v3350, %v3446
        %v3479 = vmul.f32 %v3351, %v3447
        %v3480 = vmul.f32 %v3352, %v3448
        %v3481 = vmul.f32 %v3353, %v3449
        %v3482 = vmul.f32 %v3354, %v3450
        %v3483 = vmul.f32 %v3355, %v3451
        %v3484 = vmul.f32 %v3356, %v3452
        %v3485 = vmul.f32 %v3357, %v3453
        %v3486 = vmul.f32 %v3358, %v3454
        %v3487 = vmul.f32 %v3359, %v3455
        %v3488 = vmul.f32 %v3360, %v3456
        %v3489 = vmul.f32 %v3361, %v3457
        %v3490 = vmul.f32 %v3362, %v3458
        %v3491 = vmul.f32 %v3363, %v3459
        %v3492 = vmul.f32 %v3364, %v3460
        %v3493 = vmul.f32 %v3365, %v3461
        %v3494 = vmul.f32 %v3366, %v3462
        %v3495 = vmul.f32 %v3367, %v3463
        %v3496 = vmul.f32 %v3368, %v3464
        %v3497 = vmul.f32 %v3369, %v3465
        %v3498 = vmul.f32 %v3370, %v3466
        %v3499 = vmul.f32 %v3371, %v3467
        %v3500 = vmul.f32 %v3372, %v3468
        %v3501 = vmul.f32 %v3373, %v3469
        %v3502 = vmul.f32 %v3374, %v3470
        %v3503 = vmul.f32 %v3375, %v3471
        %v3504 = vmul.f32 %v3376, %v3472
        %v3505 = vld [vmem:[%s9] sm:$0xff]
        %v3506 = vld [vmem:[%s9 + $0x8] sm:$0xff]
        %v3507 = vld [vmem:[%s9 + $0x10] sm:$0xff]
        %v3508 = vld [vmem:[%s9 + $0x18] sm:$0xff]
        %v3509 = vld [vmem:[%s10] sm:$0x1]
        %v3511 = vlaneseq
        %v3512 = vshrl.u32 %v3511, 7
        %v3513 = vsub.s32 0, %v3512
        %v3514 = vrot.slane %v3509, %v3513
        %v3517 = vsel %vm2978, %v3473, 0
        %v3520 = vsel %vm2978, %v3474, 0
        %v3523 = vsel %vm2978, %v3475, 0
        %v3526 = vsel %vm2978, %v3476, 0
        %v3529 = vsel %vm2978, %v3477, 0
        %v3532 = vsel %vm2978, %v3478, 0
        %v3535 = vsel %vm2978, %v3479, 0
        %v3538 = vsel %vm2978, %v3480, 0
        %v3541 = vsel %vm2978, %v3481, 0
        %v3544 = vsel %vm2978, %v3482, 0
        %v3547 = vsel %vm2978, %v3483, 0
        %v3550 = vsel %vm2978, %v3484, 0
        %v3553 = vsel %vm2978, %v3485, 0
        %v3556 = vsel %vm2978, %v3486, 0
        %v3559 = vsel %vm2978, %v3487, 0
        %v3562 = vsel %vm2978, %v3488, 0
        %v3565 = vsel %vm2978, %v3489, 0
        %v3568 = vsel %vm2978, %v3490, 0
        %v3571 = vsel %vm2978, %v3491, 0
        %v3574 = vsel %vm2978, %v3492, 0
        %v3577 = vsel %vm2978, %v3493, 0
        %v3580 = vsel %vm2978, %v3494, 0
        %v3583 = vsel %vm2978, %v3495, 0
        %v3586 = vsel %vm2978, %v3496, 0
        %v3589 = vsel %vm2978, %v3497, 0
        %v3592 = vsel %vm2978, %v3498, 0
        %v3595 = vsel %vm2978, %v3499, 0
        %v3598 = vsel %vm2978, %v3500, 0
        %v3601 = vsel %vm2978, %v3501, 0
        %v3604 = vsel %vm2978, %v3502, 0
        %v3607 = vsel %vm2978, %v3503, 0
        %v3610 = vsel %vm2978, %v3504, 0
        %3612 = vmatprep.subr.mxu0 0.0
        %3613 = vmatpush1.msra.mxu0 %v3505
        %3614 = vmatprep.subr.mxu0 0.0
        %3615 = vmatpush1.msra.mxu0 %v3506
        %3616 = vmatprep.subr.mxu0 0.0
        %3617 = vmatpush1.msra.mxu0 %v3507
        %3618 = vmatprep.subr.mxu0 0.0
        %3619 = vmatpush1.msra.mxu0 %v3508
        %3620 = vmatprep.subr.mxu0 0.0
        %3621 = vmatpush1.msra.mxu0 0.0
        %3622 = vmatprep.subr.mxu0 0.0
        %3623 = vmatpush1.msra.mxu0 0.0
        %3624 = vmatprep.subr.mxu0 0.0
        %3625 = vmatpush1.msra.mxu0 0.0
        %3626 = vmatprep.subr.mxu0 0.0
        %3627 = vmatpush1.msra.mxu0 0.0
        %3628 = vmatprep.subr.mxu0 0.0
        %3629 = vmatpush1.msra.mxu0 0.0
        %3630 = vmatprep.subr.mxu0 0.0
        %3631 = vmatpush1.msra.mxu0 0.0
        %3632 = vmatprep.subr.mxu0 0.0
        %3633 = vmatpush1.msra.mxu0 0.0
        %3634 = vmatprep.subr.mxu0 0.0
        %3635 = vmatpush1.msra.mxu0 0.0
        %3636 = vmatprep.subr.mxu0 0.0
        %3637 = vmatpush1.msra.mxu0 0.0
        %3638 = vmatprep.subr.mxu0 0.0
        %3639 = vmatpush1.msra.mxu0 0.0
        %3640 = vmatprep.subr.mxu0 0.0
        %3641 = vmatpush1.msra.mxu0 0.0
        %3642 = vmatprep.subr.mxu0 0.0
        %3643 = vmatpush1.msra.mxu0 0.0
        %3644 = vmatprep.subr.mxu0 0.0
        %3645 = vmatpush1.msra.mxu0 0.0
        %3646 = vmatprep.subr.mxu0 0.0
        %3647 = vmatpush1.msra.mxu0 0.0
        %3648 = vmatprep.subr.mxu0 0.0
        %3649 = vmatpush1.msra.mxu0 0.0
        %3650 = vmatprep.subr.mxu0 0.0
        %3651 = vmatpush1.msra.mxu0 0.0
        %3652 = vmatprep.subr.mxu0 0.0
        %3653 = vmatpush1.msra.mxu0 0.0
        %3654 = vmatprep.subr.mxu0 0.0
        %3655 = vmatpush1.msra.mxu0 0.0
        %3656 = vmatprep.subr.mxu0 0.0
        %3657 = vmatpush1.msra.mxu0 0.0
        %3658 = vmatprep.subr.mxu0 0.0
        %3659 = vmatpush1.msra.mxu0 0.0
        %3660 = vmatprep.subr.mxu0 0.0
        %3661 = vmatpush1.msra.mxu0 0.0
        %3662 = vmatprep.subr.mxu0 0.0
        %3663 = vmatpush1.msra.mxu0 0.0
        %3664 = vmatprep.subr.mxu0 0.0
        %3665 = vmatpush1.msra.mxu0 0.0
        %3666 = vmatprep.subr.mxu0 0.0
        %3667 = vmatpush1.msra.mxu0 0.0
        %3668 = vmatprep.subr.mxu0 0.0
        %3669 = vmatpush1.msra.mxu0 0.0
        %3670 = vmatprep.subr.mxu0 0.0
        %3671 = vmatpush1.msra.mxu0 0.0
        %3672 = vmatprep.subr.mxu0 0.0
        %3673 = vmatpush1.msra.mxu0 0.0
        %3674 = vmatprep.subr.mxu0 0.0
        %3675 = vmatpush1.msra.mxu0 0.0
        %3676 = vmatprep.mubr.f32.mxu0 0.0
        %3677 = vmatmul.mubr.f32.gmra.mrb[0].mxu0 %v3517
        %v3678 = vpop.f32.mrb[0].mxu0
        %v3679 = vadd.f32 %v3514, %v3678
        %v3680 = vpop.f32.mrb[0].mxu0
        %3681 = vmatprep.mubr.f32.mxu0 0.0
        %3682 = vmatmul.mubr.f32.gmra.mrb[0].mxu0 %v3520
        %v3683 = vpop.f32.mrb[0].mxu0
        %v3684 = vadd.f32 %v3514, %v3683
        %v3685 = vpop.f32.mrb[0].mxu0
        %3686 = vmatprep.mubr.f32.mxu0 0.0
        %3687 = vmatmul.mubr.f32.gmra.mrb[0].mxu0 %v3523
        %v3688 = vpop.f32.mrb[0].mxu0
        %v3689 = vadd.f32 %v3514, %v3688
        %v3690 = vpop.f32.mrb[0].mxu0
        %3691 = vmatprep.mubr.f32.mxu0 0.0
        %3692 = vmatmul.mubr.f32.gmra.mrb[0].mxu0 %v3526
        %v3693 = vpop.f32.mrb[0].mxu0
        %v3694 = vadd.f32 %v3514, %v3693
        %v3695 = vpop.f32.mrb[0].mxu0
        %3696 = vmatprep.mubr.f32.mxu0 0.0
        %3697 = vmatmul.mubr.f32.gmra.mrb[0].mxu0 %v3529
        %v3698 = vpop.f32.mrb[0].mxu0
        %v3699 = vadd.f32 %v3514, %v3698
        %v3700 = vpop.f32.mrb[0].mxu0
        %3701 = vmatprep.mubr.f32.mxu0 0.0
        %3702 = vmatmul.mubr.f32.gmra.mrb[0].mxu0 %v3532
        %v3703 = vpop.f32.mrb[0].mxu0
        %v3704 = vadd.f32 %v3514, %v3703
        %v3705 = vpop.f32.mrb[0].mxu0
        %3706 = vmatprep.mubr.f32.mxu0 0.0
        %3707 = vmatmul.mubr.f32.gmra.mrb[0].mxu0 %v3535
        %v3708 = vpop.f32.mrb[0].mxu0
        %v3709 = vadd.f32 %v3514, %v3708
        %v3710 = vpop.f32.mrb[0].mxu0
        %3711 = vmatprep.mubr.f32.mxu0 0.0
        %3712 = vmatmul.mubr.f32.gmra.mrb[0].mxu0 %v3538
        %v3713 = vpop.f32.mrb[0].mxu0
        %v3714 = vadd.f32 %v3514, %v3713
        %v3715 = vpop.f32.mrb[0].mxu0
        %3716 = vmatprep.mubr.f32.mxu0 0.0
        %3717 = vmatmul.mubr.f32.gmra.mrb[0].mxu0 %v3541
        %v3718 = vpop.f32.mrb[0].mxu0
        %v3719 = vadd.f32 %v3514, %v3718
        %v3720 = vpop.f32.mrb[0].mxu0
        %3721 = vmatprep.mubr.f32.mxu0 0.0
        %3722 = vmatmul.mubr.f32.gmra.mrb[0].mxu0 %v3544
        %v3723 = vpop.f32.mrb[0].mxu0
        %v3724 = vadd.f32 %v3514, %v3723
        %v3725 = vpop.f32.mrb[0].mxu0
        %3726 = vmatprep.mubr.f32.mxu0 0.0
        %3727 = vmatmul.mubr.f32.gmra.mrb[0].mxu0 %v3547
        %v3728 = vpop.f32.mrb[0].mxu0
        %v3729 = vadd.f32 %v3514, %v3728
        %v3730 = vpop.f32.mrb[0].mxu0
        %3731 = vmatprep.mubr.f32.mxu0 0.0
        %3732 = vmatmul.mubr.f32.gmra.mrb[0].mxu0 %v3550
        %v3733 = vpop.f32.mrb[0].mxu0
        %v3734 = vadd.f32 %v3514, %v3733
        %v3735 = vpop.f32.mrb[0].mxu0
        %3736 = vmatprep.mubr.f32.mxu0 0.0
        %3737 = vmatmul.mubr.f32.gmra.mrb[0].mxu0 %v3553
        %v3738 = vpop.f32.mrb[0].mxu0
        %v3739 = vadd.f32 %v3514, %v3738
        %v3740 = vpop.f32.mrb[0].mxu0
        %3741 = vmatprep.mubr.f32.mxu0 0.0
        %3742 = vmatmul.mubr.f32.gmra.mrb[0].mxu0 %v3556
        %v3743 = vpop.f32.mrb[0].mxu0
        %v3744 = vadd.f32 %v3514, %v3743
        %v3745 = vpop.f32.mrb[0].mxu0
        %3746 = vmatprep.mubr.f32.mxu0 0.0
        %3747 = vmatmul.mubr.f32.gmra.mrb[0].mxu0 %v3559
        %v3748 = vpop.f32.mrb[0].mxu0
        %v3749 = vadd.f32 %v3514, %v3748
        %v3750 = vpop.f32.mrb[0].mxu0
        %3751 = vmatprep.mubr.f32.mxu0 0.0
        %3752 = vmatmul.mubr.f32.gmra.mrb[0].mxu0 %v3562
        %v3753 = vpop.f32.mrb[0].mxu0
        %v3754 = vadd.f32 %v3514, %v3753
        %v3755 = vpop.f32.mrb[0].mxu0
        %3756 = vmatprep.mubr.f32.mxu0 0.0
        %3757 = vmatmul.mubr.f32.gmra.mrb[0].mxu0 %v3565
        %v3758 = vpop.f32.mrb[0].mxu0
        %v3759 = vadd.f32 %v3514, %v3758
        %v3760 = vpop.f32.mrb[0].mxu0
        %3761 = vmatprep.mubr.f32.mxu0 0.0
        %3762 = vmatmul.mubr.f32.gmra.mrb[0].mxu0 %v3568
        %v3763 = vpop.f32.mrb[0].mxu0
        %v3764 = vadd.f32 %v3514, %v3763
        %v3765 = vpop.f32.mrb[0].mxu0
        %3766 = vmatprep.mubr.f32.mxu0 0.0
        %3767 = vmatmul.mubr.f32.gmra.mrb[0].mxu0 %v3571
        %v3768 = vpop.f32.mrb[0].mxu0
        %v3769 = vadd.f32 %v3514, %v3768
        %v3770 = vpop.f32.mrb[0].mxu0
        %3771 = vmatprep.mubr.f32.mxu0 0.0
        %3772 = vmatmul.mubr.f32.gmra.mrb[0].mxu0 %v3574
        %v3773 = vpop.f32.mrb[0].mxu0
        %v3774 = vadd.f32 %v3514, %v3773
        %v3775 = vpop.f32.mrb[0].mxu0
        %3776 = vmatprep.mubr.f32.mxu0 0.0
        %3777 = vmatmul.mubr.f32.gmra.mrb[0].mxu0 %v3577
        %v3778 = vpop.f32.mrb[0].mxu0
        %v3779 = vadd.f32 %v3514, %v3778
        %v3780 = vpop.f32.mrb[0].mxu0
        %3781 = vmatprep.mubr.f32.mxu0 0.0
        %3782 = vmatmul.mubr.f32.gmra.mrb[0].mxu0 %v3580
        %v3783 = vpop.f32.mrb[0].mxu0
        %v3784 = vadd.f32 %v3514, %v3783
        %v3785 = vpop.f32.mrb[0].mxu0
        %3786 = vmatprep.mubr.f32.mxu0 0.0
        %3787 = vmatmul.mubr.f32.gmra.mrb[0].mxu0 %v3583
        %v3788 = vpop.f32.mrb[0].mxu0
        %v3789 = vadd.f32 %v3514, %v3788
        %v3790 = vpop.f32.mrb[0].mxu0
        %3791 = vmatprep.mubr.f32.mxu0 0.0
        %3792 = vmatmul.mubr.f32.gmra.mrb[0].mxu0 %v3586
        %v3793 = vpop.f32.mrb[0].mxu0
        %v3794 = vadd.f32 %v3514, %v3793
        %v3795 = vpop.f32.mrb[0].mxu0
        %3796 = vmatprep.mubr.f32.mxu0 0.0
        %3797 = vmatmul.mubr.f32.gmra.mrb[0].mxu0 %v3589
        %v3798 = vpop.f32.mrb[0].mxu0
        %v3799 = vadd.f32 %v3514, %v3798
        %v3800 = vpop.f32.mrb[0].mxu0
        %3801 = vmatprep.mubr.f32.mxu0 0.0
        %3802 = vmatmul.mubr.f32.gmra.mrb[0].mxu0 %v3592
        %v3803 = vpop.f32.mrb[0].mxu0
        %v3804 = vadd.f32 %v3514, %v3803
        %v3805 = vpop.f32.mrb[0].mxu0
        %3806 = vmatprep.mubr.f32.mxu0 0.0
        %3807 = vmatmul.mubr.f32.gmra.mrb[0].mxu0 %v3595
        %v3808 = vpop.f32.mrb[0].mxu0
        %v3809 = vadd.f32 %v3514, %v3808
        %v3810 = vpop.f32.mrb[0].mxu0
        %3811 = vmatprep.mubr.f32.mxu0 0.0
        %3812 = vmatmul.mubr.f32.gmra.mrb[0].mxu0 %v3598
        %v3813 = vpop.f32.mrb[0].mxu0
        %v3814 = vadd.f32 %v3514, %v3813
        %v3815 = vpop.f32.mrb[0].mxu0
        %3816 = vmatprep.mubr.f32.mxu0 0.0
        %3817 = vmatmul.mubr.f32.gmra.mrb[0].mxu0 %v3601
        %v3818 = vpop.f32.mrb[0].mxu0
        %v3819 = vadd.f32 %v3514, %v3818
        %v3820 = vpop.f32.mrb[0].mxu0
        %3821 = vmatprep.mubr.f32.mxu0 0.0
        %3822 = vmatmul.mubr.f32.gmra.mrb[0].mxu0 %v3604
        %v3823 = vpop.f32.mrb[0].mxu0
        %v3824 = vadd.f32 %v3514, %v3823
        %v3825 = vpop.f32.mrb[0].mxu0
        %3826 = vmatprep.mubr.f32.mxu0 0.0
        %3827 = vmatmul.mubr.f32.gmra.mrb[0].mxu0 %v3607
        %v3828 = vpop.f32.mrb[0].mxu0
        %v3829 = vadd.f32 %v3514, %v3828
        %v3830 = vpop.f32.mrb[0].mxu0
        %3831 = vmatprep.mubr.f32.mxu0 0.0
        %3832 = vmatmul.mubr.f32.gmra.mrb[0].mxu0 %v3610
        %v3833 = vpop.f32.mrb[0].mxu0
        %v3834 = vadd.f32 %v3514, %v3833
        %v3835 = vpop.f32.mrb[0].mxu0
        %3836 = vdwg.mxu0
        %3838 = vset.pattern.permute.xlu0 0
        %3839 = vperm.xlu0 %3838, %v3243
        %v3840 = vpop.permute.xlu0 %3839
        %3843 = vset.pattern.permute.xlu0 0
        %3844 = vperm.xlu0 %3843, %v3245
        %v3845 = vpop.permute.xlu0 %3844
        %3848 = vset.pattern.permute.xlu0 0
        %3849 = vperm.xlu0 %3848, %v3247
        %v3850 = vpop.permute.xlu0 %3849
        %3853 = vset.pattern.permute.xlu0 0
        %3854 = vperm.xlu0 %3853, %v3249
        %v3855 = vpop.permute.xlu0 %3854
        %3858 = vset.pattern.permute.xlu0 0
        %3859 = vperm.xlu0 %3858, %v3251
        %v3860 = vpop.permute.xlu0 %3859
        %3863 = vset.pattern.permute.xlu0 0
        %3864 = vperm.xlu0 %3863, %v3253
        %v3865 = vpop.permute.xlu0 %3864
        %3868 = vset.pattern.permute.xlu0 0
        %3869 = vperm.xlu0 %3868, %v3255
        %v3870 = vpop.permute.xlu0 %3869
        %3873 = vset.pattern.permute.xlu0 0
        %3874 = vperm.xlu0 %3873, %v3257
        %v3875 = vpop.permute.xlu0 %3874
        %3878 = vset.pattern.permute.xlu0 0
        %3879 = vperm.xlu0 %3878, %v3259
        %v3880 = vpop.permute.xlu0 %3879
        %3883 = vset.pattern.permute.xlu0 0
        %3884 = vperm.xlu0 %3883, %v3261
        %v3885 = vpop.permute.xlu0 %3884
        %3888 = vset.pattern.permute.xlu0 0
        %3889 = vperm.xlu0 %3888, %v3263
        %v3890 = vpop.permute.xlu0 %3889
        %3893 = vset.pattern.permute.xlu0 0
        %3894 = vperm.xlu0 %3893, %v3265
        %v3895 = vpop.permute.xlu0 %3894
        %3898 = vset.pattern.permute.xlu0 0
        %3899 = vperm.xlu0 %3898, %v3267
        %v3900 = vpop.permute.xlu0 %3899
        %3903 = vset.pattern.permute.xlu0 0
        %3904 = vperm.xlu0 %3903, %v3269
        %v3905 = vpop.permute.xlu0 %3904
        %3908 = vset.pattern.permute.xlu0 0
        %3909 = vperm.xlu0 %3908, %v3271
        %v3910 = vpop.permute.xlu0 %3909
        %3913 = vset.pattern.permute.xlu0 0
        %3914 = vperm.xlu0 %3913, %v3273
        %v3915 = vpop.permute.xlu0 %3914
        %3918 = vset.pattern.permute.xlu0 0
        %3919 = vperm.xlu0 %3918, %v3275
        %v3920 = vpop.permute.xlu0 %3919
        %3923 = vset.pattern.permute.xlu0 0
        %3924 = vperm.xlu0 %3923, %v3277
        %v3925 = vpop.permute.xlu0 %3924
        %3928 = vset.pattern.permute.xlu0 0
        %3929 = vperm.xlu0 %3928, %v3279
        %v3930 = vpop.permute.xlu0 %3929
        %3933 = vset.pattern.permute.xlu0 0
        %3934 = vperm.xlu0 %3933, %v3281
        %v3935 = vpop.permute.xlu0 %3934
        %3938 = vset.pattern.permute.xlu0 0
        %3939 = vperm.xlu0 %3938, %v3283
        %v3940 = vpop.permute.xlu0 %3939
        %3943 = vset.pattern.permute.xlu0 0
        %3944 = vperm.xlu0 %3943, %v3285
        %v3945 = vpop.permute.xlu0 %3944
        %3948 = vset.pattern.permute.xlu0 0
        %3949 = vperm.xlu0 %3948, %v3287
        %v3950 = vpop.permute.xlu0 %3949
        %3953 = vset.pattern.permute.xlu0 0
        %3954 = vperm.xlu0 %3953, %v3289
        %v3955 = vpop.permute.xlu0 %3954
        %3958 = vset.pattern.permute.xlu0 0
        %3959 = vperm.xlu0 %3958, %v3291
        %v3960 = vpop.permute.xlu0 %3959
        %3963 = vset.pattern.permute.xlu0 0
        %3964 = vperm.xlu0 %3963, %v3293
        %v3965 = vpop.permute.xlu0 %3964
        %3968 = vset.pattern.permute.xlu0 0
        %3969 = vperm.xlu0 %3968, %v3295
        %v3970 = vpop.permute.xlu0 %3969
        %3973 = vset.pattern.permute.xlu0 0
        %3974 = vperm.xlu0 %3973, %v3297
        %v3975 = vpop.permute.xlu0 %3974
        %3978 = vset.pattern.permute.xlu0 0
        %3979 = vperm.xlu0 %3978, %v3299
        %v3980 = vpop.permute.xlu0 %3979
        %3983 = vset.pattern.permute.xlu0 0
        %3984 = vperm.xlu0 %3983, %v3301
        %v3985 = vpop.permute.xlu0 %3984
        %3988 = vset.pattern.permute.xlu0 0
        %3989 = vperm.xlu0 %3988, %v3303
        %v3990 = vpop.permute.xlu0 %3989
        %3993 = vset.pattern.permute.xlu0 0
        %3994 = vperm.xlu0 %3993, %v3305
        %v3995 = vpop.permute.xlu0 %3994
        %v3997 = vmul.f32 %v3679, %v3840
        %v3998 = vmul.f32 %v3684, %v3845
        %v3999 = vmul.f32 %v3689, %v3850
        %v4000 = vmul.f32 %v3694, %v3855
        %v4001 = vmul.f32 %v3699, %v3860
        %v4002 = vmul.f32 %v3704, %v3865
        %v4003 = vmul.f32 %v3709, %v3870
        %v4004 = vmul.f32 %v3714, %v3875
        %v4005 = vmul.f32 %v3719, %v3880
        %v4006 = vmul.f32 %v3724, %v3885
        %v4007 = vmul.f32 %v3729, %v3890
        %v4008 = vmul.f32 %v3734, %v3895
        %v4009 = vmul.f32 %v3739, %v3900
        %v4010 = vmul.f32 %v3744, %v3905
        %v4011 = vmul.f32 %v3749, %v3910
        %v4012 = vmul.f32 %v3754, %v3915
        %v4013 = vmul.f32 %v3759, %v3920
        %v4014 = vmul.f32 %v3764, %v3925
        %v4015 = vmul.f32 %v3769, %v3930
        %v4016 = vmul.f32 %v3774, %v3935
        %v4017 = vmul.f32 %v3779, %v3940
        %v4018 = vmul.f32 %v3784, %v3945
        %v4019 = vmul.f32 %v3789, %v3950
        %v4020 = vmul.f32 %v3794, %v3955
        %v4021 = vmul.f32 %v3799, %v3960
        %v4022 = vmul.f32 %v3804, %v3965
        %v4023 = vmul.f32 %v3809, %v3970
        %v4024 = vmul.f32 %v3814, %v3975
        %v4025 = vmul.f32 %v3819, %v3980
        %v4026 = vmul.f32 %v3824, %v3985
        %v4027 = vmul.f32 %v3829, %v3990
        %v4028 = vmul.f32 %v3834, %v3995
        %v4029 = vld [vmem:[#allocation10] sm:$0xff]
        %v4030 = vld [vmem:[#allocation10 + $0x8] sm:$0xff]
        %v4031 = vld [vmem:[#allocation10 + $0x10] sm:$0xff]
        %v4032 = vld [vmem:[#allocation10 + $0x18] sm:$0xff]
        %v4033 = vld [vmem:[%s12] sm:$0x1]
        %v4035 = vlaneseq
        %v4036 = vshrl.u32 %v4035, 7
        %v4037 = vsub.s32 0, %v4036
        %v4038 = vrot.slane %v4033, %v4037
        %v4041 = vsel %vm2978, %v3997, 0
        %v4044 = vsel %vm2978, %v3998, 0
        %v4047 = vsel %vm2978, %v3999, 0
        %v4050 = vsel %vm2978, %v4000, 0
        %v4053 = vsel %vm2978, %v4001, 0
        %v4056 = vsel %vm2978, %v4002, 0
        %v4059 = vsel %vm2978, %v4003, 0
        %v4062 = vsel %vm2978, %v4004, 0
        %v4065 = vsel %vm2978, %v4005, 0
        %v4068 = vsel %vm2978, %v4006, 0
        %v4071 = vsel %vm2978, %v4007, 0
        %v4074 = vsel %vm2978, %v4008, 0
        %v4077 = vsel %vm2978, %v4009, 0
        %v4080 = vsel %vm2978, %v4010, 0
        %v4083 = vsel %vm2978, %v4011, 0
        %v4086 = vsel %vm2978, %v4012, 0
        %v4089 = vsel %vm2978, %v4013, 0
        %v4092 = vsel %vm2978, %v4014, 0
        %v4095 = vsel %vm2978, %v4015, 0
        %v4098 = vsel %vm2978, %v4016, 0
        %v4101 = vsel %vm2978, %v4017, 0
        %v4104 = vsel %vm2978, %v4018, 0
        %v4107 = vsel %vm2978, %v4019, 0
        %v4110 = vsel %vm2978, %v4020, 0
        %v4113 = vsel %vm2978, %v4021, 0
        %v4116 = vsel %vm2978, %v4022, 0
        %v4119 = vsel %vm2978, %v4023, 0
        %v4122 = vsel %vm2978, %v4024, 0
        %v4125 = vsel %vm2978, %v4025, 0
        %v4128 = vsel %vm2978, %v4026, 0
        %v4131 = vsel %vm2978, %v4027, 0
        %v4134 = vsel %vm2978, %v4028, 0
        %4136 = vmatprep.subr.mxu0 0.0
        %4137 = vmatpush1.msra.mxu0 %v4029
        %4138 = vmatprep.subr.mxu0 0.0
        %4139 = vmatpush1.msra.mxu0 %v4030
        %4140 = vmatprep.subr.mxu0 0.0
        %4141 = vmatpush1.msra.mxu0 %v4031
        %4142 = vmatprep.subr.mxu0 0.0
        %4143 = vmatpush1.msra.mxu0 %v4032
        %4144 = vmatprep.subr.mxu0 0.0
        %4145 = vmatpush1.msra.mxu0 0.0
        %4146 = vmatprep.subr.mxu0 0.0
        %4147 = vmatpush1.msra.mxu0 0.0
        %4148 = vmatprep.subr.mxu0 0.0
        %4149 = vmatpush1.msra.mxu0 0.0
        %4150 = vmatprep.subr.mxu0 0.0
        %4151 = vmatpush1.msra.mxu0 0.0
        %4152 = vmatprep.subr.mxu0 0.0
        %4153 = vmatpush1.msra.mxu0 0.0
        %4154 = vmatprep.subr.mxu0 0.0
        %4155 = vmatpush1.msra.mxu0 0.0
        %4156 = vmatprep.subr.mxu0 0.0
        %4157 = vmatpush1.msra.mxu0 0.0
        %4158 = vmatprep.subr.mxu0 0.0
        %4159 = vmatpush1.msra.mxu0 0.0
        %4160 = vmatprep.subr.mxu0 0.0
        %4161 = vmatpush1.msra.mxu0 0.0
        %4162 = vmatprep.subr.mxu0 0.0
        %4163 = vmatpush1.msra.mxu0 0.0
        %4164 = vmatprep.subr.mxu0 0.0
        %4165 = vmatpush1.msra.mxu0 0.0
        %4166 = vmatprep.subr.mxu0 0.0
        %4167 = vmatpush1.msra.mxu0 0.0
        %4168 = vmatprep.subr.mxu0 0.0
        %4169 = vmatpush1.msra.mxu0 0.0
        %4170 = vmatprep.subr.mxu0 0.0
        %4171 = vmatpush1.msra.mxu0 0.0
        %4172 = vmatprep.subr.mxu0 0.0
        %4173 = vmatpush1.msra.mxu0 0.0
        %4174 = vmatprep.subr.mxu0 0.0
        %4175 = vmatpush1.msra.mxu0 0.0
        %4176 = vmatprep.subr.mxu0 0.0
        %4177 = vmatpush1.msra.mxu0 0.0
        %4178 = vmatprep.subr.mxu0 0.0
        %4179 = vmatpush1.msra.mxu0 0.0
        %4180 = vmatprep.subr.mxu0 0.0
        %4181 = vmatpush1.msra.mxu0 0.0
        %4182 = vmatprep.subr.mxu0 0.0
        %4183 = vmatpush1.msra.mxu0 0.0
        %4184 = vmatprep.subr.mxu0 0.0
        %4185 = vmatpush1.msra.mxu0 0.0
        %4186 = vmatprep.subr.mxu0 0.0
        %4187 = vmatpush1.msra.mxu0 0.0
        %4188 = vmatprep.subr.mxu0 0.0
        %4189 = vmatpush1.msra.mxu0 0.0
        %4190 = vmatprep.subr.mxu0 0.0
        %4191 = vmatpush1.msra.mxu0 0.0
        %4192 = vmatprep.subr.mxu0 0.0
        %4193 = vmatpush1.msra.mxu0 0.0
        %4194 = vmatprep.subr.mxu0 0.0
        %4195 = vmatpush1.msra.mxu0 0.0
        %4196 = vmatprep.subr.mxu0 0.0
        %4197 = vmatpush1.msra.mxu0 0.0
        %4198 = vmatprep.subr.mxu0 0.0
        %4199 = vmatpush1.msra.mxu0 0.0
        %4200 = vmatprep.mubr.f32.mxu0 0.0
        %4201 = vmatmul.mubr.f32.gmra.mrb[0].mxu0 %v4041
        %v4202 = vpop.f32.mrb[0].mxu0
        %v4203 = vadd.f32 %v4038, %v4202
        %v4204 = vpop.f32.mrb[0].mxu0
        %4205 = vmatprep.mubr.f32.mxu0 0.0
        %4206 = vmatmul.mubr.f32.gmra.mrb[0].mxu0 %v4044
        %v4207 = vpop.f32.mrb[0].mxu0
        %v4208 = vadd.f32 %v4038, %v4207
        %v4209 = vpop.f32.mrb[0].mxu0
        %4210 = vmatprep.mubr.f32.mxu0 0.0
        %4211 = vmatmul.mubr.f32.gmra.mrb[0].mxu0 %v4047
        %v4212 = vpop.f32.mrb[0].mxu0
        %v4213 = vadd.f32 %v4038, %v4212
        %v4214 = vpop.f32.mrb[0].mxu0
        %4215 = vmatprep.mubr.f32.mxu0 0.0
        %4216 = vmatmul.mubr.f32.gmra.mrb[0].mxu0 %v4050
        %v4217 = vpop.f32.mrb[0].mxu0
        %v4218 = vadd.f32 %v4038, %v4217
        %v4219 = vpop.f32.mrb[0].mxu0
        %4220 = vmatprep.mubr.f32.mxu0 0.0
        %4221 = vmatmul.mubr.f32.gmra.mrb[0].mxu0 %v4053
        %v4222 = vpop.f32.mrb[0].mxu0
        %v4223 = vadd.f32 %v4038, %v4222
        %v4224 = vpop.f32.mrb[0].mxu0
        %4225 = vmatprep.mubr.f32.mxu0 0.0
        %4226 = vmatmul.mubr.f32.gmra.mrb[0].mxu0 %v4056
        %v4227 = vpop.f32.mrb[0].mxu0
        %v4228 = vadd.f32 %v4038, %v4227
        %v4229 = vpop.f32.mrb[0].mxu0
        %4230 = vmatprep.mubr.f32.mxu0 0.0
        %4231 = vmatmul.mubr.f32.gmra.mrb[0].mxu0 %v4059
        %v4232 = vpop.f32.mrb[0].mxu0
        %v4233 = vadd.f32 %v4038, %v4232
        %v4234 = vpop.f32.mrb[0].mxu0
        %4235 = vmatprep.mubr.f32.mxu0 0.0
        %4236 = vmatmul.mubr.f32.gmra.mrb[0].mxu0 %v4062
        %v4237 = vpop.f32.mrb[0].mxu0
        %v4238 = vadd.f32 %v4038, %v4237
        %v4239 = vpop.f32.mrb[0].mxu0
        %4240 = vmatprep.mubr.f32.mxu0 0.0
        %4241 = vmatmul.mubr.f32.gmra.mrb[0].mxu0 %v4065
        %v4242 = vpop.f32.mrb[0].mxu0
        %v4243 = vadd.f32 %v4038, %v4242
        %v4244 = vpop.f32.mrb[0].mxu0
        %4245 = vmatprep.mubr.f32.mxu0 0.0
        %4246 = vmatmul.mubr.f32.gmra.mrb[0].mxu0 %v4068
        %v4247 = vpop.f32.mrb[0].mxu0
        %v4248 = vadd.f32 %v4038, %v4247
        %v4249 = vpop.f32.mrb[0].mxu0
        %4250 = vmatprep.mubr.f32.mxu0 0.0
        %4251 = vmatmul.mubr.f32.gmra.mrb[0].mxu0 %v4071
        %v4252 = vpop.f32.mrb[0].mxu0
        %v4253 = vadd.f32 %v4038, %v4252
        %v4254 = vpop.f32.mrb[0].mxu0
        %4255 = vmatprep.mubr.f32.mxu0 0.0
        %4256 = vmatmul.mubr.f32.gmra.mrb[0].mxu0 %v4074
        %v4257 = vpop.f32.mrb[0].mxu0
        %v4258 = vadd.f32 %v4038, %v4257
        %v4259 = vpop.f32.mrb[0].mxu0
        %4260 = vmatprep.mubr.f32.mxu0 0.0
        %4261 = vmatmul.mubr.f32.gmra.mrb[0].mxu0 %v4077
        %v4262 = vpop.f32.mrb[0].mxu0
        %v4263 = vadd.f32 %v4038, %v4262
        %v4264 = vpop.f32.mrb[0].mxu0
        %4265 = vmatprep.mubr.f32.mxu0 0.0
        %4266 = vmatmul.mubr.f32.gmra.mrb[0].mxu0 %v4080
        %v4267 = vpop.f32.mrb[0].mxu0
        %v4268 = vadd.f32 %v4038, %v4267
        %v4269 = vpop.f32.mrb[0].mxu0
        %4270 = vmatprep.mubr.f32.mxu0 0.0
        %4271 = vmatmul.mubr.f32.gmra.mrb[0].mxu0 %v4083
        %v4272 = vpop.f32.mrb[0].mxu0
        %v4273 = vadd.f32 %v4038, %v4272
        %v4274 = vpop.f32.mrb[0].mxu0
        %4275 = vmatprep.mubr.f32.mxu0 0.0
        %4276 = vmatmul.mubr.f32.gmra.mrb[0].mxu0 %v4086
        %v4277 = vpop.f32.mrb[0].mxu0
        %v4278 = vadd.f32 %v4038, %v4277
        %v4279 = vpop.f32.mrb[0].mxu0
        %4280 = vmatprep.mubr.f32.mxu0 0.0
        %4281 = vmatmul.mubr.f32.gmra.mrb[0].mxu0 %v4089
        %v4282 = vpop.f32.mrb[0].mxu0
        %v4283 = vadd.f32 %v4038, %v4282
        %v4284 = vpop.f32.mrb[0].mxu0
        %4285 = vmatprep.mubr.f32.mxu0 0.0
        %4286 = vmatmul.mubr.f32.gmra.mrb[0].mxu0 %v4092
        %v4287 = vpop.f32.mrb[0].mxu0
        %v4288 = vadd.f32 %v4038, %v4287
        %v4289 = vpop.f32.mrb[0].mxu0
        %4290 = vmatprep.mubr.f32.mxu0 0.0
        %4291 = vmatmul.mubr.f32.gmra.mrb[0].mxu0 %v4095
        %v4292 = vpop.f32.mrb[0].mxu0
        %v4293 = vadd.f32 %v4038, %v4292
        %v4294 = vpop.f32.mrb[0].mxu0
        %4295 = vmatprep.mubr.f32.mxu0 0.0
        %4296 = vmatmul.mubr.f32.gmra.mrb[0].mxu0 %v4098
        %v4297 = vpop.f32.mrb[0].mxu0
        %v4298 = vadd.f32 %v4038, %v4297
        %v4299 = vpop.f32.mrb[0].mxu0
        %4300 = vmatprep.mubr.f32.mxu0 0.0
        %4301 = vmatmul.mubr.f32.gmra.mrb[0].mxu0 %v4101
        %v4302 = vpop.f32.mrb[0].mxu0
        %v4303 = vadd.f32 %v4038, %v4302
        %v4304 = vpop.f32.mrb[0].mxu0
        %4305 = vmatprep.mubr.f32.mxu0 0.0
        %4306 = vmatmul.mubr.f32.gmra.mrb[0].mxu0 %v4104
        %v4307 = vpop.f32.mrb[0].mxu0
        %v4308 = vadd.f32 %v4038, %v4307
        %v4309 = vpop.f32.mrb[0].mxu0
        %4310 = vmatprep.mubr.f32.mxu0 0.0
        %4311 = vmatmul.mubr.f32.gmra.mrb[0].mxu0 %v4107
        %v4312 = vpop.f32.mrb[0].mxu0
        %v4313 = vadd.f32 %v4038, %v4312
        %v4314 = vpop.f32.mrb[0].mxu0
        %4315 = vmatprep.mubr.f32.mxu0 0.0
        %4316 = vmatmul.mubr.f32.gmra.mrb[0].mxu0 %v4110
        %v4317 = vpop.f32.mrb[0].mxu0
        %v4318 = vadd.f32 %v4038, %v4317
        %v4319 = vpop.f32.mrb[0].mxu0
        %4320 = vmatprep.mubr.f32.mxu0 0.0
        %4321 = vmatmul.mubr.f32.gmra.mrb[0].mxu0 %v4113
        %v4322 = vpop.f32.mrb[0].mxu0
        %v4323 = vadd.f32 %v4038, %v4322
        %v4324 = vpop.f32.mrb[0].mxu0
        %4325 = vmatprep.mubr.f32.mxu0 0.0
        %4326 = vmatmul.mubr.f32.gmra.mrb[0].mxu0 %v4116
        %v4327 = vpop.f32.mrb[0].mxu0
        %v4328 = vadd.f32 %v4038, %v4327
        %v4329 = vpop.f32.mrb[0].mxu0
        %4330 = vmatprep.mubr.f32.mxu0 0.0
        %4331 = vmatmul.mubr.f32.gmra.mrb[0].mxu0 %v4119
        %v4332 = vpop.f32.mrb[0].mxu0
        %v4333 = vadd.f32 %v4038, %v4332
        %v4334 = vpop.f32.mrb[0].mxu0
        %4335 = vmatprep.mubr.f32.mxu0 0.0
        %4336 = vmatmul.mubr.f32.gmra.mrb[0].mxu0 %v4122
        %v4337 = vpop.f32.mrb[0].mxu0
        %v4338 = vadd.f32 %v4038, %v4337
        %v4339 = vpop.f32.mrb[0].mxu0
        %4340 = vmatprep.mubr.f32.mxu0 0.0
        %4341 = vmatmul.mubr.f32.gmra.mrb[0].mxu0 %v4125
        %v4342 = vpop.f32.mrb[0].mxu0
        %v4343 = vadd.f32 %v4038, %v4342
        %v4344 = vpop.f32.mrb[0].mxu0
        %4345 = vmatprep.mubr.f32.mxu0 0.0
        %4346 = vmatmul.mubr.f32.gmra.mrb[0].mxu0 %v4128
        %v4347 = vpop.f32.mrb[0].mxu0
        %v4348 = vadd.f32 %v4038, %v4347
        %v4349 = vpop.f32.mrb[0].mxu0
        %4350 = vmatprep.mubr.f32.mxu0 0.0
        %4351 = vmatmul.mubr.f32.gmra.mrb[0].mxu0 %v4131
        %v4352 = vpop.f32.mrb[0].mxu0
        %v4353 = vadd.f32 %v4038, %v4352
        %v4354 = vpop.f32.mrb[0].mxu0
        %4355 = vmatprep.mubr.f32.mxu0 0.0
        %4356 = vmatmul.mubr.f32.gmra.mrb[0].mxu0 %v4134
        %v4357 = vpop.f32.mrb[0].mxu0
        %v4358 = vadd.f32 %v4038, %v4357
        %v4359 = vpop.f32.mrb[0].mxu0
        %4360 = vdwg.mxu0
        %4361 = vxpose.xlu0.b32.start [1/16] %v4203, 128
        %4362 = vxpose.xlu0.b32.cont [2/16] %v4208, 128
        %4363 = vxpose.xlu0.b32.cont [3/16] %v4213, 128
        %4364 = vxpose.xlu0.b32.cont [4/16] %v4218, 128
        %4365 = vxpose.xlu0.b32.cont [5/16] %v4223, 128
        %4366 = vxpose.xlu0.b32.cont [6/16] %v4228, 128
        %4367 = vxpose.xlu0.b32.cont [7/16] %v4233, 128
        %4368 = vxpose.xlu0.b32.cont [8/16] %v4238, 128
        %4369 = vxpose.xlu0.b32.cont [9/16] %v4243, 128
        %4370 = vxpose.xlu0.b32.cont [10/16] %v4248, 128
        %4371 = vxpose.xlu0.b32.cont [11/16] %v4253, 128
        %4372 = vxpose.xlu0.b32.cont [12/16] %v4258, 128
        %4373 = vxpose.xlu0.b32.cont [13/16] %v4263, 128
        %4374 = vxpose.xlu0.b32.cont [14/16] %v4268, 128
        %4375 = vxpose.xlu0.b32.cont [15/16] %v4273, 128
        %4376 = vxpose.xlu0.b32.end [16/16] %v4278, 128
        %v4377 = vpop.trf.xlu0
        %v4378 = vpop.trf.xlu0
        %v4379 = vpop.trf.xlu0
        %v4380 = vpop.trf.xlu0
        %v4381 = vpop.trf.xlu0
        %v4382 = vpop.trf.xlu0
        %v4383 = vpop.trf.xlu0
        %v4384 = vpop.trf.xlu0
        %v4385 = vpop.trf.xlu0
        %v4386 = vpop.trf.xlu0
        %v4387 = vpop.trf.xlu0
        %v4388 = vpop.trf.xlu0
        %v4389 = vpop.trf.xlu0
        %v4390 = vpop.trf.xlu0
        %v4391 = vpop.trf.xlu0
        %v4392 = vpop.trf.xlu0
        %4393 = vxpose.xlu0.b32.start [1/16] %v4283, 128
        %4394 = vxpose.xlu0.b32.cont [2/16] %v4288, 128
        %4395 = vxpose.xlu0.b32.cont [3/16] %v4293, 128
        %4396 = vxpose.xlu0.b32.cont [4/16] %v4298, 128
        %4397 = vxpose.xlu0.b32.cont [5/16] %v4303, 128
        %4398 = vxpose.xlu0.b32.cont [6/16] %v4308, 128
        %4399 = vxpose.xlu0.b32.cont [7/16] %v4313, 128
        %4400 = vxpose.xlu0.b32.cont [8/16] %v4318, 128
        %4401 = vxpose.xlu0.b32.cont [9/16] %v4323, 128
        %4402 = vxpose.xlu0.b32.cont [10/16] %v4328, 128
        %4403 = vxpose.xlu0.b32.cont [11/16] %v4333, 128
        %4404 = vxpose.xlu0.b32.cont [12/16] %v4338, 128
        %4405 = vxpose.xlu0.b32.cont [13/16] %v4343, 128
        %4406 = vxpose.xlu0.b32.cont [14/16] %v4348, 128
        %4407 = vxpose.xlu0.b32.cont [15/16] %v4353, 128
        %4408 = vxpose.xlu0.b32.end [16/16] %v4358, 128
        %v4409 = vpop.trf.xlu0
        %v4410 = vpop.trf.xlu0
        %v4411 = vpop.trf.xlu0
        %v4412 = vpop.trf.xlu0
        %v4413 = vpop.trf.xlu0
        %v4414 = vpop.trf.xlu0
        %v4415 = vpop.trf.xlu0
        %v4416 = vpop.trf.xlu0
        %v4417 = vpop.trf.xlu0
        %v4418 = vpop.trf.xlu0
        %v4419 = vpop.trf.xlu0
        %v4420 = vpop.trf.xlu0
        %v4421 = vpop.trf.xlu0
        %v4422 = vpop.trf.xlu0
        %v4423 = vpop.trf.xlu0
        %v4424 = vpop.trf.xlu0
        %v4425 = vld [vmem:[%s3] sm:$0xff]
        %v4426 = vld [vmem:[%s3 + $0x8] sm:$0xff]
        %v4427 = vld [vmem:[%s3 + $0x10] sm:$0xff]
        %v4428 = vld [vmem:[%s3 + $0x18] sm:$0xff]
        %v4429 = vld [vmem:[%s3 + $0x20] sm:$0xff]
        %v4430 = vld [vmem:[%s3 + $0x28] sm:$0xff]
        %v4431 = vld [vmem:[%s3 + $0x30] sm:$0xff]
        %v4432 = vld [vmem:[%s3 + $0x38] sm:$0xff]
        %4434 = vset.pattern.permute.xlu0 0
        %4435 = vperm.xlu0 %4434, %v4425
        %v4436 = vpop.permute.xlu0 %4435
        %4439 = vset.pattern.permute.xlu0 0
        %4440 = vperm.xlu0 %4439, %v4426
        %v4441 = vpop.permute.xlu0 %4440
        %4444 = vset.pattern.permute.xlu0 0
        %4445 = vperm.xlu0 %4444, %v4427
        %v4446 = vpop.permute.xlu0 %4445
        %4449 = vset.pattern.permute.xlu0 0
        %4450 = vperm.xlu0 %4449, %v4428
        %v4451 = vpop.permute.xlu0 %4450
        %4454 = vset.pattern.permute.xlu0 0
        %4455 = vperm.xlu0 %4454, %v4429
        %v4456 = vpop.permute.xlu0 %4455
        %4459 = vset.pattern.permute.xlu0 0
        %4460 = vperm.xlu0 %4459, %v4430
        %v4461 = vpop.permute.xlu0 %4460
        %4464 = vset.pattern.permute.xlu0 0
        %4465 = vperm.xlu0 %4464, %v4431
        %v4466 = vpop.permute.xlu0 %4465
        %4469 = vset.pattern.permute.xlu0 0
        %4470 = vperm.xlu0 %4469, %v4432
        %v4471 = vpop.permute.xlu0 %4470
        %v4473 = vmul.f32 %v4377, %v4436
        %v4474 = vmul.f32 %v4409, %v4436
        %v4475 = vmul.f32 %v4378, %v4441
        %v4476 = vmul.f32 %v4410, %v4441
        %v4477 = vmul.f32 %v4379, %v4446
        %v4478 = vmul.f32 %v4411, %v4446
        %v4479 = vmul.f32 %v4380, %v4451
        %v4480 = vmul.f32 %v4412, %v4451
        %v4481 = vmul.f32 %v4381, %v4456
        %v4482 = vmul.f32 %v4413, %v4456
        %v4483 = vmul.f32 %v4382, %v4461
        %v4484 = vmul.f32 %v4414, %v4461
        %v4485 = vmul.f32 %v4383, %v4466
        %v4486 = vmul.f32 %v4415, %v4466
        %v4487 = vmul.f32 %v4384, %v4471
        %v4488 = vmul.f32 %v4416, %v4471
        %v4489 = vadd.f32 %v4473, %v503
        %v4490 = vadd.f32 %v4474, %v504
        %v4491 = vadd.f32 %v4475, %v505
        %v4492 = vadd.f32 %v4476, %v506
        %v4493 = vadd.f32 %v4477, %v507
        %v4494 = vadd.f32 %v4478, %v508
        %v4495 = vadd.f32 %v4479, %v509
        %v4496 = vadd.f32 %v4480, %v510
        %v4497 = vadd.f32 %v4481, %v511
        %v4498 = vadd.f32 %v4482, %v512
        %v4499 = vadd.f32 %v4483, %v513
        %v4500 = vadd.f32 %v4484, %v514
        %v4501 = vadd.f32 %v4485, %v515
        %v4502 = vadd.f32 %v4486, %v516
        %v4503 = vadd.f32 %v4487, %v517
        %v4504 = vadd.f32 %v4488, %v518
        %4505 = vst [vmem:[%s502] sm:$0xff] %v4489
        %4506 = vst [vmem:[%s502 + $0x8] sm:$0xff] %v4490
        %4507 = vst [vmem:[%s502 + $0x10] sm:$0xff] %v4491
        %4508 = vst [vmem:[%s502 + $0x18] sm:$0xff] %v4492
        %4509 = vst [vmem:[%s502 + $0x20] sm:$0xff] %v4493
        %4510 = vst [vmem:[%s502 + $0x28] sm:$0xff] %v4494
        %4511 = vst [vmem:[%s502 + $0x30] sm:$0xff] %v4495
        %4512 = vst [vmem:[%s502 + $0x38] sm:$0xff] %v4496
        %4513 = vst [vmem:[%s502 + $0x40] sm:$0xff] %v4497
        %4514 = vst [vmem:[%s502 + $0x48] sm:$0xff] %v4498
        %4515 = vst [vmem:[%s502 + $0x50] sm:$0xff] %v4499
        %4516 = vst [vmem:[%s502 + $0x58] sm:$0xff] %v4500
        %4517 = vst [vmem:[%s502 + $0x60] sm:$0xff] %v4501
        %4518 = vst [vmem:[%s502 + $0x68] sm:$0xff] %v4502
        %4519 = vst [vmem:[%s502 + $0x70] sm:$0xff] %v4503
        %4520 = vst [vmem:[%s502 + $0x78] sm:$0xff] %v4504
        %s4521 = sand.u32 %s320, 1
        %s4522 = scalar_lea.sflag [#allocation6], %s4521
        %s4523 = sand.u32 %s320, 1
        %s4524 = smul.addr %s4523, 128
        %s4525 = scalar_lea.vmem [#allocation12], %s4524
        // Predicated region
        $region89: #{tpu_custom_call.1} parent=71 // pred_check
          %p4526 = pneg %p330
        $region90: #{tpu_custom_call.1} parent=71 // pred_check_branch
          %4528 = sbr.rel (%p4526) target = $region92
        $region91: #{tpu_custom_call.1} parent=71 // pred_region
          %s4530 = ssub.s32 2048, 2048
          %4531 = vsyncadd %s4522, %s4530
          %s4532 = smul.addr %s34, 16
          %s4533 = smul.addr %s4532, 128
          %s4534 = scalar_lea.hbm %s13, %s4533
          %s4535 = sshll.u32 %s4525, 4
          %s4536 = int_to_ptr.vmem [resolvable:$true] %s4535
          %4541 = dma.vmem_to_hbm [thread:$0]  %s4536, 2048, %s4534, %s4522, 256, 256, 16
        $region92: #{tpu_custom_call.1} parent=71 // pred_fallthru
          _
      $region72: #{tpu_custom_call.1} parent=5 // pred_fallthru
        _
      %p4542 = scmp.le.s32.totalorder 2, %s29
      // Predicated region
      $region93: #{tpu_custom_call.1} parent=5 // pred_check
        %p4543 = pneg %p4542
      $region94: #{tpu_custom_call.1} parent=5 // pred_check_branch
        %4545 = sbr.rel (%p4543) target = $region96
      $region95: #{tpu_custom_call.1} parent=5 // pred_region
        %s4546 = ssub.s32 %s29, 2
        // Predicated region
        $region97: #{tpu_custom_call.1} parent=95 // pred_check
          %p4547 = pneg %p336
        $region98: #{tpu_custom_call.1} parent=95 // pred_check_branch
          %4549 = sbr.rel (%p4547) target = $region100
        $region99: #{tpu_custom_call.1} parent=95 // pred_region
          %s4550 = sand.u32 %s321, 1
          %s4551 = scalar_lea.sflag [#allocation6], %s4550
          %s4552 = sand.u32 %s321, 1
          %s4553 = smul.addr %s4552, 128
          %s4554 = scalar_lea.vmem [#allocation12], %s4553
          %4555 = dma.done %s4551, 2048
        $region100: #{tpu_custom_call.1} parent=95 // pred_fallthru
          _
      $region96: #{tpu_custom_call.1} parent=5 // pred_fallthru
        _
    $region6: #{tpu_custom_call.1} parent=1 // loop_footer
      %s33 = sadd.s32 1, %s29
    $region7: #{tpu_custom_call.1} parent=1 // loop_footer_branch
      %28 = sbr.rel target = $region3
    $region8: #{tpu_custom_call.1} parent=1 // loop_exit
      _
    %4556 = vsyncpa [#allocation5], 1
    %s4557 = scalar_lea.sflag [#allocation5], 1
    %4558 = vsyncpa %s4557, 1
    %4559 = vsyncpa [#allocation8], 1
    %4560 = vsyncpa [#allocation11], 1
    %4561 = vsyncpa [#allocation6], 1
    %s4562 = scalar_lea.sflag [#allocation6], 1
    %4563 = vsyncpa %s4562, 1

</llo_original>
